<compile_context>
chip_gen: v6e
topology: v6e:2x2x1
jax: 0.10.0
libtpu: 0.0.40
codegen_flags: <defaults>
</compile_context>

<pallas_src>
import functools

import jax
import jax.numpy as jnp
import numpy as np
from jax.experimental import pallas as pl
from jax.experimental.pallas import tpu as pltpu

# ----------------------------- config -------------------------------------
VOCAB = 16          # len(vocab)
INPUT_SIZE = 32     # embedding dim
HIDDEN = 32         # LSTM hidden size
LAYERS = 3          # num_layers
T = 8               # sequence length
B = 4               # batch size

B_PAD = 8           # pad batch to a full sublane tile
V_PAD = 128         # pad vocab to a full lane tile (lane-dense output store)

assert INPUT_SIZE == HIDDEN, "packed W_ih stacking assumes input_size == hidden"


# --------------------- fused forward Pallas kernel -------------------------
def _fused_forward_kernel(tok_ref, lens_ref, emb_ref, wih_ref, whh_ref,
                          bias_ref, wlin_ref, blin_ref, out_ref, xg0_scr, *,
                          seq_len, batch, hidden, vocab, layers):
    """Whole forward pass in one gridless kernel.

    tok_ref  : (T*B_pad, 1)  int32   time-major flattened tokens (padded rows=0)
    lens_ref : (B_pad, 1)    f32     sequence lengths (padded rows=0)
    emb_ref  : (V, I)        f32     embedding table
    wih_ref  : (L, I, 4H)    f32     g-gate columns pre-scaled by 2
    whh_ref  : (L, H, 4H)    f32     g-gate columns pre-scaled by 2
    bias_ref : (L, 1, 4H)    f32     b_ih + b_hh, g-gate columns pre-scaled by 2
    wlin_ref : (H, V_pad)    f32     lane-dense padded linear head
    blin_ref : (1, V_pad)    f32
    out_ref  : (T*B_pad, V_pad) f32
    xg0_scr  : (T*B_pad, 4H) f32 VMEM scratch for the hoisted layer-0 X@W_ih
    """
    n_rows = seq_len * batch

    # ---- fused embedding lookup: one-hot @ embedding on the MXU ----------
    tok = tok_ref[...]                                            # (T*B, 1)
    vocab_ids = jax.lax.broadcasted_iota(jnp.int32, (n_rows, vocab), 1)
    tok_b = jnp.broadcast_to(tok, (n_rows, vocab))
    onehot = (vocab_ids == tok_b).astype(jnp.float32)             # (T*B, V)
    x = jnp.dot(onehot, emb_ref[...], preferred_element_type=jnp.float32)

    # ---- hoisted layer-0 input projection, parked in VMEM scratch --------
    xg0_scr[...] = jnp.dot(x, wih_ref[0],
                           preferred_element_type=jnp.float32) + bias_ref[0]

    lens_b = jnp.broadcast_to(lens_ref[...], (batch, hidden))     # (B, H)

    h = [jnp.zeros((batch, hidden), jnp.float32) for _ in range(layers)]
    c = [jnp.zeros((batch, hidden), jnp.float32) for _ in range(layers)]
    y = [[None] * seq_len for _ in range(layers)]

    # ---- wavefront over (layer, time): diagonal d runs layer l at t=d-l ---
    # Cells on one diagonal are independent -> critical path = T+L-1 links.
    for d in range(seq_len + layers - 1):
        for l in range(layers):
            t = d - l
            if t < 0 or t >= seq_len:
                continue
            if l == 0:
                xg = xg0_scr[t * batch:(t + 1) * batch, :]        # (B, 4H)
            else:
                xg = (jnp.dot(y[l - 1][t], wih_ref[l],
                              preferred_element_type=jnp.float32)
                      + bias_ref[l])
            gates = xg + jnp.dot(h[l], whh_ref[l],
                                 preferred_element_type=jnp.float32)

            # Single full-width EUP pass; g-gate pre-scaled so that
            # tanh(z) == 2*sigmoid(2z) - 1.
            sg = jax.nn.sigmoid(gates)                            # (B, 4H)
            i_g = sg[:, 0:hidden]
            f_g = sg[:, hidden:2 * hidden]
            g_g = 2.0 * sg[:, 2 * hidden:3 * hidden] - 1.0
            o_g = sg[:, 3 * hidden:4 * hidden]

            c_new = f_g * c[l] + i_g * g_g
            h_new = o_g * jnp.tanh(c_new)

            # pack_padded_sequence semantics: freeze state past each length,
            # pad_packed_sequence emits zeros there.  One vsel per state.
            m = lens_b > t                                        # (B, H) bool
            h[l] = jnp.where(m, h_new, h[l])
            c[l] = jnp.where(m, c_new, c[l])
            y[l][t] = jnp.where(m, h_new, 0.0)

    # ---- fused, lane-dense linear head ------------------------------------
    final = jnp.concatenate(y[layers - 1], axis=0)                # (T*B, H)
    out_ref[...] = (jnp.dot(final, wlin_ref[...],
                            preferred_element_type=jnp.float32)
                    + blin_ref[...])


# ------------------------- full forward (LstmNetG.forward) -----------------
@jax.jit
def lstm_net_g_forward(tokens, input_lens, kparams):
    """tokens: (T, B) int32; input_lens: (B,) int32 -> (T, B, VOCAB) f32."""
    t_len, b = tokens.shape

    # Pad batch to a full sublane tile; padded rows get length 0 (all-masked).
    tok_pad = jnp.zeros((t_len, B_PAD), jnp.int32).at[:, :b].set(tokens)
    tok_flat = tok_pad.reshape(t_len * B_PAD, 1)
    lens_pad = (jnp.zeros((B_PAD, 1), jnp.float32)
                .at[:b, 0].set(input_lens.astype(jnp.float32)))

    kernel = functools.partial(_fused_forward_kernel, seq_len=t_len,
                               batch=B_PAD, hidden=HIDDEN, vocab=VOCAB,
                               layers=LAYERS)

    out_flat = pl.pallas_call(
        kernel,
        out_shape=jax.ShapeDtypeStruct((t_len * B_PAD, V_PAD), jnp.float32),
        scratch_shapes=[pltpu.VMEM((t_len * B_PAD, 4 * HIDDEN), jnp.float32)],
    )(tok_flat, lens_pad,
      kparams["embedding"], kparams["w_ih"], kparams["w_hh"], kparams["bias"],
      kparams["w_lin"], kparams["b_lin"])

    out = out_flat.reshape(t_len, B_PAD, V_PAD)[:, :b, :VOCAB]
    return out


# ------------------------- pure-JAX reference -------------------------------
def reference_forward(tokens, input_lens, params):
    t_len, b = tokens.shape
    x = jnp.take(params["embedding"], tokens, axis=0)
    mask = (jnp.arange(t_len)[:, None] < input_lens[None, :]).astype(jnp.float32)

    h_seq = x
    for layer in range(LAYERS):
        w_ih_t, w_hh_t, bias = params["lstm"][layer]

        def step(carry, inp, w_ih_t=w_ih_t, w_hh_t=w_hh_t, bias=bias):
            h, c = carry
            x_t, m_t = inp
            gates = x_t @ w_ih_t + h @ w_hh_t + bias
            i_g = jax.nn.sigmoid(gates[:, :HIDDEN])
            f_g = jax.nn.sigmoid(gates[:, HIDDEN:2 * HIDDEN])
            g_g = jnp.tanh(gates[:, 2 * HIDDEN:3 * HIDDEN])
            o_g = jax.nn.sigmoid(gates[:, 3 * HIDDEN:])
            c_new = f_g * c + i_g * g_g
            h_new = o_g * jnp.tanh(c_new)
            m = m_t[:, None]
            return ((m * h_new + (1 - m) * h, m * c_new + (1 - m) * c),
                    m * h_new)

        init = (jnp.zeros((b, HIDDEN), jnp.float32),
                jnp.zeros((b, HIDDEN), jnp.float32))
        _, h_seq = jax.lax.scan(step, init, (h_seq, mask))

    w_lin_t, b_lin = params["linear"]
    return h_seq @ w_lin_t + b_lin[0]


# ------------------------- parameter init / packing -------------------------
def init_params(key):
    """PyTorch-semantics parameters (used by the reference)."""
    k = 1.0 / np.sqrt(HIDDEN)
    keys = jax.random.split(key, 2 + 4 * LAYERS + 2)
    params = {}
    params["embedding"] = jax.random.normal(
        keys[0], (VOCAB, INPUT_SIZE), jnp.float32)

    lstm_params = []
    idx = 1
    for layer in range(LAYERS):
        in_dim = INPUT_SIZE if layer == 0 else HIDDEN
        w_ih = jax.random.uniform(keys[idx], (4 * HIDDEN, in_dim),
                                  jnp.float32, -k, k); idx += 1
        w_hh = jax.random.uniform(keys[idx], (4 * HIDDEN, HIDDEN),
                                  jnp.float32, -k, k); idx += 1
        b_ih = jax.random.uniform(keys[idx], (4 * HIDDEN,),
                                  jnp.float32, -k, k); idx += 1
        b_hh = jax.random.uniform(keys[idx], (4 * HIDDEN,),
                                  jnp.float32, -k, k); idx += 1
        # pre-transpose so the kernel does x @ W (no in-kernel transpose)
        lstm_params.append((w_ih.T, w_hh.T,
                            (b_ih + b_hh).reshape(1, 4 * HIDDEN)))
    params["lstm"] = lstm_params

    kl = 1.0 / np.sqrt(HIDDEN)
    w_lin = jax.random.uniform(keys[idx], (VOCAB, HIDDEN),
                               jnp.float32, -kl, kl); idx += 1
    b_lin = jax.random.uniform(keys[idx], (VOCAB,), jnp.float32, -kl, kl)
    params["linear"] = (w_lin.T, b_lin.reshape(1, VOCAB))
    return params


def pack_kernel_params(params):
    """One-time packing for the kernel: stack layers, pre-scale the g-gate
    columns by 2 (so tanh(z) = 2*sigmoid(2z)-1 inside the kernel), and
    pre-pad the linear head to a lane-dense 128-wide output."""
    def scale_g(w):
        return w.at[..., 2 * HIDDEN:3 * HIDDEN].multiply(2.0)

    w_ih = jnp.stack([scale_g(params["lstm"][l][0]) for l in range(LAYERS)])
    w_hh = jnp.stack([scale_g(params["lstm"][l][1]) for l in range(LAYERS)])
    bias = jnp.stack([scale_g(params["lstm"][l][2]) for l in range(LAYERS)])

    w_lin_t, b_lin = params["linear"]
    w_lin_pad = jnp.zeros((HIDDEN, V_PAD), jnp.float32).at[:, :VOCAB].set(w_lin_t)
    b_lin_pad = jnp.zeros((1, V_PAD), jnp.float32).at[:, :VOCAB].set(b_lin)

    return {"embedding": params["embedding"],
            "w_ih": w_ih, "w_hh": w_hh, "bias": bias,
            "w_lin": w_lin_pad, "b_lin": b_lin_pad}


# ------------------------- main ---------------------------------------------
if __name__ == "__main__":
    root = jax.random.PRNGKey(0)
    k_param, k_tok = jax.random.split(root)

    params = init_params(k_param)
    kparams = pack_kernel_params(params)

    tokens = jax.random.randint(k_tok, (T, B), 0, VOCAB, dtype=jnp.int32)
    # pack_padded_sequence requires lengths sorted descending
    input_lens = jnp.array([T, T, T - 2, T - 3], dtype=jnp.int32)

    out = jax.block_until_ready(lstm_net_g_forward(tokens, input_lens, kparams))
    ref = jax.block_until_ready(reference_forward(tokens, input_lens, params))

    # Tolerance slightly looser than before: the kernel's cell gate uses
    # 2*sigmoid(2z)-1 instead of tanh(z) (mathematically identical, a few ULP
    # different in f32).
    np.testing.assert_allclose(np.asarray(out), np.asarray(ref),
                               rtol=1e-5, atol=5e-5)
    assert out.shape == (T, B, VOCAB) and out.dtype == jnp.float32

    # TODO(synk): sample()/_step_pred (multinomial decoding loop) is host-side
    # control flow and is not implemented as a kernel; only forward() is.
    print("KERNEL_OK")
</pallas_src>

<mosaic_0001>
module attributes {stable_mosaic.version = 11 : i64} {
  func.func @_fused_forward_kernel(%arg0: memref<64x1xi32, #tpu.memory_space<vmem>>, %arg1: memref<8x1xf32, #tpu.memory_space<vmem>>, %arg2: memref<16x32xf32, #tpu.memory_space<vmem>>, %arg3: memref<3x32x128xf32, #tpu.memory_space<vmem>>, %arg4: memref<3x32x128xf32, #tpu.memory_space<vmem>>, %arg5: memref<3x1x128xf32, #tpu.memory_space<vmem>>, %arg6: memref<32x128xf32, #tpu.memory_space<vmem>>, %arg7: memref<1x128xf32, #tpu.memory_space<vmem>>, %arg8: memref<64x128xf32, #tpu.memory_space<vmem>>, %arg9: memref<64x128xf32, #tpu.memory_space<vmem>>) attributes {dimension_semantics = [], scalar_prefetch = 0 : i64, scratch_operands = 1 : i64, tpu.core_type = #tpu.core_type<tc>} {
    %c0 = arith.constant 0 : index
    %c0_0 = arith.constant 0 : index
    %0 = vector.load %arg0[%c0, %c0_0] : memref<64x1xi32, #tpu.memory_space<vmem>>, vector<64x1xi32>
    %1 = tpu.iota {dimensions = array<i32: 1>} : vector<64x16xi32>
    %2 = vector.shape_cast %0 : vector<64x1xi32> to vector<64x1xi32>
    %3 = vector.broadcast %2 : vector<64x1xi32> to vector<64x16xi32>
    %4 = arith.cmpi eq, %1, %3 : vector<64x16xi32>
    %5 = arith.extui %4 : vector<64x16xi1> to vector<64x16xi32>
    %6 = arith.sitofp %5 : vector<64x16xi32> to vector<64x16xf32>
    %c0_1 = arith.constant 0 : index
    %c0_2 = arith.constant 0 : index
    %7 = vector.load %arg2[%c0_1, %c0_2] : memref<16x32xf32, #tpu.memory_space<vmem>>, vector<16x32xf32>
    %cst = arith.constant dense<0.000000e+00> : vector<64x32xf32>
    %8 = tpu.matmul %6, %7, %cst {dimension_numbers = #tpu.dot_dimension_numbers<[1], [0], [0], [1], [0, 0, 1, 1], [], []>} : vector<64x16xf32>, vector<16x32xf32>, vector<64x32xf32> -> vector<64x32xf32>
    %c0_3 = arith.constant 0 : index
    %c0_4 = arith.constant 0 : index
    %c0_5 = arith.constant 0 : index
    %9 = vector.load %arg3[%c0_3, %c0_4, %c0_5] : memref<3x32x128xf32, #tpu.memory_space<vmem>>, vector<1x32x128xf32>
    %10 = vector.shape_cast %9 : vector<1x32x128xf32> to vector<32x128xf32>
    %cst_6 = arith.constant dense<0.000000e+00> : vector<64x128xf32>
    %11 = tpu.matmul %8, %10, %cst_6 {dimension_numbers = #tpu.dot_dimension_numbers<[1], [0], [0], [1], [0, 0, 1, 1], [], []>} : vector<64x32xf32>, vector<32x128xf32>, vector<64x128xf32> -> vector<64x128xf32>
    %c0_7 = arith.constant 0 : index
    %c0_8 = arith.constant 0 : index
    %c0_9 = arith.constant 0 : index
    %12 = vector.load %arg5[%c0_7, %c0_8, %c0_9] : memref<3x1x128xf32, #tpu.memory_space<vmem>>, vector<1x1x128xf32>
    %13 = vector.shape_cast %12 : vector<1x1x128xf32> to vector<1x128xf32>
    %14 = vector.broadcast %13 : vector<1x128xf32> to vector<64x128xf32>
    %15 = arith.addf %11, %14 : vector<64x128xf32>
    %c0_10 = arith.constant 0 : index
    %c0_11 = arith.constant 0 : index
    %16 = vector.load %arg9[%c0_10, %c0_11] : memref<64x128xf32, #tpu.memory_space<vmem>>, vector<64x128xf32>
    tpu.vector_store %arg9[%c0_10, %c0_11], %15 {strides = array<i32>} : memref<64x128xf32, #tpu.memory_space<vmem>>, vector<64x128xf32>,
    %c0_12 = arith.constant 0 : index
    %c0_13 = arith.constant 0 : index
    %17 = vector.load %arg1[%c0_12, %c0_13] : memref<8x1xf32, #tpu.memory_space<vmem>>, vector<8x1xf32>
    %18 = vector.shape_cast %17 : vector<8x1xf32> to vector<8x1xf32>
    %19 = vector.broadcast %18 : vector<8x1xf32> to vector<8x32xf32>
    %cst_14 = arith.constant 0.000000e+00 : f32
    %20 = vector.broadcast %cst_14 : f32 to vector<8x32xf32>
    %cst_15 = arith.constant 0.000000e+00 : f32
    %21 = vector.broadcast %cst_15 : f32 to vector<8x32xf32>
    %cst_16 = arith.constant 0.000000e+00 : f32
    %22 = vector.broadcast %cst_16 : f32 to vector<8x32xf32>
    %cst_17 = arith.constant 0.000000e+00 : f32
    %23 = vector.broadcast %cst_17 : f32 to vector<8x32xf32>
    %cst_18 = arith.constant 0.000000e+00 : f32
    %24 = vector.broadcast %cst_18 : f32 to vector<8x32xf32>
    %cst_19 = arith.constant 0.000000e+00 : f32
    %25 = vector.broadcast %cst_19 : f32 to vector<8x32xf32>
    %c0_20 = arith.constant 0 : index
    %c0_21 = arith.constant 0 : index
    %26 = vector.load %arg9[%c0_20, %c0_21] : memref<64x128xf32, #tpu.memory_space<vmem>>, vector<8x128xf32>
    %c0_22 = arith.constant 0 : index
    %c0_23 = arith.constant 0 : index
    %c0_24 = arith.constant 0 : index
    %27 = vector.load %arg4[%c0_22, %c0_23, %c0_24] : memref<3x32x128xf32, #tpu.memory_space<vmem>>, vector<1x32x128xf32>
    %28 = vector.shape_cast %27 : vector<1x32x128xf32> to vector<32x128xf32>
    %cst_25 = arith.constant dense<0.000000e+00> : vector<8x128xf32>
    %29 = tpu.matmul %20, %28, %cst_25 {dimension_numbers = #tpu.dot_dimension_numbers<[1], [0], [0], [1], [0, 0, 1, 1], [], []>} : vector<8x32xf32>, vector<32x128xf32>, vector<8x128xf32> -> vector<8x128xf32>
    %30 = arith.addf %26, %29 : vector<8x128xf32>
    %31 = arith.negf %30 : vector<8x128xf32>
    %32 = math.exp %31 : vector<8x128xf32>
    %cst_26 = arith.constant 1.000000e+00 : f32
    %33 = vector.broadcast %cst_26 : f32 to vector<8x128xf32>
    %34 = arith.addf %33, %32 : vector<8x128xf32>
    %35 = arith.divf %33, %34 : vector<8x128xf32>
    %36 = vector.extract_strided_slice %35 {offsets = [0, 0], sizes = [8, 32], strides = [1, 1]} : vector<8x128xf32> to vector<8x32xf32>
    %37 = vector.extract_strided_slice %35 {offsets = [0, 32], sizes = [8, 32], strides = [1, 1]} : vector<8x128xf32> to vector<8x32xf32>
    %38 = vector.extract_strided_slice %35 {offsets = [0, 64], sizes = [8, 32], strides = [1, 1]} : vector<8x128xf32> to vector<8x32xf32>
    %cst_27 = arith.constant 2.000000e+00 : f32
    %39 = vector.broadcast %cst_27 : f32 to vector<8x32xf32>
    %40 = arith.mulf %39, %38 : vector<8x32xf32>
    %cst_28 = arith.constant 1.000000e+00 : f32
    %41 = vector.broadcast %cst_28 : f32 to vector<8x32xf32>
    %42 = arith.subf %40, %41 : vector<8x32xf32>
    %43 = vector.extract_strided_slice %35 {offsets = [0, 96], sizes = [8, 32], strides = [1, 1]} : vector<8x128xf32> to vector<8x32xf32>
    %44 = arith.mulf %37, %23 : vector<8x32xf32>
    %45 = arith.mulf %36, %42 : vector<8x32xf32>
    %46 = arith.addf %44, %45 : vector<8x32xf32>
    %47 = math.tanh %46 : vector<8x32xf32>
    %48 = arith.mulf %43, %47 : vector<8x32xf32>
    %cst_29 = arith.constant 0.000000e+00 : f32
    %49 = vector.broadcast %cst_29 : f32 to vector<8x32xf32>
    %50 = arith.cmpf ogt, %19, %49 : vector<8x32xf32>
    %51 = arith.select %50, %48, %20 : vector<8x32xi1>, vector<8x32xf32>
    %52 = arith.select %50, %46, %23 : vector<8x32xi1>, vector<8x32xf32>
    %cst_30 = arith.constant 0.000000e+00 : f32
    %53 = vector.broadcast %cst_30 : f32 to vector<8x32xf32>
    %54 = arith.select %50, %48, %53 : vector<8x32xi1>, vector<8x32xf32>
    %c8 = arith.constant 8 : index
    %c0_31 = arith.constant 0 : index
    %55 = vector.load %arg9[%c8, %c0_31] : memref<64x128xf32, #tpu.memory_space<vmem>>, vector<8x128xf32>
    %c0_32 = arith.constant 0 : index
    %c0_33 = arith.constant 0 : index
    %c0_34 = arith.constant 0 : index
    %56 = vector.load %arg4[%c0_32, %c0_33, %c0_34] : memref<3x32x128xf32, #tpu.memory_space<vmem>>, vector<1x32x128xf32>
    %57 = vector.shape_cast %56 : vector<1x32x128xf32> to vector<32x128xf32>
    %cst_35 = arith.constant dense<0.000000e+00> : vector<8x128xf32>
    %58 = tpu.matmul %51, %57, %cst_35 {dimension_numbers = #tpu.dot_dimension_numbers<[1], [0], [0], [1], [0, 0, 1, 1], [], []>} : vector<8x32xf32>, vector<32x128xf32>, vector<8x128xf32> -> vector<8x128xf32>
    %59 = arith.addf %55, %58 : vector<8x128xf32>
    %60 = arith.negf %59 : vector<8x128xf32>
    %61 = math.exp %60 : vector<8x128xf32>
    %cst_36 = arith.constant 1.000000e+00 : f32
    %62 = vector.broadcast %cst_36 : f32 to vector<8x128xf32>
    %63 = arith.addf %62, %61 : vector<8x128xf32>
    %64 = arith.divf %62, %63 : vector<8x128xf32>
    %65 = vector.extract_strided_slice %64 {offsets = [0, 0], sizes = [8, 32], strides = [1, 1]} : vector<8x128xf32> to vector<8x32xf32>
    %66 = vector.extract_strided_slice %64 {offsets = [0, 32], sizes = [8, 32], strides = [1, 1]} : vector<8x128xf32> to vector<8x32xf32>
    %67 = vector.extract_strided_slice %64 {offsets = [0, 64], sizes = [8, 32], strides = [1, 1]} : vector<8x128xf32> to vector<8x32xf32>
    %cst_37 = arith.constant 2.000000e+00 : f32
    %68 = vector.broadcast %cst_37 : f32 to vector<8x32xf32>
    %69 = arith.mulf %68, %67 : vector<8x32xf32>
    %cst_38 = arith.constant 1.000000e+00 : f32
    %70 = vector.broadcast %cst_38 : f32 to vector<8x32xf32>
    %71 = arith.subf %69, %70 : vector<8x32xf32>
    %72 = vector.extract_strided_slice %64 {offsets = [0, 96], sizes = [8, 32], strides = [1, 1]} : vector<8x128xf32> to vector<8x32xf32>
    %73 = arith.mulf %66, %52 : vector<8x32xf32>
    %74 = arith.mulf %65, %71 : vector<8x32xf32>
    %75 = arith.addf %73, %74 : vector<8x32xf32>
    %76 = math.tanh %75 : vector<8x32xf32>
    %77 = arith.mulf %72, %76 : vector<8x32xf32>
    %cst_39 = arith.constant 1.000000e+00 : f32
    %78 = vector.broadcast %cst_39 : f32 to vector<8x32xf32>
    %79 = arith.cmpf ogt, %19, %78 : vector<8x32xf32>
    %80 = arith.select %79, %77, %51 : vector<8x32xi1>, vector<8x32xf32>
    %81 = arith.select %79, %75, %52 : vector<8x32xi1>, vector<8x32xf32>
    %cst_40 = arith.constant 0.000000e+00 : f32
    %82 = vector.broadcast %cst_40 : f32 to vector<8x32xf32>
    %83 = arith.select %79, %77, %82 : vector<8x32xi1>, vector<8x32xf32>
    %c1 = arith.constant 1 : index
    %c0_41 = arith.constant 0 : index
    %c0_42 = arith.constant 0 : index
    %84 = vector.load %arg3[%c1, %c0_41, %c0_42] : memref<3x32x128xf32, #tpu.memory_space<vmem>>, vector<1x32x128xf32>
    %85 = vector.shape_cast %84 : vector<1x32x128xf32> to vector<32x128xf32>
    %cst_43 = arith.constant dense<0.000000e+00> : vector<8x128xf32>
    %86 = tpu.matmul %54, %85, %cst_43 {dimension_numbers = #tpu.dot_dimension_numbers<[1], [0], [0], [1], [0, 0, 1, 1], [], []>} : vector<8x32xf32>, vector<32x128xf32>, vector<8x128xf32> -> vector<8x128xf32>
    %c1_44 = arith.constant 1 : index
    %c0_45 = arith.constant 0 : index
    %c0_46 = arith.constant 0 : index
    %87 = vector.load %arg5[%c1_44, %c0_45, %c0_46] : memref<3x1x128xf32, #tpu.memory_space<vmem>>, vector<1x1x128xf32>
    %88 = vector.shape_cast %87 : vector<1x1x128xf32> to vector<1x128xf32>
    %89 = vector.broadcast %88 : vector<1x128xf32> to vector<8x128xf32>
    %90 = arith.addf %86, %89 : vector<8x128xf32>
    %c1_47 = arith.constant 1 : index
    %c0_48 = arith.constant 0 : index
    %c0_49 = arith.constant 0 : index
    %91 = vector.load %arg4[%c1_47, %c0_48, %c0_49] : memref<3x32x128xf32, #tpu.memory_space<vmem>>, vector<1x32x128xf32>
    %92 = vector.shape_cast %91 : vector<1x32x128xf32> to vector<32x128xf32>
    %cst_50 = arith.constant dense<0.000000e+00> : vector<8x128xf32>
    %93 = tpu.matmul %21, %92, %cst_50 {dimension_numbers = #tpu.dot_dimension_numbers<[1], [0], [0], [1], [0, 0, 1, 1], [], []>} : vector<8x32xf32>, vector<32x128xf32>, vector<8x128xf32> -> vector<8x128xf32>
    %94 = arith.addf %90, %93 : vector<8x128xf32>
    %95 = arith.negf %94 : vector<8x128xf32>
    %96 = math.exp %95 : vector<8x128xf32>
    %cst_51 = arith.constant 1.000000e+00 : f32
    %97 = vector.broadcast %cst_51 : f32 to vector<8x128xf32>
    %98 = arith.addf %97, %96 : vector<8x128xf32>
    %99 = arith.divf %97, %98 : vector<8x128xf32>
    %100 = vector.extract_strided_slice %99 {offsets = [0, 0], sizes = [8, 32], strides = [1, 1]} : vector<8x128xf32> to vector<8x32xf32>
    %101 = vector.extract_strided_slice %99 {offsets = [0, 32], sizes = [8, 32], strides = [1, 1]} : vector<8x128xf32> to vector<8x32xf32>
    %102 = vector.extract_strided_slice %99 {offsets = [0, 64], sizes = [8, 32], strides = [1, 1]} : vector<8x128xf32> to vector<8x32xf32>
    %cst_52 = arith.constant 2.000000e+00 : f32
    %103 = vector.broadcast %cst_52 : f32 to vector<8x32xf32>
    %104 = arith.mulf %103, %102 : vector<8x32xf32>
    %cst_53 = arith.constant 1.000000e+00 : f32
    %105 = vector.broadcast %cst_53 : f32 to vector<8x32xf32>
    %106 = arith.subf %104, %105 : vector<8x32xf32>
    %107 = vector.extract_strided_slice %99 {offsets = [0, 96], sizes = [8, 32], strides = [1, 1]} : vector<8x128xf32> to vector<8x32xf32>
    %108 = arith.mulf %101, %24 : vector<8x32xf32>
    %109 = arith.mulf %100, %106 : vector<8x32xf32>
    %110 = arith.addf %108, %109 : vector<8x32xf32>
    %111 = math.tanh %110 : vector<8x32xf32>
    %112 = arith.mulf %107, %111 : vector<8x32xf32>
    %cst_54 = arith.constant 0.000000e+00 : f32
    %113 = vector.broadcast %cst_54 : f32 to vector<8x32xf32>
    %114 = arith.cmpf ogt, %19, %113 : vector<8x32xf32>
    %115 = arith.select %114, %112, %21 : vector<8x32xi1>, vector<8x32xf32>
    %116 = arith.select %114, %110, %24 : vector<8x32xi1>, vector<8x32xf32>
    %cst_55 = arith.constant 0.000000e+00 : f32
    %117 = vector.broadcast %cst_55 : f32 to vector<8x32xf32>
    %118 = arith.select %114, %112, %117 : vector<8x32xi1>, vector<8x32xf32>
    %c16 = arith.constant 16 : index
    %c0_56 = arith.constant 0 : index
    %119 = vector.load %arg9[%c16, %c0_56] : memref<64x128xf32, #tpu.memory_space<vmem>>, vector<8x128xf32>
    %c0_57 = arith.constant 0 : index
    %c0_58 = arith.constant 0 : index
    %c0_59 = arith.constant 0 : index
    %120 = vector.load %arg4[%c0_57, %c0_58, %c0_59] : memref<3x32x128xf32, #tpu.memory_space<vmem>>, vector<1x32x128xf32>
    %121 = vector.shape_cast %120 : vector<1x32x128xf32> to vector<32x128xf32>
    %cst_60 = arith.constant dense<0.000000e+00> : vector<8x128xf32>
    %122 = tpu.matmul %80, %121, %cst_60 {dimension_numbers = #tpu.dot_dimension_numbers<[1], [0], [0], [1], [0, 0, 1, 1], [], []>} : vector<8x32xf32>, vector<32x128xf32>, vector<8x128xf32> -> vector<8x128xf32>
    %123 = arith.addf %119, %122 : vector<8x128xf32>
    %124 = arith.negf %123 : vector<8x128xf32>
    %125 = math.exp %124 : vector<8x128xf32>
    %cst_61 = arith.constant 1.000000e+00 : f32
    %126 = vector.broadcast %cst_61 : f32 to vector<8x128xf32>
    %127 = arith.addf %126, %125 : vector<8x128xf32>
    %128 = arith.divf %126, %127 : vector<8x128xf32>
    %129 = vector.extract_strided_slice %128 {offsets = [0, 0], sizes = [8, 32], strides = [1, 1]} : vector<8x128xf32> to vector<8x32xf32>
    %130 = vector.extract_strided_slice %128 {offsets = [0, 32], sizes = [8, 32], strides = [1, 1]} : vector<8x128xf32> to vector<8x32xf32>
    %131 = vector.extract_strided_slice %128 {offsets = [0, 64], sizes = [8, 32], strides = [1, 1]} : vector<8x128xf32> to vector<8x32xf32>
    %cst_62 = arith.constant 2.000000e+00 : f32
    %132 = vector.broadcast %cst_62 : f32 to vector<8x32xf32>
    %133 = arith.mulf %132, %131 : vector<8x32xf32>
    %cst_63 = arith.constant 1.000000e+00 : f32
    %134 = vector.broadcast %cst_63 : f32 to vector<8x32xf32>
    %135 = arith.subf %133, %134 : vector<8x32xf32>
    %136 = vector.extract_strided_slice %128 {offsets = [0, 96], sizes = [8, 32], strides = [1, 1]} : vector<8x128xf32> to vector<8x32xf32>
    %137 = arith.mulf %130, %81 : vector<8x32xf32>
    %138 = arith.mulf %129, %135 : vector<8x32xf32>
    %139 = arith.addf %137, %138 : vector<8x32xf32>
    %140 = math.tanh %139 : vector<8x32xf32>
    %141 = arith.mulf %136, %140 : vector<8x32xf32>
    %cst_64 = arith.constant 2.000000e+00 : f32
    %142 = vector.broadcast %cst_64 : f32 to vector<8x32xf32>
    %143 = arith.cmpf ogt, %19, %142 : vector<8x32xf32>
    %144 = arith.select %143, %141, %80 : vector<8x32xi1>, vector<8x32xf32>
    %145 = arith.select %143, %139, %81 : vector<8x32xi1>, vector<8x32xf32>
    %cst_65 = arith.constant 0.000000e+00 : f32
    %146 = vector.broadcast %cst_65 : f32 to vector<8x32xf32>
    %147 = arith.select %143, %141, %146 : vector<8x32xi1>, vector<8x32xf32>
    %c1_66 = arith.constant 1 : index
    %c0_67 = arith.constant 0 : index
    %c0_68 = arith.constant 0 : index
    %148 = vector.load %arg3[%c1_66, %c0_67, %c0_68] : memref<3x32x128xf32, #tpu.memory_space<vmem>>, vector<1x32x128xf32>
    %149 = vector.shape_cast %148 : vector<1x32x128xf32> to vector<32x128xf32>
    %cst_69 = arith.constant dense<0.000000e+00> : vector<8x128xf32>
    %150 = tpu.matmul %83, %149, %cst_69 {dimension_numbers = #tpu.dot_dimension_numbers<[1], [0], [0], [1], [0, 0, 1, 1], [], []>} : vector<8x32xf32>, vector<32x128xf32>, vector<8x128xf32> -> vector<8x128xf32>
    %c1_70 = arith.constant 1 : index
    %c0_71 = arith.constant 0 : index
    %c0_72 = arith.constant 0 : index
    %151 = vector.load %arg5[%c1_70, %c0_71, %c0_72] : memref<3x1x128xf32, #tpu.memory_space<vmem>>, vector<1x1x128xf32>
    %152 = vector.shape_cast %151 : vector<1x1x128xf32> to vector<1x128xf32>
    %153 = vector.broadcast %152 : vector<1x128xf32> to vector<8x128xf32>
    %154 = arith.addf %150, %153 : vector<8x128xf32>
    %c1_73 = arith.constant 1 : index
    %c0_74 = arith.constant 0 : index
    %c0_75 = arith.constant 0 : index
    %155 = vector.load %arg4[%c1_73, %c0_74, %c0_75] : memref<3x32x128xf32, #tpu.memory_space<vmem>>, vector<1x32x128xf32>
    %156 = vector.shape_cast %155 : vector<1x32x128xf32> to vector<32x128xf32>
    %cst_76 = arith.constant dense<0.000000e+00> : vector<8x128xf32>
    %157 = tpu.matmul %115, %156, %cst_76 {dimension_numbers = #tpu.dot_dimension_numbers<[1], [0], [0], [1], [0, 0, 1, 1], [], []>} : vector<8x32xf32>, vector<32x128xf32>, vector<8x128xf32> -> vector<8x128xf32>
    %158 = arith.addf %154, %157 : vector<8x128xf32>
    %159 = arith.negf %158 : vector<8x128xf32>
    %160 = math.exp %159 : vector<8x128xf32>
    %cst_77 = arith.constant 1.000000e+00 : f32
    %161 = vector.broadcast %cst_77 : f32 to vector<8x128xf32>
    %162 = arith.addf %161, %160 : vector<8x128xf32>
    %163 = arith.divf %161, %162 : vector<8x128xf32>
    %164 = vector.extract_strided_slice %163 {offsets = [0, 0], sizes = [8, 32], strides = [1, 1]} : vector<8x128xf32> to vector<8x32xf32>
    %165 = vector.extract_strided_slice %163 {offsets = [0, 32], sizes = [8, 32], strides = [1, 1]} : vector<8x128xf32> to vector<8x32xf32>
    %166 = vector.extract_strided_slice %163 {offsets = [0, 64], sizes = [8, 32], strides = [1, 1]} : vector<8x128xf32> to vector<8x32xf32>
    %cst_78 = arith.constant 2.000000e+00 : f32
    %167 = vector.broadcast %cst_78 : f32 to vector<8x32xf32>
    %168 = arith.mulf %167, %166 : vector<8x32xf32>
    %cst_79 = arith.constant 1.000000e+00 : f32
    %169 = vector.broadcast %cst_79 : f32 to vector<8x32xf32>
    %170 = arith.subf %168, %169 : vector<8x32xf32>
    %171 = vector.extract_strided_slice %163 {offsets = [0, 96], sizes = [8, 32], strides = [1, 1]} : vector<8x128xf32> to vector<8x32xf32>
    %172 = arith.mulf %165, %116 : vector<8x32xf32>
    %173 = arith.mulf %164, %170 : vector<8x32xf32>
    %174 = arith.addf %172, %173 : vector<8x32xf32>
    %175 = math.tanh %174 : vector<8x32xf32>
    %176 = arith.mulf %171, %175 : vector<8x32xf32>
    %cst_80 = arith.constant 1.000000e+00 : f32
    %177 = vector.broadcast %cst_80 : f32 to vector<8x32xf32>
    %178 = arith.cmpf ogt, %19, %177 : vector<8x32xf32>
    %179 = arith.select %178, %176, %115 : vector<8x32xi1>, vector<8x32xf32>
    %180 = arith.select %178, %174, %116 : vector<8x32xi1>, vector<8x32xf32>
    %cst_81 = arith.constant 0.000000e+00 : f32
    %181 = vector.broadcast %cst_81 : f32 to vector<8x32xf32>
    %182 = arith.select %178, %176, %181 : vector<8x32xi1>, vector<8x32xf32>
    %c2 = arith.constant 2 : index
    %c0_82 = arith.constant 0 : index
    %c0_83 = arith.constant 0 : index
    %183 = vector.load %arg3[%c2, %c0_82, %c0_83] : memref<3x32x128xf32, #tpu.memory_space<vmem>>, vector<1x32x128xf32>
    %184 = vector.shape_cast %183 : vector<1x32x128xf32> to vector<32x128xf32>
    %cst_84 = arith.constant dense<0.000000e+00> : vector<8x128xf32>
    %185 = tpu.matmul %118, %184, %cst_84 {dimension_numbers = #tpu.dot_dimension_numbers<[1], [0], [0], [1], [0, 0, 1, 1], [], []>} : vector<8x32xf32>, vector<32x128xf32>, vector<8x128xf32> -> vector<8x128xf32>
    %c2_85 = arith.constant 2 : index
    %c0_86 = arith.constant 0 : index
    %c0_87 = arith.constant 0 : index
    %186 = vector.load %arg5[%c2_85, %c0_86, %c0_87] : memref<3x1x128xf32, #tpu.memory_space<vmem>>, vector<1x1x128xf32>
    %187 = vector.shape_cast %186 : vector<1x1x128xf32> to vector<1x128xf32>
    %188 = vector.broadcast %187 : vector<1x128xf32> to vector<8x128xf32>
    %189 = arith.addf %185, %188 : vector<8x128xf32>
    %c2_88 = arith.constant 2 : index
    %c0_89 = arith.constant 0 : index
    %c0_90 = arith.constant 0 : index
    %190 = vector.load %arg4[%c2_88, %c0_89, %c0_90] : memref<3x32x128xf32, #tpu.memory_space<vmem>>, vector<1x32x128xf32>
    %191 = vector.shape_cast %190 : vector<1x32x128xf32> to vector<32x128xf32>
    %cst_91 = arith.constant dense<0.000000e+00> : vector<8x128xf32>
    %192 = tpu.matmul %22, %191, %cst_91 {dimension_numbers = #tpu.dot_dimension_numbers<[1], [0], [0], [1], [0, 0, 1, 1], [], []>} : vector<8x32xf32>, vector<32x128xf32>, vector<8x128xf32> -> vector<8x128xf32>
    %193 = arith.addf %189, %192 : vector<8x128xf32>
    %194 = arith.negf %193 : vector<8x128xf32>
    %195 = math.exp %194 : vector<8x128xf32>
    %cst_92 = arith.constant 1.000000e+00 : f32
    %196 = vector.broadcast %cst_92 : f32 to vector<8x128xf32>
    %197 = arith.addf %196, %195 : vector<8x128xf32>
    %198 = arith.divf %196, %197 : vector<8x128xf32>
    %199 = vector.extract_strided_slice %198 {offsets = [0, 0], sizes = [8, 32], strides = [1, 1]} : vector<8x128xf32> to vector<8x32xf32>
    %200 = vector.extract_strided_slice %198 {offsets = [0, 32], sizes = [8, 32], strides = [1, 1]} : vector<8x128xf32> to vector<8x32xf32>
    %201 = vector.extract_strided_slice %198 {offsets = [0, 64], sizes = [8, 32], strides = [1, 1]} : vector<8x128xf32> to vector<8x32xf32>
    %cst_93 = arith.constant 2.000000e+00 : f32
    %202 = vector.broadcast %cst_93 : f32 to vector<8x32xf32>
    %203 = arith.mulf %202, %201 : vector<8x32xf32>
    %cst_94 = arith.constant 1.000000e+00 : f32
    %204 = vector.broadcast %cst_94 : f32 to vector<8x32xf32>
    %205 = arith.subf %203, %204 : vector<8x32xf32>
    %206 = vector.extract_strided_slice %198 {offsets = [0, 96], sizes = [8, 32], strides = [1, 1]} : vector<8x128xf32> to vector<8x32xf32>
    %207 = arith.mulf %200, %25 : vector<8x32xf32>
    %208 = arith.mulf %199, %205 : vector<8x32xf32>
    %209 = arith.addf %207, %208 : vector<8x32xf32>
    %210 = math.tanh %209 : vector<8x32xf32>
    %211 = arith.mulf %206, %210 : vector<8x32xf32>
    %cst_95 = arith.constant 0.000000e+00 : f32
    %212 = vector.broadcast %cst_95 : f32 to vector<8x32xf32>
    %213 = arith.cmpf ogt, %19, %212 : vector<8x32xf32>
    %214 = arith.select %213, %211, %22 : vector<8x32xi1>, vector<8x32xf32>
    %215 = arith.select %213, %209, %25 : vector<8x32xi1>, vector<8x32xf32>
    %cst_96 = arith.constant 0.000000e+00 : f32
    %216 = vector.broadcast %cst_96 : f32 to vector<8x32xf32>
    %217 = arith.select %213, %211, %216 : vector<8x32xi1>, vector<8x32xf32>
    %c24 = arith.constant 24 : index
    %c0_97 = arith.constant 0 : index
    %218 = vector.load %arg9[%c24, %c0_97] : memref<64x128xf32, #tpu.memory_space<vmem>>, vector<8x128xf32>
    %c0_98 = arith.constant 0 : index
    %c0_99 = arith.constant 0 : index
    %c0_100 = arith.constant 0 : index
    %219 = vector.load %arg4[%c0_98, %c0_99, %c0_100] : memref<3x32x128xf32, #tpu.memory_space<vmem>>, vector<1x32x128xf32>
    %220 = vector.shape_cast %219 : vector<1x32x128xf32> to vector<32x128xf32>
    %cst_101 = arith.constant dense<0.000000e+00> : vector<8x128xf32>
    %221 = tpu.matmul %144, %220, %cst_101 {dimension_numbers = #tpu.dot_dimension_numbers<[1], [0], [0], [1], [0, 0, 1, 1], [], []>} : vector<8x32xf32>, vector<32x128xf32>, vector<8x128xf32> -> vector<8x128xf32>
    %222 = arith.addf %218, %221 : vector<8x128xf32>
    %223 = arith.negf %222 : vector<8x128xf32>
    %224 = math.exp %223 : vector<8x128xf32>
    %cst_102 = arith.constant 1.000000e+00 : f32
    %225 = vector.broadcast %cst_102 : f32 to vector<8x128xf32>
    %226 = arith.addf %225, %224 : vector<8x128xf32>
    %227 = arith.divf %225, %226 : vector<8x128xf32>
    %228 = vector.extract_strided_slice %227 {offsets = [0, 0], sizes = [8, 32], strides = [1, 1]} : vector<8x128xf32> to vector<8x32xf32>
    %229 = vector.extract_strided_slice %227 {offsets = [0, 32], sizes = [8, 32], strides = [1, 1]} : vector<8x128xf32> to vector<8x32xf32>
    %230 = vector.extract_strided_slice %227 {offsets = [0, 64], sizes = [8, 32], strides = [1, 1]} : vector<8x128xf32> to vector<8x32xf32>
    %cst_103 = arith.constant 2.000000e+00 : f32
    %231 = vector.broadcast %cst_103 : f32 to vector<8x32xf32>
    %232 = arith.mulf %231, %230 : vector<8x32xf32>
    %cst_104 = arith.constant 1.000000e+00 : f32
    %233 = vector.broadcast %cst_104 : f32 to vector<8x32xf32>
    %234 = arith.subf %232, %233 : vector<8x32xf32>
    %235 = vector.extract_strided_slice %227 {offsets = [0, 96], sizes = [8, 32], strides = [1, 1]} : vector<8x128xf32> to vector<8x32xf32>
    %236 = arith.mulf %229, %145 : vector<8x32xf32>
    %237 = arith.mulf %228, %234 : vector<8x32xf32>
    %238 = arith.addf %236, %237 : vector<8x32xf32>
    %239 = math.tanh %238 : vector<8x32xf32>
    %240 = arith.mulf %235, %239 : vector<8x32xf32>
    %cst_105 = arith.constant 3.000000e+00 : f32
    %241 = vector.broadcast %cst_105 : f32 to vector<8x32xf32>
    %242 = arith.cmpf ogt, %19, %241 : vector<8x32xf32>
    %243 = arith.select %242, %240, %144 : vector<8x32xi1>, vector<8x32xf32>
    %244 = arith.select %242, %238, %145 : vector<8x32xi1>, vector<8x32xf32>
    %cst_106 = arith.constant 0.000000e+00 : f32
    %245 = vector.broadcast %cst_106 : f32 to vector<8x32xf32>
    %246 = arith.select %242, %240, %245 : vector<8x32xi1>, vector<8x32xf32>
    %c1_107 = arith.constant 1 : index
    %c0_108 = arith.constant 0 : index
    %c0_109 = arith.constant 0 : index
    %247 = vector.load %arg3[%c1_107, %c0_108, %c0_109] : memref<3x32x128xf32, #tpu.memory_space<vmem>>, vector<1x32x128xf32>
    %248 = vector.shape_cast %247 : vector<1x32x128xf32> to vector<32x128xf32>
    %cst_110 = arith.constant dense<0.000000e+00> : vector<8x128xf32>
    %249 = tpu.matmul %147, %248, %cst_110 {dimension_numbers = #tpu.dot_dimension_numbers<[1], [0], [0], [1], [0, 0, 1, 1], [], []>} : vector<8x32xf32>, vector<32x128xf32>, vector<8x128xf32> -> vector<8x128xf32>
    %c1_111 = arith.constant 1 : index
    %c0_112 = arith.constant 0 : index
    %c0_113 = arith.constant 0 : index
    %250 = vector.load %arg5[%c1_111, %c0_112, %c0_113] : memref<3x1x128xf32, #tpu.memory_space<vmem>>, vector<1x1x128xf32>
    %251 = vector.shape_cast %250 : vector<1x1x128xf32> to vector<1x128xf32>
    %252 = vector.broadcast %251 : vector<1x128xf32> to vector<8x128xf32>
    %253 = arith.addf %249, %252 : vector<8x128xf32>
    %c1_114 = arith.constant 1 : index
    %c0_115 = arith.constant 0 : index
    %c0_116 = arith.constant 0 : index
    %254 = vector.load %arg4[%c1_114, %c0_115, %c0_116] : memref<3x32x128xf32, #tpu.memory_space<vmem>>, vector<1x32x128xf32>
    %255 = vector.shape_cast %254 : vector<1x32x128xf32> to vector<32x128xf32>
    %cst_117 = arith.constant dense<0.000000e+00> : vector<8x128xf32>
    %256 = tpu.matmul %179, %255, %cst_117 {dimension_numbers = #tpu.dot_dimension_numbers<[1], [0], [0], [1], [0, 0, 1, 1], [], []>} : vector<8x32xf32>, vector<32x128xf32>, vector<8x128xf32> -> vector<8x128xf32>
    %257 = arith.addf %253, %256 : vector<8x128xf32>
    %258 = arith.negf %257 : vector<8x128xf32>
    %259 = math.exp %258 : vector<8x128xf32>
    %cst_118 = arith.constant 1.000000e+00 : f32
    %260 = vector.broadcast %cst_118 : f32 to vector<8x128xf32>
    %261 = arith.addf %260, %259 : vector<8x128xf32>
    %262 = arith.divf %260, %261 : vector<8x128xf32>
    %263 = vector.extract_strided_slice %262 {offsets = [0, 0], sizes = [8, 32], strides = [1, 1]} : vector<8x128xf32> to vector<8x32xf32>
    %264 = vector.extract_strided_slice %262 {offsets = [0, 32], sizes = [8, 32], strides = [1, 1]} : vector<8x128xf32> to vector<8x32xf32>
    %265 = vector.extract_strided_slice %262 {offsets = [0, 64], sizes = [8, 32], strides = [1, 1]} : vector<8x128xf32> to vector<8x32xf32>
    %cst_119 = arith.constant 2.000000e+00 : f32
    %266 = vector.broadcast %cst_119 : f32 to vector<8x32xf32>
    %267 = arith.mulf %266, %265 : vector<8x32xf32>
    %cst_120 = arith.constant 1.000000e+00 : f32
    %268 = vector.broadcast %cst_120 : f32 to vector<8x32xf32>
    %269 = arith.subf %267, %268 : vector<8x32xf32>
    %270 = vector.extract_strided_slice %262 {offsets = [0, 96], sizes = [8, 32], strides = [1, 1]} : vector<8x128xf32> to vector<8x32xf32>
    %271 = arith.mulf %264, %180 : vector<8x32xf32>
    %272 = arith.mulf %263, %269 : vector<8x32xf32>
    %273 = arith.addf %271, %272 : vector<8x32xf32>
    %274 = math.tanh %273 : vector<8x32xf32>
    %275 = arith.mulf %270, %274 : vector<8x32xf32>
    %cst_121 = arith.constant 2.000000e+00 : f32
    %276 = vector.broadcast %cst_121 : f32 to vector<8x32xf32>
    %277 = arith.cmpf ogt, %19, %276 : vector<8x32xf32>
    %278 = arith.select %277, %275, %179 : vector<8x32xi1>, vector<8x32xf32>
    %279 = arith.select %277, %273, %180 : vector<8x32xi1>, vector<8x32xf32>
    %cst_122 = arith.constant 0.000000e+00 : f32
    %280 = vector.broadcast %cst_122 : f32 to vector<8x32xf32>
    %281 = arith.select %277, %275, %280 : vector<8x32xi1>, vector<8x32xf32>
    %c2_123 = arith.constant 2 : index
    %c0_124 = arith.constant 0 : index
    %c0_125 = arith.constant 0 : index
    %282 = vector.load %arg3[%c2_123, %c0_124, %c0_125] : memref<3x32x128xf32, #tpu.memory_space<vmem>>, vector<1x32x128xf32>
    %283 = vector.shape_cast %282 : vector<1x32x128xf32> to vector<32x128xf32>
    %cst_126 = arith.constant dense<0.000000e+00> : vector<8x128xf32>
    %284 = tpu.matmul %182, %283, %cst_126 {dimension_numbers = #tpu.dot_dimension_numbers<[1], [0], [0], [1], [0, 0, 1, 1], [], []>} : vector<8x32xf32>, vector<32x128xf32>, vector<8x128xf32> -> vector<8x128xf32>
    %c2_127 = arith.constant 2 : index
    %c0_128 = arith.constant 0 : index
    %c0_129 = arith.constant 0 : index
    %285 = vector.load %arg5[%c2_127, %c0_128, %c0_129] : memref<3x1x128xf32, #tpu.memory_space<vmem>>, vector<1x1x128xf32>
    %286 = vector.shape_cast %285 : vector<1x1x128xf32> to vector<1x128xf32>
    %287 = vector.broadcast %286 : vector<1x128xf32> to vector<8x128xf32>
    %288 = arith.addf %284, %287 : vector<8x128xf32>
    %c2_130 = arith.constant 2 : index
    %c0_131 = arith.constant 0 : index
    %c0_132 = arith.constant 0 : index
    %289 = vector.load %arg4[%c2_130, %c0_131, %c0_132] : memref<3x32x128xf32, #tpu.memory_space<vmem>>, vector<1x32x128xf32>
    %290 = vector.shape_cast %289 : vector<1x32x128xf32> to vector<32x128xf32>
    %cst_133 = arith.constant dense<0.000000e+00> : vector<8x128xf32>
    %291 = tpu.matmul %214, %290, %cst_133 {dimension_numbers = #tpu.dot_dimension_numbers<[1], [0], [0], [1], [0, 0, 1, 1], [], []>} : vector<8x32xf32>, vector<32x128xf32>, vector<8x128xf32> -> vector<8x128xf32>
    %292 = arith.addf %288, %291 : vector<8x128xf32>
    %293 = arith.negf %292 : vector<8x128xf32>
    %294 = math.exp %293 : vector<8x128xf32>
    %cst_134 = arith.constant 1.000000e+00 : f32
    %295 = vector.broadcast %cst_134 : f32 to vector<8x128xf32>
    %296 = arith.addf %295, %294 : vector<8x128xf32>
    %297 = arith.divf %295, %296 : vector<8x128xf32>
    %298 = vector.extract_strided_slice %297 {offsets = [0, 0], sizes = [8, 32], strides = [1, 1]} : vector<8x128xf32> to vector<8x32xf32>
    %299 = vector.extract_strided_slice %297 {offsets = [0, 32], sizes = [8, 32], strides = [1, 1]} : vector<8x128xf32> to vector<8x32xf32>
    %300 = vector.extract_strided_slice %297 {offsets = [0, 64], sizes = [8, 32], strides = [1, 1]} : vector<8x128xf32> to vector<8x32xf32>
    %cst_135 = arith.constant 2.000000e+00 : f32
    %301 = vector.broadcast %cst_135 : f32 to vector<8x32xf32>
    %302 = arith.mulf %301, %300 : vector<8x32xf32>
    %cst_136 = arith.constant 1.000000e+00 : f32
    %303 = vector.broadcast %cst_136 : f32 to vector<8x32xf32>
    %304 = arith.subf %302, %303 : vector<8x32xf32>
    %305 = vector.extract_strided_slice %297 {offsets = [0, 96], sizes = [8, 32], strides = [1, 1]} : vector<8x128xf32> to vector<8x32xf32>
    %306 = arith.mulf %299, %215 : vector<8x32xf32>
    %307 = arith.mulf %298, %304 : vector<8x32xf32>
    %308 = arith.addf %306, %307 : vector<8x32xf32>
    %309 = math.tanh %308 : vector<8x32xf32>
    %310 = arith.mulf %305, %309 : vector<8x32xf32>
    %cst_137 = arith.constant 1.000000e+00 : f32
    %311 = vector.broadcast %cst_137 : f32 to vector<8x32xf32>
    %312 = arith.cmpf ogt, %19, %311 : vector<8x32xf32>
    %313 = arith.select %312, %310, %214 : vector<8x32xi1>, vector<8x32xf32>
    %314 = arith.select %312, %308, %215 : vector<8x32xi1>, vector<8x32xf32>
    %cst_138 = arith.constant 0.000000e+00 : f32
    %315 = vector.broadcast %cst_138 : f32 to vector<8x32xf32>
    %316 = arith.select %312, %310, %315 : vector<8x32xi1>, vector<8x32xf32>
    %c32 = arith.constant 32 : index
    %c0_139 = arith.constant 0 : index
    %317 = vector.load %arg9[%c32, %c0_139] : memref<64x128xf32, #tpu.memory_space<vmem>>, vector<8x128xf32>
    %c0_140 = arith.constant 0 : index
    %c0_141 = arith.constant 0 : index
    %c0_142 = arith.constant 0 : index
    %318 = vector.load %arg4[%c0_140, %c0_141, %c0_142] : memref<3x32x128xf32, #tpu.memory_space<vmem>>, vector<1x32x128xf32>
    %319 = vector.shape_cast %318 : vector<1x32x128xf32> to vector<32x128xf32>
    %cst_143 = arith.constant dense<0.000000e+00> : vector<8x128xf32>
    %320 = tpu.matmul %243, %319, %cst_143 {dimension_numbers = #tpu.dot_dimension_numbers<[1], [0], [0], [1], [0, 0, 1, 1], [], []>} : vector<8x32xf32>, vector<32x128xf32>, vector<8x128xf32> -> vector<8x128xf32>
    %321 = arith.addf %317, %320 : vector<8x128xf32>
    %322 = arith.negf %321 : vector<8x128xf32>
    %323 = math.exp %322 : vector<8x128xf32>
    %cst_144 = arith.constant 1.000000e+00 : f32
    %324 = vector.broadcast %cst_144 : f32 to vector<8x128xf32>
    %325 = arith.addf %324, %323 : vector<8x128xf32>
    %326 = arith.divf %324, %325 : vector<8x128xf32>
    %327 = vector.extract_strided_slice %326 {offsets = [0, 0], sizes = [8, 32], strides = [1, 1]} : vector<8x128xf32> to vector<8x32xf32>
    %328 = vector.extract_strided_slice %326 {offsets = [0, 32], sizes = [8, 32], strides = [1, 1]} : vector<8x128xf32> to vector<8x32xf32>
    %329 = vector.extract_strided_slice %326 {offsets = [0, 64], sizes = [8, 32], strides = [1, 1]} : vector<8x128xf32> to vector<8x32xf32>
    %cst_145 = arith.constant 2.000000e+00 : f32
    %330 = vector.broadcast %cst_145 : f32 to vector<8x32xf32>
    %331 = arith.mulf %330, %329 : vector<8x32xf32>
    %cst_146 = arith.constant 1.000000e+00 : f32
    %332 = vector.broadcast %cst_146 : f32 to vector<8x32xf32>
    %333 = arith.subf %331, %332 : vector<8x32xf32>
    %334 = vector.extract_strided_slice %326 {offsets = [0, 96], sizes = [8, 32], strides = [1, 1]} : vector<8x128xf32> to vector<8x32xf32>
    %335 = arith.mulf %328, %244 : vector<8x32xf32>
    %336 = arith.mulf %327, %333 : vector<8x32xf32>
    %337 = arith.addf %335, %336 : vector<8x32xf32>
    %338 = math.tanh %337 : vector<8x32xf32>
    %339 = arith.mulf %334, %338 : vector<8x32xf32>
    %cst_147 = arith.constant 4.000000e+00 : f32
    %340 = vector.broadcast %cst_147 : f32 to vector<8x32xf32>
    %341 = arith.cmpf ogt, %19, %340 : vector<8x32xf32>
    %342 = arith.select %341, %339, %243 : vector<8x32xi1>, vector<8x32xf32>
    %343 = arith.select %341, %337, %244 : vector<8x32xi1>, vector<8x32xf32>
    %cst_148 = arith.constant 0.000000e+00 : f32
    %344 = vector.broadcast %cst_148 : f32 to vector<8x32xf32>
    %345 = arith.select %341, %339, %344 : vector<8x32xi1>, vector<8x32xf32>
    %c1_149 = arith.constant 1 : index
    %c0_150 = arith.constant 0 : index
    %c0_151 = arith.constant 0 : index
    %346 = vector.load %arg3[%c1_149, %c0_150, %c0_151] : memref<3x32x128xf32, #tpu.memory_space<vmem>>, vector<1x32x128xf32>
    %347 = vector.shape_cast %346 : vector<1x32x128xf32> to vector<32x128xf32>
    %cst_152 = arith.constant dense<0.000000e+00> : vector<8x128xf32>
    %348 = tpu.matmul %246, %347, %cst_152 {dimension_numbers = #tpu.dot_dimension_numbers<[1], [0], [0], [1], [0, 0, 1, 1], [], []>} : vector<8x32xf32>, vector<32x128xf32>, vector<8x128xf32> -> vector<8x128xf32>
    %c1_153 = arith.constant 1 : index
    %c0_154 = arith.constant 0 : index
    %c0_155 = arith.constant 0 : index
    %349 = vector.load %arg5[%c1_153, %c0_154, %c0_155] : memref<3x1x128xf32, #tpu.memory_space<vmem>>, vector<1x1x128xf32>
    %350 = vector.shape_cast %349 : vector<1x1x128xf32> to vector<1x128xf32>
    %351 = vector.broadcast %350 : vector<1x128xf32> to vector<8x128xf32>
    %352 = arith.addf %348, %351 : vector<8x128xf32>
    %c1_156 = arith.constant 1 : index
    %c0_157 = arith.constant 0 : index
    %c0_158 = arith.constant 0 : index
    %353 = vector.load %arg4[%c1_156, %c0_157, %c0_158] : memref<3x32x128xf32, #tpu.memory_space<vmem>>, vector<1x32x128xf32>
    %354 = vector.shape_cast %353 : vector<1x32x128xf32> to vector<32x128xf32>
    %cst_159 = arith.constant dense<0.000000e+00> : vector<8x128xf32>
    %355 = tpu.matmul %278, %354, %cst_159 {dimension_numbers = #tpu.dot_dimension_numbers<[1], [0], [0], [1], [0, 0, 1, 1], [], []>} : vector<8x32xf32>, vector<32x128xf32>, vector<8x128xf32> -> vector<8x128xf32>
    %356 = arith.addf %352, %355 : vector<8x128xf32>
    %357 = arith.negf %356 : vector<8x128xf32>
    %358 = math.exp %357 : vector<8x128xf32>
    %cst_160 = arith.constant 1.000000e+00 : f32
    %359 = vector.broadcast %cst_160 : f32 to vector<8x128xf32>
    %360 = arith.addf %359, %358 : vector<8x128xf32>
    %361 = arith.divf %359, %360 : vector<8x128xf32>
    %362 = vector.extract_strided_slice %361 {offsets = [0, 0], sizes = [8, 32], strides = [1, 1]} : vector<8x128xf32> to vector<8x32xf32>
    %363 = vector.extract_strided_slice %361 {offsets = [0, 32], sizes = [8, 32], strides = [1, 1]} : vector<8x128xf32> to vector<8x32xf32>
    %364 = vector.extract_strided_slice %361 {offsets = [0, 64], sizes = [8, 32], strides = [1, 1]} : vector<8x128xf32> to vector<8x32xf32>
    %cst_161 = arith.constant 2.000000e+00 : f32
    %365 = vector.broadcast %cst_161 : f32 to vector<8x32xf32>
    %366 = arith.mulf %365, %364 : vector<8x32xf32>
    %cst_162 = arith.constant 1.000000e+00 : f32
    %367 = vector.broadcast %cst_162 : f32 to vector<8x32xf32>
    %368 = arith.subf %366, %367 : vector<8x32xf32>
    %369 = vector.extract_strided_slice %361 {offsets = [0, 96], sizes = [8, 32], strides = [1, 1]} : vector<8x128xf32> to vector<8x32xf32>
    %370 = arith.mulf %363, %279 : vector<8x32xf32>
    %371 = arith.mulf %362, %368 : vector<8x32xf32>
    %372 = arith.addf %370, %371 : vector<8x32xf32>
    %373 = math.tanh %372 : vector<8x32xf32>
    %374 = arith.mulf %369, %373 : vector<8x32xf32>
    %cst_163 = arith.constant 3.000000e+00 : f32
    %375 = vector.broadcast %cst_163 : f32 to vector<8x32xf32>
    %376 = arith.cmpf ogt, %19, %375 : vector<8x32xf32>
    %377 = arith.select %376, %374, %278 : vector<8x32xi1>, vector<8x32xf32>
    %378 = arith.select %376, %372, %279 : vector<8x32xi1>, vector<8x32xf32>
    %cst_164 = arith.constant 0.000000e+00 : f32
    %379 = vector.broadcast %cst_164 : f32 to vector<8x32xf32>
    %380 = arith.select %376, %374, %379 : vector<8x32xi1>, vector<8x32xf32>
    %c2_165 = arith.constant 2 : index
    %c0_166 = arith.constant 0 : index
    %c0_167 = arith.constant 0 : index
    %381 = vector.load %arg3[%c2_165, %c0_166, %c0_167] : memref<3x32x128xf32, #tpu.memory_space<vmem>>, vector<1x32x128xf32>
    %382 = vector.shape_cast %381 : vector<1x32x128xf32> to vector<32x128xf32>
    %cst_168 = arith.constant dense<0.000000e+00> : vector<8x128xf32>
    %383 = tpu.matmul %281, %382, %cst_168 {dimension_numbers = #tpu.dot_dimension_numbers<[1], [0], [0], [1], [0, 0, 1, 1], [], []>} : vector<8x32xf32>, vector<32x128xf32>, vector<8x128xf32> -> vector<8x128xf32>
    %c2_169 = arith.constant 2 : index
    %c0_170 = arith.constant 0 : index
    %c0_171 = arith.constant 0 : index
    %384 = vector.load %arg5[%c2_169, %c0_170, %c0_171] : memref<3x1x128xf32, #tpu.memory_space<vmem>>, vector<1x1x128xf32>
    %385 = vector.shape_cast %384 : vector<1x1x128xf32> to vector<1x128xf32>
    %386 = vector.broadcast %385 : vector<1x128xf32> to vector<8x128xf32>
    %387 = arith.addf %383, %386 : vector<8x128xf32>
    %c2_172 = arith.constant 2 : index
    %c0_173 = arith.constant 0 : index
    %c0_174 = arith.constant 0 : index
    %388 = vector.load %arg4[%c2_172, %c0_173, %c0_174] : memref<3x32x128xf32, #tpu.memory_space<vmem>>, vector<1x32x128xf32>
    %389 = vector.shape_cast %388 : vector<1x32x128xf32> to vector<32x128xf32>
    %cst_175 = arith.constant dense<0.000000e+00> : vector<8x128xf32>
    %390 = tpu.matmul %313, %389, %cst_175 {dimension_numbers = #tpu.dot_dimension_numbers<[1], [0], [0], [1], [0, 0, 1, 1], [], []>} : vector<8x32xf32>, vector<32x128xf32>, vector<8x128xf32> -> vector<8x128xf32>
    %391 = arith.addf %387, %390 : vector<8x128xf32>
    %392 = arith.negf %391 : vector<8x128xf32>
    %393 = math.exp %392 : vector<8x128xf32>
    %cst_176 = arith.constant 1.000000e+00 : f32
    %394 = vector.broadcast %cst_176 : f32 to vector<8x128xf32>
    %395 = arith.addf %394, %393 : vector<8x128xf32>
    %396 = arith.divf %394, %395 : vector<8x128xf32>
    %397 = vector.extract_strided_slice %396 {offsets = [0, 0], sizes = [8, 32], strides = [1, 1]} : vector<8x128xf32> to vector<8x32xf32>
    %398 = vector.extract_strided_slice %396 {offsets = [0, 32], sizes = [8, 32], strides = [1, 1]} : vector<8x128xf32> to vector<8x32xf32>
    %399 = vector.extract_strided_slice %396 {offsets = [0, 64], sizes = [8, 32], strides = [1, 1]} : vector<8x128xf32> to vector<8x32xf32>
    %cst_177 = arith.constant 2.000000e+00 : f32
    %400 = vector.broadcast %cst_177 : f32 to vector<8x32xf32>
    %401 = arith.mulf %400, %399 : vector<8x32xf32>
    %cst_178 = arith.constant 1.000000e+00 : f32
    %402 = vector.broadcast %cst_178 : f32 to vector<8x32xf32>
    %403 = arith.subf %401, %402 : vector<8x32xf32>
    %404 = vector.extract_strided_slice %396 {offsets = [0, 96], sizes = [8, 32], strides = [1, 1]} : vector<8x128xf32> to vector<8x32xf32>
    %405 = arith.mulf %398, %314 : vector<8x32xf32>
    %406 = arith.mulf %397, %403 : vector<8x32xf32>
    %407 = arith.addf %405, %406 : vector<8x32xf32>
    %408 = math.tanh %407 : vector<8x32xf32>
    %409 = arith.mulf %404, %408 : vector<8x32xf32>
    %cst_179 = arith.constant 2.000000e+00 : f32
    %410 = vector.broadcast %cst_179 : f32 to vector<8x32xf32>
    %411 = arith.cmpf ogt, %19, %410 : vector<8x32xf32>
    %412 = arith.select %411, %409, %313 : vector<8x32xi1>, vector<8x32xf32>
    %413 = arith.select %411, %407, %314 : vector<8x32xi1>, vector<8x32xf32>
    %cst_180 = arith.constant 0.000000e+00 : f32
    %414 = vector.broadcast %cst_180 : f32 to vector<8x32xf32>
    %415 = arith.select %411, %409, %414 : vector<8x32xi1>, vector<8x32xf32>
    %c40 = arith.constant 40 : index
    %c0_181 = arith.constant 0 : index
    %416 = vector.load %arg9[%c40, %c0_181] : memref<64x128xf32, #tpu.memory_space<vmem>>, vector<8x128xf32>
    %c0_182 = arith.constant 0 : index
    %c0_183 = arith.constant 0 : index
    %c0_184 = arith.constant 0 : index
    %417 = vector.load %arg4[%c0_182, %c0_183, %c0_184] : memref<3x32x128xf32, #tpu.memory_space<vmem>>, vector<1x32x128xf32>
    %418 = vector.shape_cast %417 : vector<1x32x128xf32> to vector<32x128xf32>
    %cst_185 = arith.constant dense<0.000000e+00> : vector<8x128xf32>
    %419 = tpu.matmul %342, %418, %cst_185 {dimension_numbers = #tpu.dot_dimension_numbers<[1], [0], [0], [1], [0, 0, 1, 1], [], []>} : vector<8x32xf32>, vector<32x128xf32>, vector<8x128xf32> -> vector<8x128xf32>
    %420 = arith.addf %416, %419 : vector<8x128xf32>
    %421 = arith.negf %420 : vector<8x128xf32>
    %422 = math.exp %421 : vector<8x128xf32>
    %cst_186 = arith.constant 1.000000e+00 : f32
    %423 = vector.broadcast %cst_186 : f32 to vector<8x128xf32>
    %424 = arith.addf %423, %422 : vector<8x128xf32>
    %425 = arith.divf %423, %424 : vector<8x128xf32>
    %426 = vector.extract_strided_slice %425 {offsets = [0, 0], sizes = [8, 32], strides = [1, 1]} : vector<8x128xf32> to vector<8x32xf32>
    %427 = vector.extract_strided_slice %425 {offsets = [0, 32], sizes = [8, 32], strides = [1, 1]} : vector<8x128xf32> to vector<8x32xf32>
    %428 = vector.extract_strided_slice %425 {offsets = [0, 64], sizes = [8, 32], strides = [1, 1]} : vector<8x128xf32> to vector<8x32xf32>
    %cst_187 = arith.constant 2.000000e+00 : f32
    %429 = vector.broadcast %cst_187 : f32 to vector<8x32xf32>
    %430 = arith.mulf %429, %428 : vector<8x32xf32>
    %cst_188 = arith.constant 1.000000e+00 : f32
    %431 = vector.broadcast %cst_188 : f32 to vector<8x32xf32>
    %432 = arith.subf %430, %431 : vector<8x32xf32>
    %433 = vector.extract_strided_slice %425 {offsets = [0, 96], sizes = [8, 32], strides = [1, 1]} : vector<8x128xf32> to vector<8x32xf32>
    %434 = arith.mulf %427, %343 : vector<8x32xf32>
    %435 = arith.mulf %426, %432 : vector<8x32xf32>
    %436 = arith.addf %434, %435 : vector<8x32xf32>
    %437 = math.tanh %436 : vector<8x32xf32>
    %438 = arith.mulf %433, %437 : vector<8x32xf32>
    %cst_189 = arith.constant 5.000000e+00 : f32
    %439 = vector.broadcast %cst_189 : f32 to vector<8x32xf32>
    %440 = arith.cmpf ogt, %19, %439 : vector<8x32xf32>
    %441 = arith.select %440, %438, %342 : vector<8x32xi1>, vector<8x32xf32>
    %442 = arith.select %440, %436, %343 : vector<8x32xi1>, vector<8x32xf32>
    %cst_190 = arith.constant 0.000000e+00 : f32
    %443 = vector.broadcast %cst_190 : f32 to vector<8x32xf32>
    %444 = arith.select %440, %438, %443 : vector<8x32xi1>, vector<8x32xf32>
    %c1_191 = arith.constant 1 : index
    %c0_192 = arith.constant 0 : index
    %c0_193 = arith.constant 0 : index
    %445 = vector.load %arg3[%c1_191, %c0_192, %c0_193] : memref<3x32x128xf32, #tpu.memory_space<vmem>>, vector<1x32x128xf32>
    %446 = vector.shape_cast %445 : vector<1x32x128xf32> to vector<32x128xf32>
    %cst_194 = arith.constant dense<0.000000e+00> : vector<8x128xf32>
    %447 = tpu.matmul %345, %446, %cst_194 {dimension_numbers = #tpu.dot_dimension_numbers<[1], [0], [0], [1], [0, 0, 1, 1], [], []>} : vector<8x32xf32>, vector<32x128xf32>, vector<8x128xf32> -> vector<8x128xf32>
    %c1_195 = arith.constant 1 : index
    %c0_196 = arith.constant 0 : index
    %c0_197 = arith.constant 0 : index
    %448 = vector.load %arg5[%c1_195, %c0_196, %c0_197] : memref<3x1x128xf32, #tpu.memory_space<vmem>>, vector<1x1x128xf32>
    %449 = vector.shape_cast %448 : vector<1x1x128xf32> to vector<1x128xf32>
    %450 = vector.broadcast %449 : vector<1x128xf32> to vector<8x128xf32>
    %451 = arith.addf %447, %450 : vector<8x128xf32>
    %c1_198 = arith.constant 1 : index
    %c0_199 = arith.constant 0 : index
    %c0_200 = arith.constant 0 : index
    %452 = vector.load %arg4[%c1_198, %c0_199, %c0_200] : memref<3x32x128xf32, #tpu.memory_space<vmem>>, vector<1x32x128xf32>
    %453 = vector.shape_cast %452 : vector<1x32x128xf32> to vector<32x128xf32>
    %cst_201 = arith.constant dense<0.000000e+00> : vector<8x128xf32>
    %454 = tpu.matmul %377, %453, %cst_201 {dimension_numbers = #tpu.dot_dimension_numbers<[1], [0], [0], [1], [0, 0, 1, 1], [], []>} : vector<8x32xf32>, vector<32x128xf32>, vector<8x128xf32> -> vector<8x128xf32>
    %455 = arith.addf %451, %454 : vector<8x128xf32>
    %456 = arith.negf %455 : vector<8x128xf32>
    %457 = math.exp %456 : vector<8x128xf32>
    %cst_202 = arith.constant 1.000000e+00 : f32
    %458 = vector.broadcast %cst_202 : f32 to vector<8x128xf32>
    %459 = arith.addf %458, %457 : vector<8x128xf32>
    %460 = arith.divf %458, %459 : vector<8x128xf32>
    %461 = vector.extract_strided_slice %460 {offsets = [0, 0], sizes = [8, 32], strides = [1, 1]} : vector<8x128xf32> to vector<8x32xf32>
    %462 = vector.extract_strided_slice %460 {offsets = [0, 32], sizes = [8, 32], strides = [1, 1]} : vector<8x128xf32> to vector<8x32xf32>
    %463 = vector.extract_strided_slice %460 {offsets = [0, 64], sizes = [8, 32], strides = [1, 1]} : vector<8x128xf32> to vector<8x32xf32>
    %cst_203 = arith.constant 2.000000e+00 : f32
    %464 = vector.broadcast %cst_203 : f32 to vector<8x32xf32>
    %465 = arith.mulf %464, %463 : vector<8x32xf32>
    %cst_204 = arith.constant 1.000000e+00 : f32
    %466 = vector.broadcast %cst_204 : f32 to vector<8x32xf32>
    %467 = arith.subf %465, %466 : vector<8x32xf32>
    %468 = vector.extract_strided_slice %460 {offsets = [0, 96], sizes = [8, 32], strides = [1, 1]} : vector<8x128xf32> to vector<8x32xf32>
    %469 = arith.mulf %462, %378 : vector<8x32xf32>
    %470 = arith.mulf %461, %467 : vector<8x32xf32>
    %471 = arith.addf %469, %470 : vector<8x32xf32>
    %472 = math.tanh %471 : vector<8x32xf32>
    %473 = arith.mulf %468, %472 : vector<8x32xf32>
    %cst_205 = arith.constant 4.000000e+00 : f32
    %474 = vector.broadcast %cst_205 : f32 to vector<8x32xf32>
    %475 = arith.cmpf ogt, %19, %474 : vector<8x32xf32>
    %476 = arith.select %475, %473, %377 : vector<8x32xi1>, vector<8x32xf32>
    %477 = arith.select %475, %471, %378 : vector<8x32xi1>, vector<8x32xf32>
    %cst_206 = arith.constant 0.000000e+00 : f32
    %478 = vector.broadcast %cst_206 : f32 to vector<8x32xf32>
    %479 = arith.select %475, %473, %478 : vector<8x32xi1>, vector<8x32xf32>
    %c2_207 = arith.constant 2 : index
    %c0_208 = arith.constant 0 : index
    %c0_209 = arith.constant 0 : index
    %480 = vector.load %arg3[%c2_207, %c0_208, %c0_209] : memref<3x32x128xf32, #tpu.memory_space<vmem>>, vector<1x32x128xf32>
    %481 = vector.shape_cast %480 : vector<1x32x128xf32> to vector<32x128xf32>
    %cst_210 = arith.constant dense<0.000000e+00> : vector<8x128xf32>
    %482 = tpu.matmul %380, %481, %cst_210 {dimension_numbers = #tpu.dot_dimension_numbers<[1], [0], [0], [1], [0, 0, 1, 1], [], []>} : vector<8x32xf32>, vector<32x128xf32>, vector<8x128xf32> -> vector<8x128xf32>
    %c2_211 = arith.constant 2 : index
    %c0_212 = arith.constant 0 : index
    %c0_213 = arith.constant 0 : index
    %483 = vector.load %arg5[%c2_211, %c0_212, %c0_213] : memref<3x1x128xf32, #tpu.memory_space<vmem>>, vector<1x1x128xf32>
    %484 = vector.shape_cast %483 : vector<1x1x128xf32> to vector<1x128xf32>
    %485 = vector.broadcast %484 : vector<1x128xf32> to vector<8x128xf32>
    %486 = arith.addf %482, %485 : vector<8x128xf32>
    %c2_214 = arith.constant 2 : index
    %c0_215 = arith.constant 0 : index
    %c0_216 = arith.constant 0 : index
    %487 = vector.load %arg4[%c2_214, %c0_215, %c0_216] : memref<3x32x128xf32, #tpu.memory_space<vmem>>, vector<1x32x128xf32>
    %488 = vector.shape_cast %487 : vector<1x32x128xf32> to vector<32x128xf32>
    %cst_217 = arith.constant dense<0.000000e+00> : vector<8x128xf32>
    %489 = tpu.matmul %412, %488, %cst_217 {dimension_numbers = #tpu.dot_dimension_numbers<[1], [0], [0], [1], [0, 0, 1, 1], [], []>} : vector<8x32xf32>, vector<32x128xf32>, vector<8x128xf32> -> vector<8x128xf32>
    %490 = arith.addf %486, %489 : vector<8x128xf32>
    %491 = arith.negf %490 : vector<8x128xf32>
    %492 = math.exp %491 : vector<8x128xf32>
    %cst_218 = arith.constant 1.000000e+00 : f32
    %493 = vector.broadcast %cst_218 : f32 to vector<8x128xf32>
    %494 = arith.addf %493, %492 : vector<8x128xf32>
    %495 = arith.divf %493, %494 : vector<8x128xf32>
    %496 = vector.extract_strided_slice %495 {offsets = [0, 0], sizes = [8, 32], strides = [1, 1]} : vector<8x128xf32> to vector<8x32xf32>
    %497 = vector.extract_strided_slice %495 {offsets = [0, 32], sizes = [8, 32], strides = [1, 1]} : vector<8x128xf32> to vector<8x32xf32>
    %498 = vector.extract_strided_slice %495 {offsets = [0, 64], sizes = [8, 32], strides = [1, 1]} : vector<8x128xf32> to vector<8x32xf32>
    %cst_219 = arith.constant 2.000000e+00 : f32
    %499 = vector.broadcast %cst_219 : f32 to vector<8x32xf32>
    %500 = arith.mulf %499, %498 : vector<8x32xf32>
    %cst_220 = arith.constant 1.000000e+00 : f32
    %501 = vector.broadcast %cst_220 : f32 to vector<8x32xf32>
    %502 = arith.subf %500, %501 : vector<8x32xf32>
    %503 = vector.extract_strided_slice %495 {offsets = [0, 96], sizes = [8, 32], strides = [1, 1]} : vector<8x128xf32> to vector<8x32xf32>
    %504 = arith.mulf %497, %413 : vector<8x32xf32>
    %505 = arith.mulf %496, %502 : vector<8x32xf32>
    %506 = arith.addf %504, %505 : vector<8x32xf32>
    %507 = math.tanh %506 : vector<8x32xf32>
    %508 = arith.mulf %503, %507 : vector<8x32xf32>
    %cst_221 = arith.constant 3.000000e+00 : f32
    %509 = vector.broadcast %cst_221 : f32 to vector<8x32xf32>
    %510 = arith.cmpf ogt, %19, %509 : vector<8x32xf32>
    %511 = arith.select %510, %508, %412 : vector<8x32xi1>, vector<8x32xf32>
    %512 = arith.select %510, %506, %413 : vector<8x32xi1>, vector<8x32xf32>
    %cst_222 = arith.constant 0.000000e+00 : f32
    %513 = vector.broadcast %cst_222 : f32 to vector<8x32xf32>
    %514 = arith.select %510, %508, %513 : vector<8x32xi1>, vector<8x32xf32>
    %c48 = arith.constant 48 : index
    %c0_223 = arith.constant 0 : index
    %515 = vector.load %arg9[%c48, %c0_223] : memref<64x128xf32, #tpu.memory_space<vmem>>, vector<8x128xf32>
    %c0_224 = arith.constant 0 : index
    %c0_225 = arith.constant 0 : index
    %c0_226 = arith.constant 0 : index
    %516 = vector.load %arg4[%c0_224, %c0_225, %c0_226] : memref<3x32x128xf32, #tpu.memory_space<vmem>>, vector<1x32x128xf32>
    %517 = vector.shape_cast %516 : vector<1x32x128xf32> to vector<32x128xf32>
    %cst_227 = arith.constant dense<0.000000e+00> : vector<8x128xf32>
    %518 = tpu.matmul %441, %517, %cst_227 {dimension_numbers = #tpu.dot_dimension_numbers<[1], [0], [0], [1], [0, 0, 1, 1], [], []>} : vector<8x32xf32>, vector<32x128xf32>, vector<8x128xf32> -> vector<8x128xf32>
    %519 = arith.addf %515, %518 : vector<8x128xf32>
    %520 = arith.negf %519 : vector<8x128xf32>
    %521 = math.exp %520 : vector<8x128xf32>
    %cst_228 = arith.constant 1.000000e+00 : f32
    %522 = vector.broadcast %cst_228 : f32 to vector<8x128xf32>
    %523 = arith.addf %522, %521 : vector<8x128xf32>
    %524 = arith.divf %522, %523 : vector<8x128xf32>
    %525 = vector.extract_strided_slice %524 {offsets = [0, 0], sizes = [8, 32], strides = [1, 1]} : vector<8x128xf32> to vector<8x32xf32>
    %526 = vector.extract_strided_slice %524 {offsets = [0, 32], sizes = [8, 32], strides = [1, 1]} : vector<8x128xf32> to vector<8x32xf32>
    %527 = vector.extract_strided_slice %524 {offsets = [0, 64], sizes = [8, 32], strides = [1, 1]} : vector<8x128xf32> to vector<8x32xf32>
    %cst_229 = arith.constant 2.000000e+00 : f32
    %528 = vector.broadcast %cst_229 : f32 to vector<8x32xf32>
    %529 = arith.mulf %528, %527 : vector<8x32xf32>
    %cst_230 = arith.constant 1.000000e+00 : f32
    %530 = vector.broadcast %cst_230 : f32 to vector<8x32xf32>
    %531 = arith.subf %529, %530 : vector<8x32xf32>
    %532 = vector.extract_strided_slice %524 {offsets = [0, 96], sizes = [8, 32], strides = [1, 1]} : vector<8x128xf32> to vector<8x32xf32>
    %533 = arith.mulf %526, %442 : vector<8x32xf32>
    %534 = arith.mulf %525, %531 : vector<8x32xf32>
    %535 = arith.addf %533, %534 : vector<8x32xf32>
    %536 = math.tanh %535 : vector<8x32xf32>
    %537 = arith.mulf %532, %536 : vector<8x32xf32>
    %cst_231 = arith.constant 6.000000e+00 : f32
    %538 = vector.broadcast %cst_231 : f32 to vector<8x32xf32>
    %539 = arith.cmpf ogt, %19, %538 : vector<8x32xf32>
    %540 = arith.select %539, %537, %441 : vector<8x32xi1>, vector<8x32xf32>
    %541 = arith.select %539, %535, %442 : vector<8x32xi1>, vector<8x32xf32>
    %cst_232 = arith.constant 0.000000e+00 : f32
    %542 = vector.broadcast %cst_232 : f32 to vector<8x32xf32>
    %543 = arith.select %539, %537, %542 : vector<8x32xi1>, vector<8x32xf32>
    %c1_233 = arith.constant 1 : index
    %c0_234 = arith.constant 0 : index
    %c0_235 = arith.constant 0 : index
    %544 = vector.load %arg3[%c1_233, %c0_234, %c0_235] : memref<3x32x128xf32, #tpu.memory_space<vmem>>, vector<1x32x128xf32>
    %545 = vector.shape_cast %544 : vector<1x32x128xf32> to vector<32x128xf32>
    %cst_236 = arith.constant dense<0.000000e+00> : vector<8x128xf32>
    %546 = tpu.matmul %444, %545, %cst_236 {dimension_numbers = #tpu.dot_dimension_numbers<[1], [0], [0], [1], [0, 0, 1, 1], [], []>} : vector<8x32xf32>, vector<32x128xf32>, vector<8x128xf32> -> vector<8x128xf32>
    %c1_237 = arith.constant 1 : index
    %c0_238 = arith.constant 0 : index
    %c0_239 = arith.constant 0 : index
    %547 = vector.load %arg5[%c1_237, %c0_238, %c0_239] : memref<3x1x128xf32, #tpu.memory_space<vmem>>, vector<1x1x128xf32>
    %548 = vector.shape_cast %547 : vector<1x1x128xf32> to vector<1x128xf32>
    %549 = vector.broadcast %548 : vector<1x128xf32> to vector<8x128xf32>
    %550 = arith.addf %546, %549 : vector<8x128xf32>
    %c1_240 = arith.constant 1 : index
    %c0_241 = arith.constant 0 : index
    %c0_242 = arith.constant 0 : index
    %551 = vector.load %arg4[%c1_240, %c0_241, %c0_242] : memref<3x32x128xf32, #tpu.memory_space<vmem>>, vector<1x32x128xf32>
    %552 = vector.shape_cast %551 : vector<1x32x128xf32> to vector<32x128xf32>
    %cst_243 = arith.constant dense<0.000000e+00> : vector<8x128xf32>
    %553 = tpu.matmul %476, %552, %cst_243 {dimension_numbers = #tpu.dot_dimension_numbers<[1], [0], [0], [1], [0, 0, 1, 1], [], []>} : vector<8x32xf32>, vector<32x128xf32>, vector<8x128xf32> -> vector<8x128xf32>
    %554 = arith.addf %550, %553 : vector<8x128xf32>
    %555 = arith.negf %554 : vector<8x128xf32>
    %556 = math.exp %555 : vector<8x128xf32>
    %cst_244 = arith.constant 1.000000e+00 : f32
    %557 = vector.broadcast %cst_244 : f32 to vector<8x128xf32>
    %558 = arith.addf %557, %556 : vector<8x128xf32>
    %559 = arith.divf %557, %558 : vector<8x128xf32>
    %560 = vector.extract_strided_slice %559 {offsets = [0, 0], sizes = [8, 32], strides = [1, 1]} : vector<8x128xf32> to vector<8x32xf32>
    %561 = vector.extract_strided_slice %559 {offsets = [0, 32], sizes = [8, 32], strides = [1, 1]} : vector<8x128xf32> to vector<8x32xf32>
    %562 = vector.extract_strided_slice %559 {offsets = [0, 64], sizes = [8, 32], strides = [1, 1]} : vector<8x128xf32> to vector<8x32xf32>
    %cst_245 = arith.constant 2.000000e+00 : f32
    %563 = vector.broadcast %cst_245 : f32 to vector<8x32xf32>
    %564 = arith.mulf %563, %562 : vector<8x32xf32>
    %cst_246 = arith.constant 1.000000e+00 : f32
    %565 = vector.broadcast %cst_246 : f32 to vector<8x32xf32>
    %566 = arith.subf %564, %565 : vector<8x32xf32>
    %567 = vector.extract_strided_slice %559 {offsets = [0, 96], sizes = [8, 32], strides = [1, 1]} : vector<8x128xf32> to vector<8x32xf32>
    %568 = arith.mulf %561, %477 : vector<8x32xf32>
    %569 = arith.mulf %560, %566 : vector<8x32xf32>
    %570 = arith.addf %568, %569 : vector<8x32xf32>
    %571 = math.tanh %570 : vector<8x32xf32>
    %572 = arith.mulf %567, %571 : vector<8x32xf32>
    %cst_247 = arith.constant 5.000000e+00 : f32
    %573 = vector.broadcast %cst_247 : f32 to vector<8x32xf32>
    %574 = arith.cmpf ogt, %19, %573 : vector<8x32xf32>
    %575 = arith.select %574, %572, %476 : vector<8x32xi1>, vector<8x32xf32>
    %576 = arith.select %574, %570, %477 : vector<8x32xi1>, vector<8x32xf32>
    %cst_248 = arith.constant 0.000000e+00 : f32
    %577 = vector.broadcast %cst_248 : f32 to vector<8x32xf32>
    %578 = arith.select %574, %572, %577 : vector<8x32xi1>, vector<8x32xf32>
    %c2_249 = arith.constant 2 : index
    %c0_250 = arith.constant 0 : index
    %c0_251 = arith.constant 0 : index
    %579 = vector.load %arg3[%c2_249, %c0_250, %c0_251] : memref<3x32x128xf32, #tpu.memory_space<vmem>>, vector<1x32x128xf32>
    %580 = vector.shape_cast %579 : vector<1x32x128xf32> to vector<32x128xf32>
    %cst_252 = arith.constant dense<0.000000e+00> : vector<8x128xf32>
    %581 = tpu.matmul %479, %580, %cst_252 {dimension_numbers = #tpu.dot_dimension_numbers<[1], [0], [0], [1], [0, 0, 1, 1], [], []>} : vector<8x32xf32>, vector<32x128xf32>, vector<8x128xf32> -> vector<8x128xf32>
    %c2_253 = arith.constant 2 : index
    %c0_254 = arith.constant 0 : index
    %c0_255 = arith.constant 0 : index
    %582 = vector.load %arg5[%c2_253, %c0_254, %c0_255] : memref<3x1x128xf32, #tpu.memory_space<vmem>>, vector<1x1x128xf32>
    %583 = vector.shape_cast %582 : vector<1x1x128xf32> to vector<1x128xf32>
    %584 = vector.broadcast %583 : vector<1x128xf32> to vector<8x128xf32>
    %585 = arith.addf %581, %584 : vector<8x128xf32>
    %c2_256 = arith.constant 2 : index
    %c0_257 = arith.constant 0 : index
    %c0_258 = arith.constant 0 : index
    %586 = vector.load %arg4[%c2_256, %c0_257, %c0_258] : memref<3x32x128xf32, #tpu.memory_space<vmem>>, vector<1x32x128xf32>
    %587 = vector.shape_cast %586 : vector<1x32x128xf32> to vector<32x128xf32>
    %cst_259 = arith.constant dense<0.000000e+00> : vector<8x128xf32>
    %588 = tpu.matmul %511, %587, %cst_259 {dimension_numbers = #tpu.dot_dimension_numbers<[1], [0], [0], [1], [0, 0, 1, 1], [], []>} : vector<8x32xf32>, vector<32x128xf32>, vector<8x128xf32> -> vector<8x128xf32>
    %589 = arith.addf %585, %588 : vector<8x128xf32>
    %590 = arith.negf %589 : vector<8x128xf32>
    %591 = math.exp %590 : vector<8x128xf32>
    %cst_260 = arith.constant 1.000000e+00 : f32
    %592 = vector.broadcast %cst_260 : f32 to vector<8x128xf32>
    %593 = arith.addf %592, %591 : vector<8x128xf32>
    %594 = arith.divf %592, %593 : vector<8x128xf32>
    %595 = vector.extract_strided_slice %594 {offsets = [0, 0], sizes = [8, 32], strides = [1, 1]} : vector<8x128xf32> to vector<8x32xf32>
    %596 = vector.extract_strided_slice %594 {offsets = [0, 32], sizes = [8, 32], strides = [1, 1]} : vector<8x128xf32> to vector<8x32xf32>
    %597 = vector.extract_strided_slice %594 {offsets = [0, 64], sizes = [8, 32], strides = [1, 1]} : vector<8x128xf32> to vector<8x32xf32>
    %cst_261 = arith.constant 2.000000e+00 : f32
    %598 = vector.broadcast %cst_261 : f32 to vector<8x32xf32>
    %599 = arith.mulf %598, %597 : vector<8x32xf32>
    %cst_262 = arith.constant 1.000000e+00 : f32
    %600 = vector.broadcast %cst_262 : f32 to vector<8x32xf32>
    %601 = arith.subf %599, %600 : vector<8x32xf32>
    %602 = vector.extract_strided_slice %594 {offsets = [0, 96], sizes = [8, 32], strides = [1, 1]} : vector<8x128xf32> to vector<8x32xf32>
    %603 = arith.mulf %596, %512 : vector<8x32xf32>
    %604 = arith.mulf %595, %601 : vector<8x32xf32>
    %605 = arith.addf %603, %604 : vector<8x32xf32>
    %606 = math.tanh %605 : vector<8x32xf32>
    %607 = arith.mulf %602, %606 : vector<8x32xf32>
    %cst_263 = arith.constant 4.000000e+00 : f32
    %608 = vector.broadcast %cst_263 : f32 to vector<8x32xf32>
    %609 = arith.cmpf ogt, %19, %608 : vector<8x32xf32>
    %610 = arith.select %609, %607, %511 : vector<8x32xi1>, vector<8x32xf32>
    %611 = arith.select %609, %605, %512 : vector<8x32xi1>, vector<8x32xf32>
    %cst_264 = arith.constant 0.000000e+00 : f32
    %612 = vector.broadcast %cst_264 : f32 to vector<8x32xf32>
    %613 = arith.select %609, %607, %612 : vector<8x32xi1>, vector<8x32xf32>
    %c56 = arith.constant 56 : index
    %c0_265 = arith.constant 0 : index
    %614 = vector.load %arg9[%c56, %c0_265] : memref<64x128xf32, #tpu.memory_space<vmem>>, vector<8x128xf32>
    %c0_266 = arith.constant 0 : index
    %c0_267 = arith.constant 0 : index
    %c0_268 = arith.constant 0 : index
    %615 = vector.load %arg4[%c0_266, %c0_267, %c0_268] : memref<3x32x128xf32, #tpu.memory_space<vmem>>, vector<1x32x128xf32>
    %616 = vector.shape_cast %615 : vector<1x32x128xf32> to vector<32x128xf32>
    %cst_269 = arith.constant dense<0.000000e+00> : vector<8x128xf32>
    %617 = tpu.matmul %540, %616, %cst_269 {dimension_numbers = #tpu.dot_dimension_numbers<[1], [0], [0], [1], [0, 0, 1, 1], [], []>} : vector<8x32xf32>, vector<32x128xf32>, vector<8x128xf32> -> vector<8x128xf32>
    %618 = arith.addf %614, %617 : vector<8x128xf32>
    %619 = arith.negf %618 : vector<8x128xf32>
    %620 = math.exp %619 : vector<8x128xf32>
    %cst_270 = arith.constant 1.000000e+00 : f32
    %621 = vector.broadcast %cst_270 : f32 to vector<8x128xf32>
    %622 = arith.addf %621, %620 : vector<8x128xf32>
    %623 = arith.divf %621, %622 : vector<8x128xf32>
    %624 = vector.extract_strided_slice %623 {offsets = [0, 0], sizes = [8, 32], strides = [1, 1]} : vector<8x128xf32> to vector<8x32xf32>
    %625 = vector.extract_strided_slice %623 {offsets = [0, 32], sizes = [8, 32], strides = [1, 1]} : vector<8x128xf32> to vector<8x32xf32>
    %626 = vector.extract_strided_slice %623 {offsets = [0, 64], sizes = [8, 32], strides = [1, 1]} : vector<8x128xf32> to vector<8x32xf32>
    %cst_271 = arith.constant 2.000000e+00 : f32
    %627 = vector.broadcast %cst_271 : f32 to vector<8x32xf32>
    %628 = arith.mulf %627, %626 : vector<8x32xf32>
    %cst_272 = arith.constant 1.000000e+00 : f32
    %629 = vector.broadcast %cst_272 : f32 to vector<8x32xf32>
    %630 = arith.subf %628, %629 : vector<8x32xf32>
    %631 = vector.extract_strided_slice %623 {offsets = [0, 96], sizes = [8, 32], strides = [1, 1]} : vector<8x128xf32> to vector<8x32xf32>
    %632 = arith.mulf %625, %541 : vector<8x32xf32>
    %633 = arith.mulf %624, %630 : vector<8x32xf32>
    %634 = arith.addf %632, %633 : vector<8x32xf32>
    %635 = math.tanh %634 : vector<8x32xf32>
    %636 = arith.mulf %631, %635 : vector<8x32xf32>
    %cst_273 = arith.constant 7.000000e+00 : f32
    %637 = vector.broadcast %cst_273 : f32 to vector<8x32xf32>
    %638 = arith.cmpf ogt, %19, %637 : vector<8x32xf32>
    %cst_274 = arith.constant 0.000000e+00 : f32
    %639 = vector.broadcast %cst_274 : f32 to vector<8x32xf32>
    %640 = arith.select %638, %636, %639 : vector<8x32xi1>, vector<8x32xf32>
    %c1_275 = arith.constant 1 : index
    %c0_276 = arith.constant 0 : index
    %c0_277 = arith.constant 0 : index
    %641 = vector.load %arg3[%c1_275, %c0_276, %c0_277] : memref<3x32x128xf32, #tpu.memory_space<vmem>>, vector<1x32x128xf32>
    %642 = vector.shape_cast %641 : vector<1x32x128xf32> to vector<32x128xf32>
    %cst_278 = arith.constant dense<0.000000e+00> : vector<8x128xf32>
    %643 = tpu.matmul %543, %642, %cst_278 {dimension_numbers = #tpu.dot_dimension_numbers<[1], [0], [0], [1], [0, 0, 1, 1], [], []>} : vector<8x32xf32>, vector<32x128xf32>, vector<8x128xf32> -> vector<8x128xf32>
    %c1_279 = arith.constant 1 : index
    %c0_280 = arith.constant 0 : index
    %c0_281 = arith.constant 0 : index
    %644 = vector.load %arg5[%c1_279, %c0_280, %c0_281] : memref<3x1x128xf32, #tpu.memory_space<vmem>>, vector<1x1x128xf32>
    %645 = vector.shape_cast %644 : vector<1x1x128xf32> to vector<1x128xf32>
    %646 = vector.broadcast %645 : vector<1x128xf32> to vector<8x128xf32>
    %647 = arith.addf %643, %646 : vector<8x128xf32>
    %c1_282 = arith.constant 1 : index
    %c0_283 = arith.constant 0 : index
    %c0_284 = arith.constant 0 : index
    %648 = vector.load %arg4[%c1_282, %c0_283, %c0_284] : memref<3x32x128xf32, #tpu.memory_space<vmem>>, vector<1x32x128xf32>
    %649 = vector.shape_cast %648 : vector<1x32x128xf32> to vector<32x128xf32>
    %cst_285 = arith.constant dense<0.000000e+00> : vector<8x128xf32>
    %650 = tpu.matmul %575, %649, %cst_285 {dimension_numbers = #tpu.dot_dimension_numbers<[1], [0], [0], [1], [0, 0, 1, 1], [], []>} : vector<8x32xf32>, vector<32x128xf32>, vector<8x128xf32> -> vector<8x128xf32>
    %651 = arith.addf %647, %650 : vector<8x128xf32>
    %652 = arith.negf %651 : vector<8x128xf32>
    %653 = math.exp %652 : vector<8x128xf32>
    %cst_286 = arith.constant 1.000000e+00 : f32
    %654 = vector.broadcast %cst_286 : f32 to vector<8x128xf32>
    %655 = arith.addf %654, %653 : vector<8x128xf32>
    %656 = arith.divf %654, %655 : vector<8x128xf32>
    %657 = vector.extract_strided_slice %656 {offsets = [0, 0], sizes = [8, 32], strides = [1, 1]} : vector<8x128xf32> to vector<8x32xf32>
    %658 = vector.extract_strided_slice %656 {offsets = [0, 32], sizes = [8, 32], strides = [1, 1]} : vector<8x128xf32> to vector<8x32xf32>
    %659 = vector.extract_strided_slice %656 {offsets = [0, 64], sizes = [8, 32], strides = [1, 1]} : vector<8x128xf32> to vector<8x32xf32>
    %cst_287 = arith.constant 2.000000e+00 : f32
    %660 = vector.broadcast %cst_287 : f32 to vector<8x32xf32>
    %661 = arith.mulf %660, %659 : vector<8x32xf32>
    %cst_288 = arith.constant 1.000000e+00 : f32
    %662 = vector.broadcast %cst_288 : f32 to vector<8x32xf32>
    %663 = arith.subf %661, %662 : vector<8x32xf32>
    %664 = vector.extract_strided_slice %656 {offsets = [0, 96], sizes = [8, 32], strides = [1, 1]} : vector<8x128xf32> to vector<8x32xf32>
    %665 = arith.mulf %658, %576 : vector<8x32xf32>
    %666 = arith.mulf %657, %663 : vector<8x32xf32>
    %667 = arith.addf %665, %666 : vector<8x32xf32>
    %668 = math.tanh %667 : vector<8x32xf32>
    %669 = arith.mulf %664, %668 : vector<8x32xf32>
    %cst_289 = arith.constant 6.000000e+00 : f32
    %670 = vector.broadcast %cst_289 : f32 to vector<8x32xf32>
    %671 = arith.cmpf ogt, %19, %670 : vector<8x32xf32>
    %672 = arith.select %671, %669, %575 : vector<8x32xi1>, vector<8x32xf32>
    %673 = arith.select %671, %667, %576 : vector<8x32xi1>, vector<8x32xf32>
    %cst_290 = arith.constant 0.000000e+00 : f32
    %674 = vector.broadcast %cst_290 : f32 to vector<8x32xf32>
    %675 = arith.select %671, %669, %674 : vector<8x32xi1>, vector<8x32xf32>
    %c2_291 = arith.constant 2 : index
    %c0_292 = arith.constant 0 : index
    %c0_293 = arith.constant 0 : index
    %676 = vector.load %arg3[%c2_291, %c0_292, %c0_293] : memref<3x32x128xf32, #tpu.memory_space<vmem>>, vector<1x32x128xf32>
    %677 = vector.shape_cast %676 : vector<1x32x128xf32> to vector<32x128xf32>
    %cst_294 = arith.constant dense<0.000000e+00> : vector<8x128xf32>
    %678 = tpu.matmul %578, %677, %cst_294 {dimension_numbers = #tpu.dot_dimension_numbers<[1], [0], [0], [1], [0, 0, 1, 1], [], []>} : vector<8x32xf32>, vector<32x128xf32>, vector<8x128xf32> -> vector<8x128xf32>
    %c2_295 = arith.constant 2 : index
    %c0_296 = arith.constant 0 : index
    %c0_297 = arith.constant 0 : index
    %679 = vector.load %arg5[%c2_295, %c0_296, %c0_297] : memref<3x1x128xf32, #tpu.memory_space<vmem>>, vector<1x1x128xf32>
    %680 = vector.shape_cast %679 : vector<1x1x128xf32> to vector<1x128xf32>
    %681 = vector.broadcast %680 : vector<1x128xf32> to vector<8x128xf32>
    %682 = arith.addf %678, %681 : vector<8x128xf32>
    %c2_298 = arith.constant 2 : index
    %c0_299 = arith.constant 0 : index
    %c0_300 = arith.constant 0 : index
    %683 = vector.load %arg4[%c2_298, %c0_299, %c0_300] : memref<3x32x128xf32, #tpu.memory_space<vmem>>, vector<1x32x128xf32>
    %684 = vector.shape_cast %683 : vector<1x32x128xf32> to vector<32x128xf32>
    %cst_301 = arith.constant dense<0.000000e+00> : vector<8x128xf32>
    %685 = tpu.matmul %610, %684, %cst_301 {dimension_numbers = #tpu.dot_dimension_numbers<[1], [0], [0], [1], [0, 0, 1, 1], [], []>} : vector<8x32xf32>, vector<32x128xf32>, vector<8x128xf32> -> vector<8x128xf32>
    %686 = arith.addf %682, %685 : vector<8x128xf32>
    %687 = arith.negf %686 : vector<8x128xf32>
    %688 = math.exp %687 : vector<8x128xf32>
    %cst_302 = arith.constant 1.000000e+00 : f32
    %689 = vector.broadcast %cst_302 : f32 to vector<8x128xf32>
    %690 = arith.addf %689, %688 : vector<8x128xf32>
    %691 = arith.divf %689, %690 : vector<8x128xf32>
    %692 = vector.extract_strided_slice %691 {offsets = [0, 0], sizes = [8, 32], strides = [1, 1]} : vector<8x128xf32> to vector<8x32xf32>
    %693 = vector.extract_strided_slice %691 {offsets = [0, 32], sizes = [8, 32], strides = [1, 1]} : vector<8x128xf32> to vector<8x32xf32>
    %694 = vector.extract_strided_slice %691 {offsets = [0, 64], sizes = [8, 32], strides = [1, 1]} : vector<8x128xf32> to vector<8x32xf32>
    %cst_303 = arith.constant 2.000000e+00 : f32
    %695 = vector.broadcast %cst_303 : f32 to vector<8x32xf32>
    %696 = arith.mulf %695, %694 : vector<8x32xf32>
    %cst_304 = arith.constant 1.000000e+00 : f32
    %697 = vector.broadcast %cst_304 : f32 to vector<8x32xf32>
    %698 = arith.subf %696, %697 : vector<8x32xf32>
    %699 = vector.extract_strided_slice %691 {offsets = [0, 96], sizes = [8, 32], strides = [1, 1]} : vector<8x128xf32> to vector<8x32xf32>
    %700 = arith.mulf %693, %611 : vector<8x32xf32>
    %701 = arith.mulf %692, %698 : vector<8x32xf32>
    %702 = arith.addf %700, %701 : vector<8x32xf32>
    %703 = math.tanh %702 : vector<8x32xf32>
    %704 = arith.mulf %699, %703 : vector<8x32xf32>
    %cst_305 = arith.constant 5.000000e+00 : f32
    %705 = vector.broadcast %cst_305 : f32 to vector<8x32xf32>
    %706 = arith.cmpf ogt, %19, %705 : vector<8x32xf32>
    %707 = arith.select %706, %704, %610 : vector<8x32xi1>, vector<8x32xf32>
    %708 = arith.select %706, %702, %611 : vector<8x32xi1>, vector<8x32xf32>
    %cst_306 = arith.constant 0.000000e+00 : f32
    %709 = vector.broadcast %cst_306 : f32 to vector<8x32xf32>
    %710 = arith.select %706, %704, %709 : vector<8x32xi1>, vector<8x32xf32>
    %c1_307 = arith.constant 1 : index
    %c0_308 = arith.constant 0 : index
    %c0_309 = arith.constant 0 : index
    %711 = vector.load %arg3[%c1_307, %c0_308, %c0_309] : memref<3x32x128xf32, #tpu.memory_space<vmem>>, vector<1x32x128xf32>
    %712 = vector.shape_cast %711 : vector<1x32x128xf32> to vector<32x128xf32>
    %cst_310 = arith.constant dense<0.000000e+00> : vector<8x128xf32>
    %713 = tpu.matmul %640, %712, %cst_310 {dimension_numbers = #tpu.dot_dimension_numbers<[1], [0], [0], [1], [0, 0, 1, 1], [], []>} : vector<8x32xf32>, vector<32x128xf32>, vector<8x128xf32> -> vector<8x128xf32>
    %c1_311 = arith.constant 1 : index
    %c0_312 = arith.constant 0 : index
    %c0_313 = arith.constant 0 : index
    %714 = vector.load %arg5[%c1_311, %c0_312, %c0_313] : memref<3x1x128xf32, #tpu.memory_space<vmem>>, vector<1x1x128xf32>
    %715 = vector.shape_cast %714 : vector<1x1x128xf32> to vector<1x128xf32>
    %716 = vector.broadcast %715 : vector<1x128xf32> to vector<8x128xf32>
    %717 = arith.addf %713, %716 : vector<8x128xf32>
    %c1_314 = arith.constant 1 : index
    %c0_315 = arith.constant 0 : index
    %c0_316 = arith.constant 0 : index
    %718 = vector.load %arg4[%c1_314, %c0_315, %c0_316] : memref<3x32x128xf32, #tpu.memory_space<vmem>>, vector<1x32x128xf32>
    %719 = vector.shape_cast %718 : vector<1x32x128xf32> to vector<32x128xf32>
    %cst_317 = arith.constant dense<0.000000e+00> : vector<8x128xf32>
    %720 = tpu.matmul %672, %719, %cst_317 {dimension_numbers = #tpu.dot_dimension_numbers<[1], [0], [0], [1], [0, 0, 1, 1], [], []>} : vector<8x32xf32>, vector<32x128xf32>, vector<8x128xf32> -> vector<8x128xf32>
    %721 = arith.addf %717, %720 : vector<8x128xf32>
    %722 = arith.negf %721 : vector<8x128xf32>
    %723 = math.exp %722 : vector<8x128xf32>
    %cst_318 = arith.constant 1.000000e+00 : f32
    %724 = vector.broadcast %cst_318 : f32 to vector<8x128xf32>
    %725 = arith.addf %724, %723 : vector<8x128xf32>
    %726 = arith.divf %724, %725 : vector<8x128xf32>
    %727 = vector.extract_strided_slice %726 {offsets = [0, 0], sizes = [8, 32], strides = [1, 1]} : vector<8x128xf32> to vector<8x32xf32>
    %728 = vector.extract_strided_slice %726 {offsets = [0, 32], sizes = [8, 32], strides = [1, 1]} : vector<8x128xf32> to vector<8x32xf32>
    %729 = vector.extract_strided_slice %726 {offsets = [0, 64], sizes = [8, 32], strides = [1, 1]} : vector<8x128xf32> to vector<8x32xf32>
    %cst_319 = arith.constant 2.000000e+00 : f32
    %730 = vector.broadcast %cst_319 : f32 to vector<8x32xf32>
    %731 = arith.mulf %730, %729 : vector<8x32xf32>
    %cst_320 = arith.constant 1.000000e+00 : f32
    %732 = vector.broadcast %cst_320 : f32 to vector<8x32xf32>
    %733 = arith.subf %731, %732 : vector<8x32xf32>
    %734 = vector.extract_strided_slice %726 {offsets = [0, 96], sizes = [8, 32], strides = [1, 1]} : vector<8x128xf32> to vector<8x32xf32>
    %735 = arith.mulf %728, %673 : vector<8x32xf32>
    %736 = arith.mulf %727, %733 : vector<8x32xf32>
    %737 = arith.addf %735, %736 : vector<8x32xf32>
    %738 = math.tanh %737 : vector<8x32xf32>
    %739 = arith.mulf %734, %738 : vector<8x32xf32>
    %cst_321 = arith.constant 7.000000e+00 : f32
    %740 = vector.broadcast %cst_321 : f32 to vector<8x32xf32>
    %741 = arith.cmpf ogt, %19, %740 : vector<8x32xf32>
    %cst_322 = arith.constant 0.000000e+00 : f32
    %742 = vector.broadcast %cst_322 : f32 to vector<8x32xf32>
    %743 = arith.select %741, %739, %742 : vector<8x32xi1>, vector<8x32xf32>
    %c2_323 = arith.constant 2 : index
    %c0_324 = arith.constant 0 : index
    %c0_325 = arith.constant 0 : index
    %744 = vector.load %arg3[%c2_323, %c0_324, %c0_325] : memref<3x32x128xf32, #tpu.memory_space<vmem>>, vector<1x32x128xf32>
    %745 = vector.shape_cast %744 : vector<1x32x128xf32> to vector<32x128xf32>
    %cst_326 = arith.constant dense<0.000000e+00> : vector<8x128xf32>
    %746 = tpu.matmul %675, %745, %cst_326 {dimension_numbers = #tpu.dot_dimension_numbers<[1], [0], [0], [1], [0, 0, 1, 1], [], []>} : vector<8x32xf32>, vector<32x128xf32>, vector<8x128xf32> -> vector<8x128xf32>
    %c2_327 = arith.constant 2 : index
    %c0_328 = arith.constant 0 : index
    %c0_329 = arith.constant 0 : index
    %747 = vector.load %arg5[%c2_327, %c0_328, %c0_329] : memref<3x1x128xf32, #tpu.memory_space<vmem>>, vector<1x1x128xf32>
    %748 = vector.shape_cast %747 : vector<1x1x128xf32> to vector<1x128xf32>
    %749 = vector.broadcast %748 : vector<1x128xf32> to vector<8x128xf32>
    %750 = arith.addf %746, %749 : vector<8x128xf32>
    %c2_330 = arith.constant 2 : index
    %c0_331 = arith.constant 0 : index
    %c0_332 = arith.constant 0 : index
    %751 = vector.load %arg4[%c2_330, %c0_331, %c0_332] : memref<3x32x128xf32, #tpu.memory_space<vmem>>, vector<1x32x128xf32>
    %752 = vector.shape_cast %751 : vector<1x32x128xf32> to vector<32x128xf32>
    %cst_333 = arith.constant dense<0.000000e+00> : vector<8x128xf32>
    %753 = tpu.matmul %707, %752, %cst_333 {dimension_numbers = #tpu.dot_dimension_numbers<[1], [0], [0], [1], [0, 0, 1, 1], [], []>} : vector<8x32xf32>, vector<32x128xf32>, vector<8x128xf32> -> vector<8x128xf32>
    %754 = arith.addf %750, %753 : vector<8x128xf32>
    %755 = arith.negf %754 : vector<8x128xf32>
    %756 = math.exp %755 : vector<8x128xf32>
    %cst_334 = arith.constant 1.000000e+00 : f32
    %757 = vector.broadcast %cst_334 : f32 to vector<8x128xf32>
    %758 = arith.addf %757, %756 : vector<8x128xf32>
    %759 = arith.divf %757, %758 : vector<8x128xf32>
    %760 = vector.extract_strided_slice %759 {offsets = [0, 0], sizes = [8, 32], strides = [1, 1]} : vector<8x128xf32> to vector<8x32xf32>
    %761 = vector.extract_strided_slice %759 {offsets = [0, 32], sizes = [8, 32], strides = [1, 1]} : vector<8x128xf32> to vector<8x32xf32>
    %762 = vector.extract_strided_slice %759 {offsets = [0, 64], sizes = [8, 32], strides = [1, 1]} : vector<8x128xf32> to vector<8x32xf32>
    %cst_335 = arith.constant 2.000000e+00 : f32
    %763 = vector.broadcast %cst_335 : f32 to vector<8x32xf32>
    %764 = arith.mulf %763, %762 : vector<8x32xf32>
    %cst_336 = arith.constant 1.000000e+00 : f32
    %765 = vector.broadcast %cst_336 : f32 to vector<8x32xf32>
    %766 = arith.subf %764, %765 : vector<8x32xf32>
    %767 = vector.extract_strided_slice %759 {offsets = [0, 96], sizes = [8, 32], strides = [1, 1]} : vector<8x128xf32> to vector<8x32xf32>
    %768 = arith.mulf %761, %708 : vector<8x32xf32>
    %769 = arith.mulf %760, %766 : vector<8x32xf32>
    %770 = arith.addf %768, %769 : vector<8x32xf32>
    %771 = math.tanh %770 : vector<8x32xf32>
    %772 = arith.mulf %767, %771 : vector<8x32xf32>
    %cst_337 = arith.constant 6.000000e+00 : f32
    %773 = vector.broadcast %cst_337 : f32 to vector<8x32xf32>
    %774 = arith.cmpf ogt, %19, %773 : vector<8x32xf32>
    %775 = arith.select %774, %772, %707 : vector<8x32xi1>, vector<8x32xf32>
    %776 = arith.select %774, %770, %708 : vector<8x32xi1>, vector<8x32xf32>
    %cst_338 = arith.constant 0.000000e+00 : f32
    %777 = vector.broadcast %cst_338 : f32 to vector<8x32xf32>
    %778 = arith.select %774, %772, %777 : vector<8x32xi1>, vector<8x32xf32>
    %c2_339 = arith.constant 2 : index
    %c0_340 = arith.constant 0 : index
    %c0_341 = arith.constant 0 : index
    %779 = vector.load %arg3[%c2_339, %c0_340, %c0_341] : memref<3x32x128xf32, #tpu.memory_space<vmem>>, vector<1x32x128xf32>
    %780 = vector.shape_cast %779 : vector<1x32x128xf32> to vector<32x128xf32>
    %cst_342 = arith.constant dense<0.000000e+00> : vector<8x128xf32>
    %781 = tpu.matmul %743, %780, %cst_342 {dimension_numbers = #tpu.dot_dimension_numbers<[1], [0], [0], [1], [0, 0, 1, 1], [], []>} : vector<8x32xf32>, vector<32x128xf32>, vector<8x128xf32> -> vector<8x128xf32>
    %c2_343 = arith.constant 2 : index
    %c0_344 = arith.constant 0 : index
    %c0_345 = arith.constant 0 : index
    %782 = vector.load %arg5[%c2_343, %c0_344, %c0_345] : memref<3x1x128xf32, #tpu.memory_space<vmem>>, vector<1x1x128xf32>
    %783 = vector.shape_cast %782 : vector<1x1x128xf32> to vector<1x128xf32>
    %784 = vector.broadcast %783 : vector<1x128xf32> to vector<8x128xf32>
    %785 = arith.addf %781, %784 : vector<8x128xf32>
    %c2_346 = arith.constant 2 : index
    %c0_347 = arith.constant 0 : index
    %c0_348 = arith.constant 0 : index
    %786 = vector.load %arg4[%c2_346, %c0_347, %c0_348] : memref<3x32x128xf32, #tpu.memory_space<vmem>>, vector<1x32x128xf32>
    %787 = vector.shape_cast %786 : vector<1x32x128xf32> to vector<32x128xf32>
    %cst_349 = arith.constant dense<0.000000e+00> : vector<8x128xf32>
    %788 = tpu.matmul %775, %787, %cst_349 {dimension_numbers = #tpu.dot_dimension_numbers<[1], [0], [0], [1], [0, 0, 1, 1], [], []>} : vector<8x32xf32>, vector<32x128xf32>, vector<8x128xf32> -> vector<8x128xf32>
    %789 = arith.addf %785, %788 : vector<8x128xf32>
    %790 = arith.negf %789 : vector<8x128xf32>
    %791 = math.exp %790 : vector<8x128xf32>
    %cst_350 = arith.constant 1.000000e+00 : f32
    %792 = vector.broadcast %cst_350 : f32 to vector<8x128xf32>
    %793 = arith.addf %792, %791 : vector<8x128xf32>
    %794 = arith.divf %792, %793 : vector<8x128xf32>
    %795 = vector.extract_strided_slice %794 {offsets = [0, 0], sizes = [8, 32], strides = [1, 1]} : vector<8x128xf32> to vector<8x32xf32>
    %796 = vector.extract_strided_slice %794 {offsets = [0, 32], sizes = [8, 32], strides = [1, 1]} : vector<8x128xf32> to vector<8x32xf32>
    %797 = vector.extract_strided_slice %794 {offsets = [0, 64], sizes = [8, 32], strides = [1, 1]} : vector<8x128xf32> to vector<8x32xf32>
    %cst_351 = arith.constant 2.000000e+00 : f32
    %798 = vector.broadcast %cst_351 : f32 to vector<8x32xf32>
    %799 = arith.mulf %798, %797 : vector<8x32xf32>
    %cst_352 = arith.constant 1.000000e+00 : f32
    %800 = vector.broadcast %cst_352 : f32 to vector<8x32xf32>
    %801 = arith.subf %799, %800 : vector<8x32xf32>
    %802 = vector.extract_strided_slice %794 {offsets = [0, 96], sizes = [8, 32], strides = [1, 1]} : vector<8x128xf32> to vector<8x32xf32>
    %803 = arith.mulf %796, %776 : vector<8x32xf32>
    %804 = arith.mulf %795, %801 : vector<8x32xf32>
    %805 = arith.addf %803, %804 : vector<8x32xf32>
    %806 = math.tanh %805 : vector<8x32xf32>
    %807 = arith.mulf %802, %806 : vector<8x32xf32>
    %cst_353 = arith.constant 7.000000e+00 : f32
    %808 = vector.broadcast %cst_353 : f32 to vector<8x32xf32>
    %809 = arith.cmpf ogt, %19, %808 : vector<8x32xf32>
    %cst_354 = arith.constant 0.000000e+00 : f32
    %810 = vector.broadcast %cst_354 : f32 to vector<8x32xf32>
    %811 = arith.select %809, %807, %810 : vector<8x32xi1>, vector<8x32xf32>
    %812 = tpu.concatenate %217, %316, %415, %514, %613, %710, %778, %811 in 0 : vector<8x32xf32>, vector<8x32xf32>, vector<8x32xf32>, vector<8x32xf32>, vector<8x32xf32>, vector<8x32xf32>, vector<8x32xf32>, vector<8x32xf32> -> vector<64x32xf32>
    %c0_355 = arith.constant 0 : index
    %c0_356 = arith.constant 0 : index
    %813 = vector.load %arg6[%c0_355, %c0_356] : memref<32x128xf32, #tpu.memory_space<vmem>>, vector<32x128xf32>
    %cst_357 = arith.constant dense<0.000000e+00> : vector<64x128xf32>
    %814 = tpu.matmul %812, %813, %cst_357 {dimension_numbers = #tpu.dot_dimension_numbers<[1], [0], [0], [1], [0, 0, 1, 1], [], []>} : vector<64x32xf32>, vector<32x128xf32>, vector<64x128xf32> -> vector<64x128xf32>
    %c0_358 = arith.constant 0 : index
    %c0_359 = arith.constant 0 : index
    %815 = vector.load %arg7[%c0_358, %c0_359] : memref<1x128xf32, #tpu.memory_space<vmem>>, vector<1x128xf32>
    %816 = vector.broadcast %815 : vector<1x128xf32> to vector<64x128xf32>
    %817 = arith.addf %814, %816 : vector<64x128xf32>
    %c0_360 = arith.constant 0 : index
    %c0_361 = arith.constant 0 : index
    %818 = vector.load %arg8[%c0_360, %c0_361] : memref<64x128xf32, #tpu.memory_space<vmem>>, vector<64x128xf32>
    tpu.vector_store %arg8[%c0_360, %c0_361], %817 {strides = array<i32>} : memref<64x128xf32, #tpu.memory_space<vmem>>, vector<64x128xf32>,
    return
  }
}

</mosaic_0001>

<llo_original>
// kernel: lstm_net_g_forward.1
$region0: #{lstm_net_g_forward.1}
  #allocation0 [shape = 'u32[]', space=smem, size = 0x4, offset = 0x4, fixed_abs, tag = 'smem constant byte address 0x4 - core index']
  #allocation1 [shape = 'u32[144,128]{1,0:T(1,128)}', space=vmem, size = 0x12000, scoped, tag = 'internal scratch']
  #allocation2 [shape = 'f32[64,128]{1,0:T(8,128)}', space=vmem, size = 0x8000, scoped, tag = 'scratch operand']
  %s0 = inlined_call_operand.vmem [shape: s32[64,1], index: 0, kind: input, shape index: {}]
  %s1 = inlined_call_operand.vmem [shape: f32[8,1], index: 1, kind: input, shape index: {}]
  %s2 = inlined_call_operand.hbm [shape: f32[16,32], index: 2, kind: input, shape index: {}]
  %s3 = inlined_call_operand.vmem [shape: f32[3,32,128], index: 3, kind: input, shape index: {}]
  %s4 = inlined_call_operand.hbm [shape: f32[3,32,128], index: 4, kind: input, shape index: {}]
  %s5 = inlined_call_operand.vmem [shape: f32[3,1,128], index: 5, kind: input, shape index: {}]
  %s6 = inlined_call_operand.vmem [shape: f32[32,128], index: 6, kind: input, shape index: {}]
  %s7 = inlined_call_operand.vmem [shape: f32[1,128], index: 7, kind: input, shape index: {}]
  %s8 = inlined_call_operand.vmem [shape: f32[64,128], index: 8, kind: output, shape index: {}]
  %s9 = sld [smem:[#allocation0]]
  $region50: #{lstm_net_g_forward.1} parent=0
    _
  %s11 = ssub.s32 1, %s9
  %s12 = scalar_select 0, %s11, %s9
  $region1: #{lstm_net_g_forward.1} parent=0
    #allocation3 [shape = 'u8[8192]{0}', space=vmem, size = 0x2000, scoped, tag = 'input window, operand 2, single buffered']
    #allocation4 [shape = 's32[1]{0}', space=sflag, size = 0x4, scoped, tag = 'scoped memory for lstm_net_g_forward.1']
    #allocation5 [shape = 'u8[49152]{0}', space=vmem, size = 0xc000, scoped, tag = 'input window, operand 4, single buffered']
    #allocation6 [shape = 's32[1]{0}', space=sflag, size = 0x4, scoped, tag = 'scoped memory for lstm_net_g_forward.1']
    %13 = vsyncpa [#allocation4], 0
    %14 = vsyncpa [#allocation6], 0
    // Predicated region
    $region2: #{lstm_net_g_forward.1} parent=1 // pred_check
      _
    $region3: #{lstm_net_g_forward.1} parent=1 // pred_check_branch
      %16 = sbr.rel (0) target = $region5
    $region4: #{lstm_net_g_forward.1} parent=1 // pred_region
      _
    $region5: #{lstm_net_g_forward.1} parent=1 // pred_fallthru
      _
    // Predicated region
    $region6: #{lstm_net_g_forward.1} parent=1 // pred_check
      _
    $region7: #{lstm_net_g_forward.1} parent=1 // pred_check_branch
      %18 = sbr.rel (0) target = $region9
    $region8: #{lstm_net_g_forward.1} parent=1 // pred_region
      _
    $region9: #{lstm_net_g_forward.1} parent=1 // pred_fallthru
      _
    // Predicated region
    $region10: #{lstm_net_g_forward.1} parent=1 // pred_check
      _
    $region11: #{lstm_net_g_forward.1} parent=1 // pred_check_branch
      %20 = sbr.rel (0) target = $region13
    $region12: #{lstm_net_g_forward.1} parent=1 // pred_region
      %s22 = ssub.s32 256, 256
      %23 = vsyncadd [#allocation4], %s22
      %s24 = sshll.u32 [#allocation3], 4
      %s25 = int_to_ptr.vmem [resolvable:$true] %s24
      %30 = dma.hbm_to_vmem [thread:$0]  %s2, 256, %s25, [#allocation4], 128, 128, 8
    $region13: #{lstm_net_g_forward.1} parent=1 // pred_fallthru
      _
    // Predicated region
    $region14: #{lstm_net_g_forward.1} parent=1 // pred_check
      _
    $region15: #{lstm_net_g_forward.1} parent=1 // pred_check_branch
      %32 = sbr.rel (0) target = $region17
    $region16: #{lstm_net_g_forward.1} parent=1 // pred_region
      _
    $region17: #{lstm_net_g_forward.1} parent=1 // pred_fallthru
      _
    // Predicated region
    $region18: #{lstm_net_g_forward.1} parent=1 // pred_check
      _
    $region19: #{lstm_net_g_forward.1} parent=1 // pred_check_branch
      %34 = sbr.rel (0) target = $region21
    $region20: #{lstm_net_g_forward.1} parent=1 // pred_region
      %s36 = ssub.s32 1536, 1536
      %37 = vsyncadd [#allocation6], %s36
      %s38 = sshll.u32 [#allocation5], 4
      %s39 = int_to_ptr.vmem [resolvable:$true] %s38
      %44 = dma.hbm_to_vmem [thread:$0]  %s4, 1536, %s39, [#allocation6], 128, 128, 8
    $region21: #{lstm_net_g_forward.1} parent=1 // pred_fallthru
      _
    // Predicated region
    $region22: #{lstm_net_g_forward.1} parent=1 // pred_check
      _
    $region23: #{lstm_net_g_forward.1} parent=1 // pred_check_branch
      %46 = sbr.rel (0) target = $region25
    $region24: #{lstm_net_g_forward.1} parent=1 // pred_region
      _
    $region25: #{lstm_net_g_forward.1} parent=1 // pred_fallthru
      _
    // Predicated region
    $region26: #{lstm_net_g_forward.1} parent=1 // pred_check
      _
    $region27: #{lstm_net_g_forward.1} parent=1 // pred_check_branch
      %48 = sbr.rel (0) target = $region29
    $region28: #{lstm_net_g_forward.1} parent=1 // pred_region
      _
    $region29: #{lstm_net_g_forward.1} parent=1 // pred_fallthru
      _
    // Predicated region
    $region30: #{lstm_net_g_forward.1} parent=1 // pred_check
      _
    $region31: #{lstm_net_g_forward.1} parent=1 // pred_check_branch
      %50 = sbr.rel (0) target = $region33
    $region32: #{lstm_net_g_forward.1} parent=1 // pred_region
      _
    $region33: #{lstm_net_g_forward.1} parent=1 // pred_fallthru
      _
    // Predicated region
    $region34: #{lstm_net_g_forward.1} parent=1 // pred_check
      _
    $region35: #{lstm_net_g_forward.1} parent=1 // pred_check_branch
      %52 = sbr.rel (0) target = $region37
    $region36: #{lstm_net_g_forward.1} parent=1 // pred_region
      %53 = dma.done [#allocation4], 256
    $region37: #{lstm_net_g_forward.1} parent=1 // pred_fallthru
      _
    // Predicated region
    $region38: #{lstm_net_g_forward.1} parent=1 // pred_check
      _
    $region39: #{lstm_net_g_forward.1} parent=1 // pred_check_branch
      %55 = sbr.rel (0) target = $region41
    $region40: #{lstm_net_g_forward.1} parent=1 // pred_region
      %56 = dma.done [#allocation6], 1536
    $region41: #{lstm_net_g_forward.1} parent=1 // pred_fallthru
      _
    %v57 = vld [vmem:[%s0] sm:$0xff]
    %v58 = vld [vmem:[%s0 + $0x8] sm:$0xff]
    %v59 = vld [vmem:[%s0 + $0x10] sm:$0xff]
    %v60 = vld [vmem:[%s0 + $0x18] sm:$0xff]
    %v61 = vld [vmem:[%s0 + $0x20] sm:$0xff]
    %v62 = vld [vmem:[%s0 + $0x28] sm:$0xff]
    %v63 = vld [vmem:[%s0 + $0x30] sm:$0xff]
    %v64 = vld [vmem:[%s0 + $0x38] sm:$0xff]
    %v65 = vlaneseq
    %v66 = vand.u32 %v65, 127
    %67 = vset.pattern.permute.xlu0 0
    %68 = vperm.xlu0 %67, %v57
    %v69 = vpop.permute.xlu0 %68
    %70 = vset.pattern.permute.xlu0 0
    %71 = vperm.xlu0 %70, %v58
    %v72 = vpop.permute.xlu0 %71
    %73 = vset.pattern.permute.xlu0 0
    %74 = vperm.xlu0 %73, %v59
    %v75 = vpop.permute.xlu0 %74
    %76 = vset.pattern.permute.xlu0 0
    %77 = vperm.xlu0 %76, %v60
    %v78 = vpop.permute.xlu0 %77
    %79 = vset.pattern.permute.xlu0 0
    %80 = vperm.xlu0 %79, %v61
    %v81 = vpop.permute.xlu0 %80
    %82 = vset.pattern.permute.xlu0 0
    %83 = vperm.xlu0 %82, %v62
    %v84 = vpop.permute.xlu0 %83
    %85 = vset.pattern.permute.xlu0 0
    %86 = vperm.xlu0 %85, %v63
    %v87 = vpop.permute.xlu0 %86
    %88 = vset.pattern.permute.xlu0 0
    %89 = vperm.xlu0 %88, %v64
    %v90 = vpop.permute.xlu0 %89
    %vm91 = vcmp.eq.s32.totalorder %v66, %v69
    %vm92 = vcmp.eq.s32.totalorder %v66, %v72
    %vm93 = vcmp.eq.s32.totalorder %v66, %v75
    %vm94 = vcmp.eq.s32.totalorder %v66, %v78
    %vm95 = vcmp.eq.s32.totalorder %v66, %v81
    %vm96 = vcmp.eq.s32.totalorder %v66, %v84
    %vm97 = vcmp.eq.s32.totalorder %v66, %v87
    %vm98 = vcmp.eq.s32.totalorder %v66, %v90
    %v99 = vsel %vm91, 1, 0
    %v100 = vsel %vm92, 1, 0
    %v101 = vsel %vm93, 1, 0
    %v102 = vsel %vm94, 1, 0
    %v103 = vsel %vm95, 1, 0
    %v104 = vsel %vm96, 1, 0
    %v105 = vsel %vm97, 1, 0
    %v106 = vsel %vm98, 1, 0
    %v107 = vcvt.s32.f32 %v99
    %v108 = vcvt.s32.f32 %v100
    %v109 = vcvt.s32.f32 %v101
    %v110 = vcvt.s32.f32 %v102
    %v111 = vcvt.s32.f32 %v103
    %v112 = vcvt.s32.f32 %v104
    %v113 = vcvt.s32.f32 %v105
    %v114 = vcvt.s32.f32 %v106
    %v115 = vld [vmem:[#allocation3] sm:$0xff]
    %v116 = vld [vmem:[#allocation3 + $0x8] sm:$0xff]
    %vm117 = vcmask 130048
    %v119 = vsel %vm117, %v107, 0
    %v122 = vsel %vm117, %v108, 0
    %v125 = vsel %vm117, %v109, 0
    %v128 = vsel %vm117, %v110, 0
    %v131 = vsel %vm117, %v111, 0
    %v134 = vsel %vm117, %v112, 0
    %v137 = vsel %vm117, %v113, 0
    %v140 = vsel %vm117, %v114, 0
    %142 = vmatprep.subr.mxu0 0.0
    %143 = vmatpush1.msra.mxu0 0.0
    %144 = vmatprep.subr.mxu0 0.0
    %145 = vmatpush1.msra.mxu0 0.0
    %146 = vmatprep.subr.mxu0 0.0
    %147 = vmatpush1.msra.mxu0 0.0
    %148 = vmatprep.subr.mxu0 0.0
    %149 = vmatpush1.msra.mxu0 0.0
    %150 = vmatprep.subr.mxu0 0.0
    %151 = vmatpush1.msra.mxu0 0.0
    %152 = vmatprep.subr.mxu0 0.0
    %153 = vmatpush1.msra.mxu0 0.0
    %154 = vmatprep.subr.mxu0 0.0
    %155 = vmatpush1.msra.mxu0 0.0
    %156 = vmatprep.subr.mxu0 0.0
    %157 = vmatpush1.msra.mxu0 0.0
    %158 = vmatprep.subr.mxu0 0.0
    %159 = vmatpush1.msra.mxu0 0.0
    %160 = vmatprep.subr.mxu0 0.0
    %161 = vmatpush1.msra.mxu0 0.0
    %162 = vmatprep.subr.mxu0 0.0
    %163 = vmatpush1.msra.mxu0 0.0
    %164 = vmatprep.subr.mxu0 0.0
    %165 = vmatpush1.msra.mxu0 0.0
    %166 = vmatprep.subr.mxu0 0.0
    %167 = vmatpush1.msra.mxu0 0.0
    %168 = vmatprep.subr.mxu0 0.0
    %169 = vmatpush1.msra.mxu0 0.0
    %170 = vmatprep.subr.mxu0 0.0
    %171 = vmatpush1.msra.mxu0 %v116
    %172 = vmatprep.subr.mxu0 0.0
    %173 = vmatpush1.msra.mxu0 %v115
    %174 = vmatprep.subr.mxu0 0.0
    %175 = vmatpush2.msra.mxu0 0.0
    %176 = vmatprep.subr.mxu0 0.0
    %177 = vmatpush2.msra.mxu0 0.0
    %178 = vmatprep.subr.mxu0 0.0
    %179 = vmatpush2.msra.mxu0 0.0
    %180 = vmatprep.subr.mxu0 0.0
    %181 = vmatpush2.msra.mxu0 0.0
    %182 = vmatprep.subr.mxu0 0.0
    %183 = vmatpush2.msra.mxu0 0.0
    %184 = vmatprep.subr.mxu0 0.0
    %185 = vmatpush2.msra.mxu0 0.0
    %186 = vmatprep.subr.mxu0 0.0
    %187 = vmatpush2.msra.mxu0 0.0
    %188 = vmatprep.subr.mxu0 0.0
    %189 = vmatpush2.msra.mxu0 0.0
    %190 = vmatprep.subr.mxu0 0.0
    %191 = vmatpush2.msra.mxu0 0.0
    %192 = vmatprep.subr.mxu0 0.0
    %193 = vmatpush2.msra.mxu0 0.0
    %194 = vmatprep.subr.mxu0 0.0
    %195 = vmatpush2.msra.mxu0 0.0
    %196 = vmatprep.subr.mxu0 0.0
    %197 = vmatpush2.msra.mxu0 0.0
    %198 = vmatprep.subr.mxu0 0.0
    %199 = vmatpush2.msra.mxu0 0.0
    %200 = vmatprep.subr.mxu0 0.0
    %201 = vmatpush2.msra.mxu0 0.0
    %202 = vmatprep.subr.mxu0 0.0
    %203 = vmatpush2.msra.mxu0 0.0
    %204 = vmatprep.subr.mxu0 0.0
    %205 = vmatpush2.msra.mxu0 0.0
    %206 = vmatprep.mubr.f32.mxu0 0.0
    %207 = vmatmul.mubr.f32.gmra.mxu0 %v119
    %v208 = vpop.f32.mrf.mxu0
    %v209 = vadd.f32 0.0, %v208
    %v210 = vpop.f32.mrf.mxu0
    %211 = vmatprep.mubr.f32.mxu0 0.0
    %212 = vmatmul.mubr.f32.gmra.mxu0 %v122
    %v213 = vpop.f32.mrf.mxu0
    %v214 = vadd.f32 0.0, %v213
    %v215 = vpop.f32.mrf.mxu0
    %216 = vmatprep.mubr.f32.mxu0 0.0
    %217 = vmatmul.mubr.f32.gmra.mxu0 %v125
    %v218 = vpop.f32.mrf.mxu0
    %v219 = vadd.f32 0.0, %v218
    %v220 = vpop.f32.mrf.mxu0
    %221 = vmatprep.mubr.f32.mxu0 0.0
    %222 = vmatmul.mubr.f32.gmra.mxu0 %v128
    %v223 = vpop.f32.mrf.mxu0
    %v224 = vadd.f32 0.0, %v223
    %v225 = vpop.f32.mrf.mxu0
    %226 = vmatprep.mubr.f32.mxu0 0.0
    %227 = vmatmul.mubr.f32.gmra.mxu0 %v131
    %v228 = vpop.f32.mrf.mxu0
    %v229 = vadd.f32 0.0, %v228
    %v230 = vpop.f32.mrf.mxu0
    %231 = vmatprep.mubr.f32.mxu0 0.0
    %232 = vmatmul.mubr.f32.gmra.mxu0 %v134
    %v233 = vpop.f32.mrf.mxu0
    %v234 = vadd.f32 0.0, %v233
    %v235 = vpop.f32.mrf.mxu0
    %236 = vmatprep.mubr.f32.mxu0 0.0
    %237 = vmatmul.mubr.f32.gmra.mxu0 %v137
    %v238 = vpop.f32.mrf.mxu0
    %v239 = vadd.f32 0.0, %v238
    %v240 = vpop.f32.mrf.mxu0
    %241 = vmatprep.mubr.f32.mxu0 0.0
    %242 = vmatmul.mubr.f32.gmra.mxu0 %v140
    %v243 = vpop.f32.mrf.mxu0
    %v244 = vadd.f32 0.0, %v243
    %v245 = vpop.f32.mrf.mxu0
    %246 = vdwg.mxu0
    %v247 = vld [vmem:[%s3] sm:$0xff]
    %v248 = vld [vmem:[%s3 + $0x8] sm:$0xff]
    %v249 = vld [vmem:[%s3 + $0x10] sm:$0xff]
    %v250 = vld [vmem:[%s3 + $0x18] sm:$0xff]
    %v251 = vld [vmem:[%s5] sm:$0x1]
    %v253 = vlaneseq
    %v254 = vshrl.u32 %v253, 7
    %v255 = vsub.s32 0, %v254
    %v256 = vrot.slane %v251, %v255
    %vm258 = vcmask 261120
    %v260 = vsel %vm258, %v209, 0
    %v263 = vsel %vm258, %v214, 0
    %v266 = vsel %vm258, %v219, 0
    %v269 = vsel %vm258, %v224, 0
    %v272 = vsel %vm258, %v229, 0
    %v275 = vsel %vm258, %v234, 0
    %v278 = vsel %vm258, %v239, 0
    %v281 = vsel %vm258, %v244, 0
    %283 = vmatprep.subr.mxu0 0.0
    %284 = vmatpush1.msra.mxu0 0.0
    %285 = vmatprep.subr.mxu0 0.0
    %286 = vmatpush1.msra.mxu0 0.0
    %287 = vmatprep.subr.mxu0 0.0
    %288 = vmatpush1.msra.mxu0 0.0
    %289 = vmatprep.subr.mxu0 0.0
    %290 = vmatpush1.msra.mxu0 0.0
    %291 = vmatprep.subr.mxu0 0.0
    %292 = vmatpush1.msra.mxu0 0.0
    %293 = vmatprep.subr.mxu0 0.0
    %294 = vmatpush1.msra.mxu0 0.0
    %295 = vmatprep.subr.mxu0 0.0
    %296 = vmatpush1.msra.mxu0 0.0
    %297 = vmatprep.subr.mxu0 0.0
    %298 = vmatpush1.msra.mxu0 0.0
    %299 = vmatprep.subr.mxu0 0.0
    %300 = vmatpush1.msra.mxu0 0.0
    %301 = vmatprep.subr.mxu0 0.0
    %302 = vmatpush1.msra.mxu0 0.0
    %303 = vmatprep.subr.mxu0 0.0
    %304 = vmatpush1.msra.mxu0 0.0
    %305 = vmatprep.subr.mxu0 0.0
    %306 = vmatpush1.msra.mxu0 0.0
    %307 = vmatprep.subr.mxu0 0.0
    %308 = vmatpush1.msra.mxu0 %v250
    %309 = vmatprep.subr.mxu0 0.0
    %310 = vmatpush1.msra.mxu0 %v249
    %311 = vmatprep.subr.mxu0 0.0
    %312 = vmatpush1.msra.mxu0 %v248
    %313 = vmatprep.subr.mxu0 0.0
    %314 = vmatpush1.msra.mxu0 %v247
    %315 = vmatprep.subr.mxu0 0.0
    %316 = vmatpush2.msra.mxu0 0.0
    %317 = vmatprep.subr.mxu0 0.0
    %318 = vmatpush2.msra.mxu0 0.0
    %319 = vmatprep.subr.mxu0 0.0
    %320 = vmatpush2.msra.mxu0 0.0
    %321 = vmatprep.subr.mxu0 0.0
    %322 = vmatpush2.msra.mxu0 0.0
    %323 = vmatprep.subr.mxu0 0.0
    %324 = vmatpush2.msra.mxu0 0.0
    %325 = vmatprep.subr.mxu0 0.0
    %326 = vmatpush2.msra.mxu0 0.0
    %327 = vmatprep.subr.mxu0 0.0
    %328 = vmatpush2.msra.mxu0 0.0
    %329 = vmatprep.subr.mxu0 0.0
    %330 = vmatpush2.msra.mxu0 0.0
    %331 = vmatprep.subr.mxu0 0.0
    %332 = vmatpush2.msra.mxu0 0.0
    %333 = vmatprep.subr.mxu0 0.0
    %334 = vmatpush2.msra.mxu0 0.0
    %335 = vmatprep.subr.mxu0 0.0
    %336 = vmatpush2.msra.mxu0 0.0
    %337 = vmatprep.subr.mxu0 0.0
    %338 = vmatpush2.msra.mxu0 0.0
    %339 = vmatprep.subr.mxu0 0.0
    %340 = vmatpush2.msra.mxu0 0.0
    %341 = vmatprep.subr.mxu0 0.0
    %342 = vmatpush2.msra.mxu0 0.0
    %343 = vmatprep.subr.mxu0 0.0
    %344 = vmatpush2.msra.mxu0 0.0
    %345 = vmatprep.subr.mxu0 0.0
    %346 = vmatpush2.msra.mxu0 0.0
    %347 = vmatprep.mubr.f32.mxu0 0.0
    %348 = vmatmul.mubr.f32.gmra.mxu0 %v260
    %v349 = vpop.f32.mrf.mxu0
    %v350 = vadd.f32 %v256, %v349
    %v351 = vpop.f32.mrf.mxu0
    %352 = vmatprep.mubr.f32.mxu0 0.0
    %353 = vmatmul.mubr.f32.gmra.mxu0 %v263
    %v354 = vpop.f32.mrf.mxu0
    %v355 = vadd.f32 %v256, %v354
    %v356 = vpop.f32.mrf.mxu0
    %357 = vmatprep.mubr.f32.mxu0 0.0
    %358 = vmatmul.mubr.f32.gmra.mxu0 %v266
    %v359 = vpop.f32.mrf.mxu0
    %v360 = vadd.f32 %v256, %v359
    %v361 = vpop.f32.mrf.mxu0
    %362 = vmatprep.mubr.f32.mxu0 0.0
    %363 = vmatmul.mubr.f32.gmra.mxu0 %v269
    %v364 = vpop.f32.mrf.mxu0
    %v365 = vadd.f32 %v256, %v364
    %v366 = vpop.f32.mrf.mxu0
    %367 = vmatprep.mubr.f32.mxu0 0.0
    %368 = vmatmul.mubr.f32.gmra.mxu0 %v272
    %v369 = vpop.f32.mrf.mxu0
    %v370 = vadd.f32 %v256, %v369
    %v371 = vpop.f32.mrf.mxu0
    %372 = vmatprep.mubr.f32.mxu0 0.0
    %373 = vmatmul.mubr.f32.gmra.mxu0 %v275
    %v374 = vpop.f32.mrf.mxu0
    %v375 = vadd.f32 %v256, %v374
    %v376 = vpop.f32.mrf.mxu0
    %377 = vmatprep.mubr.f32.mxu0 0.0
    %378 = vmatmul.mubr.f32.gmra.mxu0 %v278
    %v379 = vpop.f32.mrf.mxu0
    %v380 = vadd.f32 %v256, %v379
    %v381 = vpop.f32.mrf.mxu0
    %382 = vmatprep.mubr.f32.mxu0 0.0
    %383 = vmatmul.mubr.f32.gmra.mxu0 %v281
    %v384 = vpop.f32.mrf.mxu0
    %v385 = vadd.f32 %v256, %v384
    %v386 = vpop.f32.mrf.mxu0
    %387 = vdwg.mxu0
    %388 = vst [vmem:[#allocation2] sm:$0xff] %v350
    %389 = vst [vmem:[#allocation2 + $0x8] sm:$0xff] %v355
    %390 = vst [vmem:[#allocation2 + $0x10] sm:$0xff] %v360
    %391 = vst [vmem:[#allocation2 + $0x18] sm:$0xff] %v365
    %392 = vst [vmem:[#allocation2 + $0x20] sm:$0xff] %v370
    %393 = vst [vmem:[#allocation2 + $0x28] sm:$0xff] %v375
    %394 = vst [vmem:[#allocation2 + $0x30] sm:$0xff] %v380
    %395 = vst [vmem:[#allocation2 + $0x38] sm:$0xff] %v385
    %v396 = vld [vmem:[%s1] sm:$0xff]
    %398 = vset.pattern.permute.xlu0 0
    %399 = vperm.xlu0 %398, %v396
    %v400 = vpop.permute.xlu0 %399
    %v402 = vld [vmem:[#allocation2] sm:$0xff]
    %v403 = vld [vmem:[#allocation5] sm:$0xff]
    %v404 = vld [vmem:[#allocation5 + $0x8] sm:$0xff]
    %v405 = vld [vmem:[#allocation5 + $0x10] sm:$0xff]
    %v406 = vld [vmem:[#allocation5 + $0x18] sm:$0xff]
    %v408 = vsel %vm258, 0.0, 0
    %410 = vmatprep.subr.mxu0 0.0
    %411 = vmatpush1.msra.mxu0 0.0
    %412 = vmatprep.subr.mxu0 0.0
    %413 = vmatpush1.msra.mxu0 0.0
    %414 = vmatprep.subr.mxu0 0.0
    %415 = vmatpush1.msra.mxu0 0.0
    %416 = vmatprep.subr.mxu0 0.0
    %417 = vmatpush1.msra.mxu0 0.0
    %418 = vmatprep.subr.mxu0 0.0
    %419 = vmatpush1.msra.mxu0 0.0
    %420 = vmatprep.subr.mxu0 0.0
    %421 = vmatpush1.msra.mxu0 0.0
    %422 = vmatprep.subr.mxu0 0.0
    %423 = vmatpush1.msra.mxu0 0.0
    %424 = vmatprep.subr.mxu0 0.0
    %425 = vmatpush1.msra.mxu0 0.0
    %426 = vmatprep.subr.mxu0 0.0
    %427 = vmatpush1.msra.mxu0 0.0
    %428 = vmatprep.subr.mxu0 0.0
    %429 = vmatpush1.msra.mxu0 0.0
    %430 = vmatprep.subr.mxu0 0.0
    %431 = vmatpush1.msra.mxu0 0.0
    %432 = vmatprep.subr.mxu0 0.0
    %433 = vmatpush1.msra.mxu0 0.0
    %434 = vmatprep.subr.mxu0 0.0
    %435 = vmatpush1.msra.mxu0 %v406
    %436 = vmatprep.subr.mxu0 0.0
    %437 = vmatpush1.msra.mxu0 %v405
    %438 = vmatprep.subr.mxu0 0.0
    %439 = vmatpush1.msra.mxu0 %v404
    %440 = vmatprep.subr.mxu0 0.0
    %441 = vmatpush1.msra.mxu0 %v403
    %442 = vmatprep.subr.mxu0 0.0
    %443 = vmatpush2.msra.mxu0 0.0
    %444 = vmatprep.subr.mxu0 0.0
    %445 = vmatpush2.msra.mxu0 0.0
    %446 = vmatprep.subr.mxu0 0.0
    %447 = vmatpush2.msra.mxu0 0.0
    %448 = vmatprep.subr.mxu0 0.0
    %449 = vmatpush2.msra.mxu0 0.0
    %450 = vmatprep.subr.mxu0 0.0
    %451 = vmatpush2.msra.mxu0 0.0
    %452 = vmatprep.subr.mxu0 0.0
    %453 = vmatpush2.msra.mxu0 0.0
    %454 = vmatprep.subr.mxu0 0.0
    %455 = vmatpush2.msra.mxu0 0.0
    %456 = vmatprep.subr.mxu0 0.0
    %457 = vmatpush2.msra.mxu0 0.0
    %458 = vmatprep.subr.mxu0 0.0
    %459 = vmatpush2.msra.mxu0 0.0
    %460 = vmatprep.subr.mxu0 0.0
    %461 = vmatpush2.msra.mxu0 0.0
    %462 = vmatprep.subr.mxu0 0.0
    %463 = vmatpush2.msra.mxu0 0.0
    %464 = vmatprep.subr.mxu0 0.0
    %465 = vmatpush2.msra.mxu0 0.0
    %466 = vmatprep.subr.mxu0 0.0
    %467 = vmatpush2.msra.mxu0 0.0
    %468 = vmatprep.subr.mxu0 0.0
    %469 = vmatpush2.msra.mxu0 0.0
    %470 = vmatprep.subr.mxu0 0.0
    %471 = vmatpush2.msra.mxu0 0.0
    %472 = vmatprep.subr.mxu0 0.0
    %473 = vmatpush2.msra.mxu0 0.0
    %474 = vmatprep.mubr.f32.mxu0 0.0
    %475 = vmatmul.mubr.f32.gmra.mxu0 %v408
    %v476 = vpop.f32.mrf.mxu0
    %v477 = vadd.f32 0.0, %v476
    %v478 = vpop.f32.mrf.mxu0
    %479 = vdwg.mxu0
    %v480 = vadd.f32 %v402, %v477
    %v481 = vxor.u32 %v480, 2147483648
    %v482 = vmul.f32 %v481, 1.442695
    %v483 = vpow.pop %v482
    %v484 = vadd.f32 %v483, 1.0
    %v485 = vrcp.pop %v484
    %v486 = vmul.f32 1.0, %v485
    %v487 = vmul.f32 %v486, 2.0
    %v488 = vsub.f32 %v487, 1.0
    %v489 = vmul.f32 %v486, 0.0
    %491 = vrot.lane.b32.xlu0 %v488, 64
    %v492 = vpop.permute.xlu0 %491
    %v494 = vmul.f32 %v486, %v492
    %496 = vrot.lane.b32.xlu0 %v494, 32
    %v497 = vpop.permute.xlu0 %496
    %v499 = vadd.f32 %v489, %v497
    %v500 = vtanh.pop %v499
    %502 = vrot.lane.b32.xlu0 %v500, 64
    %v503 = vpop.permute.xlu0 %502
    %v505 = vmul.f32 %v486, %v503
    %vm506 = vcmp.gt.f32.partialorder %v400, 0.0
    %v507 = vsel %vm506, %v505, 0.0
    %v508 = vsel %vm506, %v499, 0.0
    %v509 = vld [vmem:[#allocation2 + $0x8] sm:$0xff]
    %511 = vrot.lane.b32.xlu0 %v507, 32
    %v512 = vpop.permute.xlu0 %511
    %v513 = vsel %vm258, %v512, 0
    %515 = vmatprep.subr.mxu0 0.0
    %516 = vmatpush1.msra.mxu0 0.0
    %517 = vmatprep.subr.mxu0 0.0
    %518 = vmatpush1.msra.mxu0 0.0
    %519 = vmatprep.subr.mxu0 0.0
    %520 = vmatpush1.msra.mxu0 0.0
    %521 = vmatprep.subr.mxu0 0.0
    %522 = vmatpush1.msra.mxu0 0.0
    %523 = vmatprep.subr.mxu0 0.0
    %524 = vmatpush1.msra.mxu0 0.0
    %525 = vmatprep.subr.mxu0 0.0
    %526 = vmatpush1.msra.mxu0 0.0
    %527 = vmatprep.subr.mxu0 0.0
    %528 = vmatpush1.msra.mxu0 0.0
    %529 = vmatprep.subr.mxu0 0.0
    %530 = vmatpush1.msra.mxu0 0.0
    %531 = vmatprep.subr.mxu0 0.0
    %532 = vmatpush1.msra.mxu0 0.0
    %533 = vmatprep.subr.mxu0 0.0
    %534 = vmatpush1.msra.mxu0 0.0
    %535 = vmatprep.subr.mxu0 0.0
    %536 = vmatpush1.msra.mxu0 0.0
    %537 = vmatprep.subr.mxu0 0.0
    %538 = vmatpush1.msra.mxu0 0.0
    %539 = vmatprep.subr.mxu0 0.0
    %540 = vmatpush1.msra.mxu0 %v406
    %541 = vmatprep.subr.mxu0 0.0
    %542 = vmatpush1.msra.mxu0 %v405
    %543 = vmatprep.subr.mxu0 0.0
    %544 = vmatpush1.msra.mxu0 %v404
    %545 = vmatprep.subr.mxu0 0.0
    %546 = vmatpush1.msra.mxu0 %v403
    %547 = vmatprep.subr.mxu0 0.0
    %548 = vmatpush2.msra.mxu0 0.0
    %549 = vmatprep.subr.mxu0 0.0
    %550 = vmatpush2.msra.mxu0 0.0
    %551 = vmatprep.subr.mxu0 0.0
    %552 = vmatpush2.msra.mxu0 0.0
    %553 = vmatprep.subr.mxu0 0.0
    %554 = vmatpush2.msra.mxu0 0.0
    %555 = vmatprep.subr.mxu0 0.0
    %556 = vmatpush2.msra.mxu0 0.0
    %557 = vmatprep.subr.mxu0 0.0
    %558 = vmatpush2.msra.mxu0 0.0
    %559 = vmatprep.subr.mxu0 0.0
    %560 = vmatpush2.msra.mxu0 0.0
    %561 = vmatprep.subr.mxu0 0.0
    %562 = vmatpush2.msra.mxu0 0.0
    %563 = vmatprep.subr.mxu0 0.0
    %564 = vmatpush2.msra.mxu0 0.0
    %565 = vmatprep.subr.mxu0 0.0
    %566 = vmatpush2.msra.mxu0 0.0
    %567 = vmatprep.subr.mxu0 0.0
    %568 = vmatpush2.msra.mxu0 0.0
    %569 = vmatprep.subr.mxu0 0.0
    %570 = vmatpush2.msra.mxu0 0.0
    %571 = vmatprep.subr.mxu0 0.0
    %572 = vmatpush2.msra.mxu0 0.0
    %573 = vmatprep.subr.mxu0 0.0
    %574 = vmatpush2.msra.mxu0 0.0
    %575 = vmatprep.subr.mxu0 0.0
    %576 = vmatpush2.msra.mxu0 0.0
    %577 = vmatprep.subr.mxu0 0.0
    %578 = vmatpush2.msra.mxu0 0.0
    %579 = vmatprep.mubr.f32.mxu0 0.0
    %580 = vmatmul.mubr.f32.gmra.mxu0 %v513
    %v581 = vpop.f32.mrf.mxu0
    %v582 = vadd.f32 0.0, %v581
    %v583 = vpop.f32.mrf.mxu0
    %584 = vdwg.mxu0
    %v585 = vadd.f32 %v509, %v582
    %v586 = vxor.u32 %v585, 2147483648
    %v587 = vmul.f32 %v586, 1.442695
    %v588 = vpow.pop %v587
    %v589 = vadd.f32 %v588, 1.0
    %v590 = vrcp.pop %v589
    %v591 = vmul.f32 1.0, %v590
    %v592 = vmul.f32 %v591, 2.0
    %v593 = vsub.f32 %v592, 1.0
    %v594 = vmul.f32 %v591, %v508
    %596 = vrot.lane.b32.xlu0 %v593, 64
    %v597 = vpop.permute.xlu0 %596
    %v599 = vmul.f32 %v591, %v597
    %601 = vrot.lane.b32.xlu0 %v599, 32
    %v602 = vpop.permute.xlu0 %601
    %v604 = vadd.f32 %v594, %v602
    %v605 = vtanh.pop %v604
    %607 = vrot.lane.b32.xlu0 %v605, 64
    %v608 = vpop.permute.xlu0 %607
    %v610 = vmul.f32 %v591, %v608
    %vm611 = vcmp.gt.f32.partialorder %v400, 1.0
    %v612 = vsel %vm611, %v610, %v507
    %v613 = vsel %vm611, %v604, %v508
    %v614 = vsel %vm611, %v610, 0.0
    %s615 = scalar_lea.vmem %s3, 32
    %v616 = vld [vmem:[%s615] sm:$0xff]
    %v617 = vld [vmem:[%s615 + $0x8] sm:$0xff]
    %v618 = vld [vmem:[%s615 + $0x10] sm:$0xff]
    %v619 = vld [vmem:[%s615 + $0x18] sm:$0xff]
    %s620 = scalar_lea.vmem %s5, 1
    %v621 = vld [vmem:[%s620] sm:$0x1]
    %v623 = vlaneseq
    %v624 = vshrl.u32 %v623, 7
    %v625 = vsub.s32 0, %v624
    %v626 = vrot.slane %v621, %v625
    %628 = vmatprep.subr.mxu0 0.0
    %629 = vmatpush1.msra.mxu0 0.0
    %630 = vmatprep.subr.mxu0 0.0
    %631 = vmatpush1.msra.mxu0 0.0
    %632 = vmatprep.subr.mxu0 0.0
    %633 = vmatpush1.msra.mxu0 0.0
    %634 = vmatprep.subr.mxu0 0.0
    %635 = vmatpush1.msra.mxu0 0.0
    %636 = vmatprep.subr.mxu0 0.0
    %637 = vmatpush1.msra.mxu0 0.0
    %638 = vmatprep.subr.mxu0 0.0
    %639 = vmatpush1.msra.mxu0 0.0
    %640 = vmatprep.subr.mxu0 0.0
    %641 = vmatpush1.msra.mxu0 0.0
    %642 = vmatprep.subr.mxu0 0.0
    %643 = vmatpush1.msra.mxu0 0.0
    %644 = vmatprep.subr.mxu0 0.0
    %645 = vmatpush1.msra.mxu0 0.0
    %646 = vmatprep.subr.mxu0 0.0
    %647 = vmatpush1.msra.mxu0 0.0
    %648 = vmatprep.subr.mxu0 0.0
    %649 = vmatpush1.msra.mxu0 0.0
    %650 = vmatprep.subr.mxu0 0.0
    %651 = vmatpush1.msra.mxu0 0.0
    %652 = vmatprep.subr.mxu0 0.0
    %653 = vmatpush1.msra.mxu0 %v619
    %654 = vmatprep.subr.mxu0 0.0
    %655 = vmatpush1.msra.mxu0 %v618
    %656 = vmatprep.subr.mxu0 0.0
    %657 = vmatpush1.msra.mxu0 %v617
    %658 = vmatprep.subr.mxu0 0.0
    %659 = vmatpush1.msra.mxu0 %v616
    %660 = vmatprep.subr.mxu0 0.0
    %661 = vmatpush2.msra.mxu0 0.0
    %662 = vmatprep.subr.mxu0 0.0
    %663 = vmatpush2.msra.mxu0 0.0
    %664 = vmatprep.subr.mxu0 0.0
    %665 = vmatpush2.msra.mxu0 0.0
    %666 = vmatprep.subr.mxu0 0.0
    %667 = vmatpush2.msra.mxu0 0.0
    %668 = vmatprep.subr.mxu0 0.0
    %669 = vmatpush2.msra.mxu0 0.0
    %670 = vmatprep.subr.mxu0 0.0
    %671 = vmatpush2.msra.mxu0 0.0
    %672 = vmatprep.subr.mxu0 0.0
    %673 = vmatpush2.msra.mxu0 0.0
    %674 = vmatprep.subr.mxu0 0.0
    %675 = vmatpush2.msra.mxu0 0.0
    %676 = vmatprep.subr.mxu0 0.0
    %677 = vmatpush2.msra.mxu0 0.0
    %678 = vmatprep.subr.mxu0 0.0
    %679 = vmatpush2.msra.mxu0 0.0
    %680 = vmatprep.subr.mxu0 0.0
    %681 = vmatpush2.msra.mxu0 0.0
    %682 = vmatprep.subr.mxu0 0.0
    %683 = vmatpush2.msra.mxu0 0.0
    %684 = vmatprep.subr.mxu0 0.0
    %685 = vmatpush2.msra.mxu0 0.0
    %686 = vmatprep.subr.mxu0 0.0
    %687 = vmatpush2.msra.mxu0 0.0
    %688 = vmatprep.subr.mxu0 0.0
    %689 = vmatpush2.msra.mxu0 0.0
    %690 = vmatprep.subr.mxu0 0.0
    %691 = vmatpush2.msra.mxu0 0.0
    %692 = vmatprep.mubr.f32.mxu0 0.0
    %693 = vmatmul.mubr.f32.gmra.mxu0 %v513
    %v694 = vpop.f32.mrf.mxu0
    %v695 = vadd.f32 %v626, %v694
    %v696 = vpop.f32.mrf.mxu0
    %697 = vdwg.mxu0
    %s698 = scalar_lea.vmem [#allocation5], 32
    %v699 = vld [vmem:[%s698] sm:$0xff]
    %v700 = vld [vmem:[%s698 + $0x8] sm:$0xff]
    %v701 = vld [vmem:[%s698 + $0x10] sm:$0xff]
    %v702 = vld [vmem:[%s698 + $0x18] sm:$0xff]
    %703 = vmatprep.subr.mxu0 0.0
    %704 = vmatpush1.msra.mxu0 0.0
    %705 = vmatprep.subr.mxu0 0.0
    %706 = vmatpush1.msra.mxu0 0.0
    %707 = vmatprep.subr.mxu0 0.0
    %708 = vmatpush1.msra.mxu0 0.0
    %709 = vmatprep.subr.mxu0 0.0
    %710 = vmatpush1.msra.mxu0 0.0
    %711 = vmatprep.subr.mxu0 0.0
    %712 = vmatpush1.msra.mxu0 0.0
    %713 = vmatprep.subr.mxu0 0.0
    %714 = vmatpush1.msra.mxu0 0.0
    %715 = vmatprep.subr.mxu0 0.0
    %716 = vmatpush1.msra.mxu0 0.0
    %717 = vmatprep.subr.mxu0 0.0
    %718 = vmatpush1.msra.mxu0 0.0
    %719 = vmatprep.subr.mxu0 0.0
    %720 = vmatpush1.msra.mxu0 0.0
    %721 = vmatprep.subr.mxu0 0.0
    %722 = vmatpush1.msra.mxu0 0.0
    %723 = vmatprep.subr.mxu0 0.0
    %724 = vmatpush1.msra.mxu0 0.0
    %725 = vmatprep.subr.mxu0 0.0
    %726 = vmatpush1.msra.mxu0 0.0
    %727 = vmatprep.subr.mxu0 0.0
    %728 = vmatpush1.msra.mxu0 %v702
    %729 = vmatprep.subr.mxu0 0.0
    %730 = vmatpush1.msra.mxu0 %v701
    %731 = vmatprep.subr.mxu0 0.0
    %732 = vmatpush1.msra.mxu0 %v700
    %733 = vmatprep.subr.mxu0 0.0
    %734 = vmatpush1.msra.mxu0 %v699
    %735 = vmatprep.subr.mxu0 0.0
    %736 = vmatpush2.msra.mxu0 0.0
    %737 = vmatprep.subr.mxu0 0.0
    %738 = vmatpush2.msra.mxu0 0.0
    %739 = vmatprep.subr.mxu0 0.0
    %740 = vmatpush2.msra.mxu0 0.0
    %741 = vmatprep.subr.mxu0 0.0
    %742 = vmatpush2.msra.mxu0 0.0
    %743 = vmatprep.subr.mxu0 0.0
    %744 = vmatpush2.msra.mxu0 0.0
    %745 = vmatprep.subr.mxu0 0.0
    %746 = vmatpush2.msra.mxu0 0.0
    %747 = vmatprep.subr.mxu0 0.0
    %748 = vmatpush2.msra.mxu0 0.0
    %749 = vmatprep.subr.mxu0 0.0
    %750 = vmatpush2.msra.mxu0 0.0
    %751 = vmatprep.subr.mxu0 0.0
    %752 = vmatpush2.msra.mxu0 0.0
    %753 = vmatprep.subr.mxu0 0.0
    %754 = vmatpush2.msra.mxu0 0.0
    %755 = vmatprep.subr.mxu0 0.0
    %756 = vmatpush2.msra.mxu0 0.0
    %757 = vmatprep.subr.mxu0 0.0
    %758 = vmatpush2.msra.mxu0 0.0
    %759 = vmatprep.subr.mxu0 0.0
    %760 = vmatpush2.msra.mxu0 0.0
    %761 = vmatprep.subr.mxu0 0.0
    %762 = vmatpush2.msra.mxu0 0.0
    %763 = vmatprep.subr.mxu0 0.0
    %764 = vmatpush2.msra.mxu0 0.0
    %765 = vmatprep.subr.mxu0 0.0
    %766 = vmatpush2.msra.mxu0 0.0
    %767 = vmatprep.mubr.f32.mxu0 0.0
    %768 = vmatmul.mubr.f32.gmra.mxu0 %v408
    %v769 = vpop.f32.mrf.mxu0
    %v770 = vadd.f32 0.0, %v769
    %v771 = vpop.f32.mrf.mxu0
    %772 = vdwg.mxu0
    %v773 = vadd.f32 %v695, %v770
    %v774 = vxor.u32 %v773, 2147483648
    %v775 = vmul.f32 %v774, 1.442695
    %v776 = vpow.pop %v775
    %v777 = vadd.f32 %v776, 1.0
    %v778 = vrcp.pop %v777
    %v779 = vmul.f32 1.0, %v778
    %v780 = vmul.f32 %v779, 2.0
    %v781 = vsub.f32 %v780, 1.0
    %v782 = vmul.f32 %v779, 0.0
    %784 = vrot.lane.b32.xlu0 %v781, 64
    %v785 = vpop.permute.xlu0 %784
    %v787 = vmul.f32 %v779, %v785
    %789 = vrot.lane.b32.xlu0 %v787, 32
    %v790 = vpop.permute.xlu0 %789
    %v792 = vadd.f32 %v782, %v790
    %v793 = vtanh.pop %v792
    %795 = vrot.lane.b32.xlu0 %v793, 64
    %v796 = vpop.permute.xlu0 %795
    %v798 = vmul.f32 %v779, %v796
    %v799 = vsel %vm506, %v798, 0.0
    %v800 = vsel %vm506, %v792, 0.0
    %v801 = vld [vmem:[#allocation2 + $0x10] sm:$0xff]
    %803 = vrot.lane.b32.xlu0 %v612, 32
    %v804 = vpop.permute.xlu0 %803
    %v805 = vsel %vm258, %v804, 0
    %807 = vmatprep.subr.mxu0 0.0
    %808 = vmatpush1.msra.mxu0 0.0
    %809 = vmatprep.subr.mxu0 0.0
    %810 = vmatpush1.msra.mxu0 0.0
    %811 = vmatprep.subr.mxu0 0.0
    %812 = vmatpush1.msra.mxu0 0.0
    %813 = vmatprep.subr.mxu0 0.0
    %814 = vmatpush1.msra.mxu0 0.0
    %815 = vmatprep.subr.mxu0 0.0
    %816 = vmatpush1.msra.mxu0 0.0
    %817 = vmatprep.subr.mxu0 0.0
    %818 = vmatpush1.msra.mxu0 0.0
    %819 = vmatprep.subr.mxu0 0.0
    %820 = vmatpush1.msra.mxu0 0.0
    %821 = vmatprep.subr.mxu0 0.0
    %822 = vmatpush1.msra.mxu0 0.0
    %823 = vmatprep.subr.mxu0 0.0
    %824 = vmatpush1.msra.mxu0 0.0
    %825 = vmatprep.subr.mxu0 0.0
    %826 = vmatpush1.msra.mxu0 0.0
    %827 = vmatprep.subr.mxu0 0.0
    %828 = vmatpush1.msra.mxu0 0.0
    %829 = vmatprep.subr.mxu0 0.0
    %830 = vmatpush1.msra.mxu0 0.0
    %831 = vmatprep.subr.mxu0 0.0
    %832 = vmatpush1.msra.mxu0 %v406
    %833 = vmatprep.subr.mxu0 0.0
    %834 = vmatpush1.msra.mxu0 %v405
    %835 = vmatprep.subr.mxu0 0.0
    %836 = vmatpush1.msra.mxu0 %v404
    %837 = vmatprep.subr.mxu0 0.0
    %838 = vmatpush1.msra.mxu0 %v403
    %839 = vmatprep.subr.mxu0 0.0
    %840 = vmatpush2.msra.mxu0 0.0
    %841 = vmatprep.subr.mxu0 0.0
    %842 = vmatpush2.msra.mxu0 0.0
    %843 = vmatprep.subr.mxu0 0.0
    %844 = vmatpush2.msra.mxu0 0.0
    %845 = vmatprep.subr.mxu0 0.0
    %846 = vmatpush2.msra.mxu0 0.0
    %847 = vmatprep.subr.mxu0 0.0
    %848 = vmatpush2.msra.mxu0 0.0
    %849 = vmatprep.subr.mxu0 0.0
    %850 = vmatpush2.msra.mxu0 0.0
    %851 = vmatprep.subr.mxu0 0.0
    %852 = vmatpush2.msra.mxu0 0.0
    %853 = vmatprep.subr.mxu0 0.0
    %854 = vmatpush2.msra.mxu0 0.0
    %855 = vmatprep.subr.mxu0 0.0
    %856 = vmatpush2.msra.mxu0 0.0
    %857 = vmatprep.subr.mxu0 0.0
    %858 = vmatpush2.msra.mxu0 0.0
    %859 = vmatprep.subr.mxu0 0.0
    %860 = vmatpush2.msra.mxu0 0.0
    %861 = vmatprep.subr.mxu0 0.0
    %862 = vmatpush2.msra.mxu0 0.0
    %863 = vmatprep.subr.mxu0 0.0
    %864 = vmatpush2.msra.mxu0 0.0
    %865 = vmatprep.subr.mxu0 0.0
    %866 = vmatpush2.msra.mxu0 0.0
    %867 = vmatprep.subr.mxu0 0.0
    %868 = vmatpush2.msra.mxu0 0.0
    %869 = vmatprep.subr.mxu0 0.0
    %870 = vmatpush2.msra.mxu0 0.0
    %871 = vmatprep.mubr.f32.mxu0 0.0
    %872 = vmatmul.mubr.f32.gmra.mxu0 %v805
    %v873 = vpop.f32.mrf.mxu0
    %v874 = vadd.f32 0.0, %v873
    %v875 = vpop.f32.mrf.mxu0
    %876 = vdwg.mxu0
    %v877 = vadd.f32 %v801, %v874
    %v878 = vxor.u32 %v877, 2147483648
    %v879 = vmul.f32 %v878, 1.442695
    %v880 = vpow.pop %v879
    %v881 = vadd.f32 %v880, 1.0
    %v882 = vrcp.pop %v881
    %v883 = vmul.f32 1.0, %v882
    %v884 = vmul.f32 %v883, 2.0
    %v885 = vsub.f32 %v884, 1.0
    %v886 = vmul.f32 %v883, %v613
    %888 = vrot.lane.b32.xlu0 %v885, 64
    %v889 = vpop.permute.xlu0 %888
    %v891 = vmul.f32 %v883, %v889
    %893 = vrot.lane.b32.xlu0 %v891, 32
    %v894 = vpop.permute.xlu0 %893
    %v896 = vadd.f32 %v886, %v894
    %v897 = vtanh.pop %v896
    %899 = vrot.lane.b32.xlu0 %v897, 64
    %v900 = vpop.permute.xlu0 %899
    %v902 = vmul.f32 %v883, %v900
    %vm903 = vcmp.gt.f32.partialorder %v400, 2.0
    %v904 = vsel %vm903, %v902, %v612
    %v905 = vsel %vm903, %v896, %v613
    %v906 = vsel %vm903, %v902, 0.0
    %908 = vrot.lane.b32.xlu0 %v614, 32
    %v909 = vpop.permute.xlu0 %908
    %v910 = vsel %vm258, %v909, 0
    %912 = vmatprep.subr.mxu0 0.0
    %913 = vmatpush1.msra.mxu0 0.0
    %914 = vmatprep.subr.mxu0 0.0
    %915 = vmatpush1.msra.mxu0 0.0
    %916 = vmatprep.subr.mxu0 0.0
    %917 = vmatpush1.msra.mxu0 0.0
    %918 = vmatprep.subr.mxu0 0.0
    %919 = vmatpush1.msra.mxu0 0.0
    %920 = vmatprep.subr.mxu0 0.0
    %921 = vmatpush1.msra.mxu0 0.0
    %922 = vmatprep.subr.mxu0 0.0
    %923 = vmatpush1.msra.mxu0 0.0
    %924 = vmatprep.subr.mxu0 0.0
    %925 = vmatpush1.msra.mxu0 0.0
    %926 = vmatprep.subr.mxu0 0.0
    %927 = vmatpush1.msra.mxu0 0.0
    %928 = vmatprep.subr.mxu0 0.0
    %929 = vmatpush1.msra.mxu0 0.0
    %930 = vmatprep.subr.mxu0 0.0
    %931 = vmatpush1.msra.mxu0 0.0
    %932 = vmatprep.subr.mxu0 0.0
    %933 = vmatpush1.msra.mxu0 0.0
    %934 = vmatprep.subr.mxu0 0.0
    %935 = vmatpush1.msra.mxu0 0.0
    %936 = vmatprep.subr.mxu0 0.0
    %937 = vmatpush1.msra.mxu0 %v619
    %938 = vmatprep.subr.mxu0 0.0
    %939 = vmatpush1.msra.mxu0 %v618
    %940 = vmatprep.subr.mxu0 0.0
    %941 = vmatpush1.msra.mxu0 %v617
    %942 = vmatprep.subr.mxu0 0.0
    %943 = vmatpush1.msra.mxu0 %v616
    %944 = vmatprep.subr.mxu0 0.0
    %945 = vmatpush2.msra.mxu0 0.0
    %946 = vmatprep.subr.mxu0 0.0
    %947 = vmatpush2.msra.mxu0 0.0
    %948 = vmatprep.subr.mxu0 0.0
    %949 = vmatpush2.msra.mxu0 0.0
    %950 = vmatprep.subr.mxu0 0.0
    %951 = vmatpush2.msra.mxu0 0.0
    %952 = vmatprep.subr.mxu0 0.0
    %953 = vmatpush2.msra.mxu0 0.0
    %954 = vmatprep.subr.mxu0 0.0
    %955 = vmatpush2.msra.mxu0 0.0
    %956 = vmatprep.subr.mxu0 0.0
    %957 = vmatpush2.msra.mxu0 0.0
    %958 = vmatprep.subr.mxu0 0.0
    %959 = vmatpush2.msra.mxu0 0.0
    %960 = vmatprep.subr.mxu0 0.0
    %961 = vmatpush2.msra.mxu0 0.0
    %962 = vmatprep.subr.mxu0 0.0
    %963 = vmatpush2.msra.mxu0 0.0
    %964 = vmatprep.subr.mxu0 0.0
    %965 = vmatpush2.msra.mxu0 0.0
    %966 = vmatprep.subr.mxu0 0.0
    %967 = vmatpush2.msra.mxu0 0.0
    %968 = vmatprep.subr.mxu0 0.0
    %969 = vmatpush2.msra.mxu0 0.0
    %970 = vmatprep.subr.mxu0 0.0
    %971 = vmatpush2.msra.mxu0 0.0
    %972 = vmatprep.subr.mxu0 0.0
    %973 = vmatpush2.msra.mxu0 0.0
    %974 = vmatprep.subr.mxu0 0.0
    %975 = vmatpush2.msra.mxu0 0.0
    %976 = vmatprep.mubr.f32.mxu0 0.0
    %977 = vmatmul.mubr.f32.gmra.mxu0 %v910
    %v978 = vpop.f32.mrf.mxu0
    %v979 = vadd.f32 %v626, %v978
    %v980 = vpop.f32.mrf.mxu0
    %981 = vdwg.mxu0
    %983 = vrot.lane.b32.xlu0 %v799, 32
    %v984 = vpop.permute.xlu0 %983
    %v985 = vsel %vm258, %v984, 0
    %987 = vmatprep.subr.mxu0 0.0
    %988 = vmatpush1.msra.mxu0 0.0
    %989 = vmatprep.subr.mxu0 0.0
    %990 = vmatpush1.msra.mxu0 0.0
    %991 = vmatprep.subr.mxu0 0.0
    %992 = vmatpush1.msra.mxu0 0.0
    %993 = vmatprep.subr.mxu0 0.0
    %994 = vmatpush1.msra.mxu0 0.0
    %995 = vmatprep.subr.mxu0 0.0
    %996 = vmatpush1.msra.mxu0 0.0
    %997 = vmatprep.subr.mxu0 0.0
    %998 = vmatpush1.msra.mxu0 0.0
    %999 = vmatprep.subr.mxu0 0.0
    %1000 = vmatpush1.msra.mxu0 0.0
    %1001 = vmatprep.subr.mxu0 0.0
    %1002 = vmatpush1.msra.mxu0 0.0
    %1003 = vmatprep.subr.mxu0 0.0
    %1004 = vmatpush1.msra.mxu0 0.0
    %1005 = vmatprep.subr.mxu0 0.0
    %1006 = vmatpush1.msra.mxu0 0.0
    %1007 = vmatprep.subr.mxu0 0.0
    %1008 = vmatpush1.msra.mxu0 0.0
    %1009 = vmatprep.subr.mxu0 0.0
    %1010 = vmatpush1.msra.mxu0 0.0
    %1011 = vmatprep.subr.mxu0 0.0
    %1012 = vmatpush1.msra.mxu0 %v702
    %1013 = vmatprep.subr.mxu0 0.0
    %1014 = vmatpush1.msra.mxu0 %v701
    %1015 = vmatprep.subr.mxu0 0.0
    %1016 = vmatpush1.msra.mxu0 %v700
    %1017 = vmatprep.subr.mxu0 0.0
    %1018 = vmatpush1.msra.mxu0 %v699
    %1019 = vmatprep.subr.mxu0 0.0
    %1020 = vmatpush2.msra.mxu0 0.0
    %1021 = vmatprep.subr.mxu0 0.0
    %1022 = vmatpush2.msra.mxu0 0.0
    %1023 = vmatprep.subr.mxu0 0.0
    %1024 = vmatpush2.msra.mxu0 0.0
    %1025 = vmatprep.subr.mxu0 0.0
    %1026 = vmatpush2.msra.mxu0 0.0
    %1027 = vmatprep.subr.mxu0 0.0
    %1028 = vmatpush2.msra.mxu0 0.0
    %1029 = vmatprep.subr.mxu0 0.0
    %1030 = vmatpush2.msra.mxu0 0.0
    %1031 = vmatprep.subr.mxu0 0.0
    %1032 = vmatpush2.msra.mxu0 0.0
    %1033 = vmatprep.subr.mxu0 0.0
    %1034 = vmatpush2.msra.mxu0 0.0
    %1035 = vmatprep.subr.mxu0 0.0
    %1036 = vmatpush2.msra.mxu0 0.0
    %1037 = vmatprep.subr.mxu0 0.0
    %1038 = vmatpush2.msra.mxu0 0.0
    %1039 = vmatprep.subr.mxu0 0.0
    %1040 = vmatpush2.msra.mxu0 0.0
    %1041 = vmatprep.subr.mxu0 0.0
    %1042 = vmatpush2.msra.mxu0 0.0
    %1043 = vmatprep.subr.mxu0 0.0
    %1044 = vmatpush2.msra.mxu0 0.0
    %1045 = vmatprep.subr.mxu0 0.0
    %1046 = vmatpush2.msra.mxu0 0.0
    %1047 = vmatprep.subr.mxu0 0.0
    %1048 = vmatpush2.msra.mxu0 0.0
    %1049 = vmatprep.subr.mxu0 0.0
    %1050 = vmatpush2.msra.mxu0 0.0
    %1051 = vmatprep.mubr.f32.mxu0 0.0
    %1052 = vmatmul.mubr.f32.gmra.mxu0 %v985
    %v1053 = vpop.f32.mrf.mxu0
    %v1054 = vadd.f32 0.0, %v1053
    %v1055 = vpop.f32.mrf.mxu0
    %1056 = vdwg.mxu0
    %v1057 = vadd.f32 %v979, %v1054
    %v1058 = vxor.u32 %v1057, 2147483648
    %v1059 = vmul.f32 %v1058, 1.442695
    %v1060 = vpow.pop %v1059
    %v1061 = vadd.f32 %v1060, 1.0
    %v1062 = vrcp.pop %v1061
    %v1063 = vmul.f32 1.0, %v1062
    %v1064 = vmul.f32 %v1063, 2.0
    %v1065 = vsub.f32 %v1064, 1.0
    %v1066 = vmul.f32 %v1063, %v800
    %1068 = vrot.lane.b32.xlu0 %v1065, 64
    %v1069 = vpop.permute.xlu0 %1068
    %v1071 = vmul.f32 %v1063, %v1069
    %1073 = vrot.lane.b32.xlu0 %v1071, 32
    %v1074 = vpop.permute.xlu0 %1073
    %v1076 = vadd.f32 %v1066, %v1074
    %v1077 = vtanh.pop %v1076
    %1079 = vrot.lane.b32.xlu0 %v1077, 64
    %v1080 = vpop.permute.xlu0 %1079
    %v1082 = vmul.f32 %v1063, %v1080
    %v1083 = vsel %vm611, %v1082, %v799
    %v1084 = vsel %vm611, %v1076, %v800
    %v1085 = vsel %vm611, %v1082, 0.0
    %s1086 = scalar_lea.vmem %s3, 64
    %v1087 = vld [vmem:[%s1086] sm:$0xff]
    %v1088 = vld [vmem:[%s1086 + $0x8] sm:$0xff]
    %v1089 = vld [vmem:[%s1086 + $0x10] sm:$0xff]
    %v1090 = vld [vmem:[%s1086 + $0x18] sm:$0xff]
    %s1091 = scalar_lea.vmem %s5, 2
    %v1092 = vld [vmem:[%s1091] sm:$0x1]
    %v1094 = vlaneseq
    %v1095 = vshrl.u32 %v1094, 7
    %v1096 = vsub.s32 0, %v1095
    %v1097 = vrot.slane %v1092, %v1096
    %1099 = vmatprep.subr.mxu0 0.0
    %1100 = vmatpush1.msra.mxu0 0.0
    %1101 = vmatprep.subr.mxu0 0.0
    %1102 = vmatpush1.msra.mxu0 0.0
    %1103 = vmatprep.subr.mxu0 0.0
    %1104 = vmatpush1.msra.mxu0 0.0
    %1105 = vmatprep.subr.mxu0 0.0
    %1106 = vmatpush1.msra.mxu0 0.0
    %1107 = vmatprep.subr.mxu0 0.0
    %1108 = vmatpush1.msra.mxu0 0.0
    %1109 = vmatprep.subr.mxu0 0.0
    %1110 = vmatpush1.msra.mxu0 0.0
    %1111 = vmatprep.subr.mxu0 0.0
    %1112 = vmatpush1.msra.mxu0 0.0
    %1113 = vmatprep.subr.mxu0 0.0
    %1114 = vmatpush1.msra.mxu0 0.0
    %1115 = vmatprep.subr.mxu0 0.0
    %1116 = vmatpush1.msra.mxu0 0.0
    %1117 = vmatprep.subr.mxu0 0.0
    %1118 = vmatpush1.msra.mxu0 0.0
    %1119 = vmatprep.subr.mxu0 0.0
    %1120 = vmatpush1.msra.mxu0 0.0
    %1121 = vmatprep.subr.mxu0 0.0
    %1122 = vmatpush1.msra.mxu0 0.0
    %1123 = vmatprep.subr.mxu0 0.0
    %1124 = vmatpush1.msra.mxu0 %v1090
    %1125 = vmatprep.subr.mxu0 0.0
    %1126 = vmatpush1.msra.mxu0 %v1089
    %1127 = vmatprep.subr.mxu0 0.0
    %1128 = vmatpush1.msra.mxu0 %v1088
    %1129 = vmatprep.subr.mxu0 0.0
    %1130 = vmatpush1.msra.mxu0 %v1087
    %1131 = vmatprep.subr.mxu0 0.0
    %1132 = vmatpush2.msra.mxu0 0.0
    %1133 = vmatprep.subr.mxu0 0.0
    %1134 = vmatpush2.msra.mxu0 0.0
    %1135 = vmatprep.subr.mxu0 0.0
    %1136 = vmatpush2.msra.mxu0 0.0
    %1137 = vmatprep.subr.mxu0 0.0
    %1138 = vmatpush2.msra.mxu0 0.0
    %1139 = vmatprep.subr.mxu0 0.0
    %1140 = vmatpush2.msra.mxu0 0.0
    %1141 = vmatprep.subr.mxu0 0.0
    %1142 = vmatpush2.msra.mxu0 0.0
    %1143 = vmatprep.subr.mxu0 0.0
    %1144 = vmatpush2.msra.mxu0 0.0
    %1145 = vmatprep.subr.mxu0 0.0
    %1146 = vmatpush2.msra.mxu0 0.0
    %1147 = vmatprep.subr.mxu0 0.0
    %1148 = vmatpush2.msra.mxu0 0.0
    %1149 = vmatprep.subr.mxu0 0.0
    %1150 = vmatpush2.msra.mxu0 0.0
    %1151 = vmatprep.subr.mxu0 0.0
    %1152 = vmatpush2.msra.mxu0 0.0
    %1153 = vmatprep.subr.mxu0 0.0
    %1154 = vmatpush2.msra.mxu0 0.0
    %1155 = vmatprep.subr.mxu0 0.0
    %1156 = vmatpush2.msra.mxu0 0.0
    %1157 = vmatprep.subr.mxu0 0.0
    %1158 = vmatpush2.msra.mxu0 0.0
    %1159 = vmatprep.subr.mxu0 0.0
    %1160 = vmatpush2.msra.mxu0 0.0
    %1161 = vmatprep.subr.mxu0 0.0
    %1162 = vmatpush2.msra.mxu0 0.0
    %1163 = vmatprep.mubr.f32.mxu0 0.0
    %1164 = vmatmul.mubr.f32.gmra.mxu0 %v985
    %v1165 = vpop.f32.mrf.mxu0
    %v1166 = vadd.f32 %v1097, %v1165
    %v1167 = vpop.f32.mrf.mxu0
    %1168 = vdwg.mxu0
    %s1169 = scalar_lea.vmem [#allocation5], 64
    %v1170 = vld [vmem:[%s1169] sm:$0xff]
    %v1171 = vld [vmem:[%s1169 + $0x8] sm:$0xff]
    %v1172 = vld [vmem:[%s1169 + $0x10] sm:$0xff]
    %v1173 = vld [vmem:[%s1169 + $0x18] sm:$0xff]
    %1174 = vmatprep.subr.mxu0 0.0
    %1175 = vmatpush1.msra.mxu0 0.0
    %1176 = vmatprep.subr.mxu0 0.0
    %1177 = vmatpush1.msra.mxu0 0.0
    %1178 = vmatprep.subr.mxu0 0.0
    %1179 = vmatpush1.msra.mxu0 0.0
    %1180 = vmatprep.subr.mxu0 0.0
    %1181 = vmatpush1.msra.mxu0 0.0
    %1182 = vmatprep.subr.mxu0 0.0
    %1183 = vmatpush1.msra.mxu0 0.0
    %1184 = vmatprep.subr.mxu0 0.0
    %1185 = vmatpush1.msra.mxu0 0.0
    %1186 = vmatprep.subr.mxu0 0.0
    %1187 = vmatpush1.msra.mxu0 0.0
    %1188 = vmatprep.subr.mxu0 0.0
    %1189 = vmatpush1.msra.mxu0 0.0
    %1190 = vmatprep.subr.mxu0 0.0
    %1191 = vmatpush1.msra.mxu0 0.0
    %1192 = vmatprep.subr.mxu0 0.0
    %1193 = vmatpush1.msra.mxu0 0.0
    %1194 = vmatprep.subr.mxu0 0.0
    %1195 = vmatpush1.msra.mxu0 0.0
    %1196 = vmatprep.subr.mxu0 0.0
    %1197 = vmatpush1.msra.mxu0 0.0
    %1198 = vmatprep.subr.mxu0 0.0
    %1199 = vmatpush1.msra.mxu0 %v1173
    %1200 = vmatprep.subr.mxu0 0.0
    %1201 = vmatpush1.msra.mxu0 %v1172
    %1202 = vmatprep.subr.mxu0 0.0
    %1203 = vmatpush1.msra.mxu0 %v1171
    %1204 = vmatprep.subr.mxu0 0.0
    %1205 = vmatpush1.msra.mxu0 %v1170
    %1206 = vmatprep.subr.mxu0 0.0
    %1207 = vmatpush2.msra.mxu0 0.0
    %1208 = vmatprep.subr.mxu0 0.0
    %1209 = vmatpush2.msra.mxu0 0.0
    %1210 = vmatprep.subr.mxu0 0.0
    %1211 = vmatpush2.msra.mxu0 0.0
    %1212 = vmatprep.subr.mxu0 0.0
    %1213 = vmatpush2.msra.mxu0 0.0
    %1214 = vmatprep.subr.mxu0 0.0
    %1215 = vmatpush2.msra.mxu0 0.0
    %1216 = vmatprep.subr.mxu0 0.0
    %1217 = vmatpush2.msra.mxu0 0.0
    %1218 = vmatprep.subr.mxu0 0.0
    %1219 = vmatpush2.msra.mxu0 0.0
    %1220 = vmatprep.subr.mxu0 0.0
    %1221 = vmatpush2.msra.mxu0 0.0
    %1222 = vmatprep.subr.mxu0 0.0
    %1223 = vmatpush2.msra.mxu0 0.0
    %1224 = vmatprep.subr.mxu0 0.0
    %1225 = vmatpush2.msra.mxu0 0.0
    %1226 = vmatprep.subr.mxu0 0.0
    %1227 = vmatpush2.msra.mxu0 0.0
    %1228 = vmatprep.subr.mxu0 0.0
    %1229 = vmatpush2.msra.mxu0 0.0
    %1230 = vmatprep.subr.mxu0 0.0
    %1231 = vmatpush2.msra.mxu0 0.0
    %1232 = vmatprep.subr.mxu0 0.0
    %1233 = vmatpush2.msra.mxu0 0.0
    %1234 = vmatprep.subr.mxu0 0.0
    %1235 = vmatpush2.msra.mxu0 0.0
    %1236 = vmatprep.subr.mxu0 0.0
    %1237 = vmatpush2.msra.mxu0 0.0
    %1238 = vmatprep.mubr.f32.mxu0 0.0
    %1239 = vmatmul.mubr.f32.gmra.mxu0 %v408
    %v1240 = vpop.f32.mrf.mxu0
    %v1241 = vadd.f32 0.0, %v1240
    %v1242 = vpop.f32.mrf.mxu0
    %1243 = vdwg.mxu0
    %v1244 = vadd.f32 %v1166, %v1241
    %v1245 = vxor.u32 %v1244, 2147483648
    %v1246 = vmul.f32 %v1245, 1.442695
    %v1247 = vpow.pop %v1246
    %v1248 = vadd.f32 %v1247, 1.0
    %v1249 = vrcp.pop %v1248
    %v1250 = vmul.f32 1.0, %v1249
    %v1251 = vmul.f32 %v1250, 2.0
    %v1252 = vsub.f32 %v1251, 1.0
    %v1253 = vmul.f32 %v1250, 0.0
    %1255 = vrot.lane.b32.xlu0 %v1252, 64
    %v1256 = vpop.permute.xlu0 %1255
    %v1258 = vmul.f32 %v1250, %v1256
    %1260 = vrot.lane.b32.xlu0 %v1258, 32
    %v1261 = vpop.permute.xlu0 %1260
    %v1263 = vadd.f32 %v1253, %v1261
    %v1264 = vtanh.pop %v1263
    %1266 = vrot.lane.b32.xlu0 %v1264, 64
    %v1267 = vpop.permute.xlu0 %1266
    %v1269 = vmul.f32 %v1250, %v1267
    %v1270 = vsel %vm506, %v1269, 0.0
    %v1271 = vsel %vm506, %v1263, 0.0
    %v1272 = vld [vmem:[#allocation2 + $0x18] sm:$0xff]
    %1274 = vrot.lane.b32.xlu0 %v904, 32
    %v1275 = vpop.permute.xlu0 %1274
    %v1276 = vsel %vm258, %v1275, 0
    %1278 = vmatprep.subr.mxu0 0.0
    %1279 = vmatpush1.msra.mxu0 0.0
    %1280 = vmatprep.subr.mxu0 0.0
    %1281 = vmatpush1.msra.mxu0 0.0
    %1282 = vmatprep.subr.mxu0 0.0
    %1283 = vmatpush1.msra.mxu0 0.0
    %1284 = vmatprep.subr.mxu0 0.0
    %1285 = vmatpush1.msra.mxu0 0.0
    %1286 = vmatprep.subr.mxu0 0.0
    %1287 = vmatpush1.msra.mxu0 0.0
    %1288 = vmatprep.subr.mxu0 0.0
    %1289 = vmatpush1.msra.mxu0 0.0
    %1290 = vmatprep.subr.mxu0 0.0
    %1291 = vmatpush1.msra.mxu0 0.0
    %1292 = vmatprep.subr.mxu0 0.0
    %1293 = vmatpush1.msra.mxu0 0.0
    %1294 = vmatprep.subr.mxu0 0.0
    %1295 = vmatpush1.msra.mxu0 0.0
    %1296 = vmatprep.subr.mxu0 0.0
    %1297 = vmatpush1.msra.mxu0 0.0
    %1298 = vmatprep.subr.mxu0 0.0
    %1299 = vmatpush1.msra.mxu0 0.0
    %1300 = vmatprep.subr.mxu0 0.0
    %1301 = vmatpush1.msra.mxu0 0.0
    %1302 = vmatprep.subr.mxu0 0.0
    %1303 = vmatpush1.msra.mxu0 %v406
    %1304 = vmatprep.subr.mxu0 0.0
    %1305 = vmatpush1.msra.mxu0 %v405
    %1306 = vmatprep.subr.mxu0 0.0
    %1307 = vmatpush1.msra.mxu0 %v404
    %1308 = vmatprep.subr.mxu0 0.0
    %1309 = vmatpush1.msra.mxu0 %v403
    %1310 = vmatprep.subr.mxu0 0.0
    %1311 = vmatpush2.msra.mxu0 0.0
    %1312 = vmatprep.subr.mxu0 0.0
    %1313 = vmatpush2.msra.mxu0 0.0
    %1314 = vmatprep.subr.mxu0 0.0
    %1315 = vmatpush2.msra.mxu0 0.0
    %1316 = vmatprep.subr.mxu0 0.0
    %1317 = vmatpush2.msra.mxu0 0.0
    %1318 = vmatprep.subr.mxu0 0.0
    %1319 = vmatpush2.msra.mxu0 0.0
    %1320 = vmatprep.subr.mxu0 0.0
    %1321 = vmatpush2.msra.mxu0 0.0
    %1322 = vmatprep.subr.mxu0 0.0
    %1323 = vmatpush2.msra.mxu0 0.0
    %1324 = vmatprep.subr.mxu0 0.0
    %1325 = vmatpush2.msra.mxu0 0.0
    %1326 = vmatprep.subr.mxu0 0.0
    %1327 = vmatpush2.msra.mxu0 0.0
    %1328 = vmatprep.subr.mxu0 0.0
    %1329 = vmatpush2.msra.mxu0 0.0
    %1330 = vmatprep.subr.mxu0 0.0
    %1331 = vmatpush2.msra.mxu0 0.0
    %1332 = vmatprep.subr.mxu0 0.0
    %1333 = vmatpush2.msra.mxu0 0.0
    %1334 = vmatprep.subr.mxu0 0.0
    %1335 = vmatpush2.msra.mxu0 0.0
    %1336 = vmatprep.subr.mxu0 0.0
    %1337 = vmatpush2.msra.mxu0 0.0
    %1338 = vmatprep.subr.mxu0 0.0
    %1339 = vmatpush2.msra.mxu0 0.0
    %1340 = vmatprep.subr.mxu0 0.0
    %1341 = vmatpush2.msra.mxu0 0.0
    %1342 = vmatprep.mubr.f32.mxu0 0.0
    %1343 = vmatmul.mubr.f32.gmra.mxu0 %v1276
    %v1344 = vpop.f32.mrf.mxu0
    %v1345 = vadd.f32 0.0, %v1344
    %v1346 = vpop.f32.mrf.mxu0
    %1347 = vdwg.mxu0
    %v1348 = vadd.f32 %v1272, %v1345
    %v1349 = vxor.u32 %v1348, 2147483648
    %v1350 = vmul.f32 %v1349, 1.442695
    %v1351 = vpow.pop %v1350
    %v1352 = vadd.f32 %v1351, 1.0
    %v1353 = vrcp.pop %v1352
    %v1354 = vmul.f32 1.0, %v1353
    %v1355 = vmul.f32 %v1354, 2.0
    %v1356 = vsub.f32 %v1355, 1.0
    %v1357 = vmul.f32 %v1354, %v905
    %1359 = vrot.lane.b32.xlu0 %v1356, 64
    %v1360 = vpop.permute.xlu0 %1359
    %v1362 = vmul.f32 %v1354, %v1360
    %1364 = vrot.lane.b32.xlu0 %v1362, 32
    %v1365 = vpop.permute.xlu0 %1364
    %v1367 = vadd.f32 %v1357, %v1365
    %v1368 = vtanh.pop %v1367
    %1370 = vrot.lane.b32.xlu0 %v1368, 64
    %v1371 = vpop.permute.xlu0 %1370
    %v1373 = vmul.f32 %v1354, %v1371
    %vm1374 = vcmp.gt.f32.partialorder %v400, 3.0
    %v1375 = vsel %vm1374, %v1373, %v904
    %v1376 = vsel %vm1374, %v1367, %v905
    %v1377 = vsel %vm1374, %v1373, 0.0
    %1379 = vrot.lane.b32.xlu0 %v906, 32
    %v1380 = vpop.permute.xlu0 %1379
    %v1381 = vsel %vm258, %v1380, 0
    %1383 = vmatprep.subr.mxu0 0.0
    %1384 = vmatpush1.msra.mxu0 0.0
    %1385 = vmatprep.subr.mxu0 0.0
    %1386 = vmatpush1.msra.mxu0 0.0
    %1387 = vmatprep.subr.mxu0 0.0
    %1388 = vmatpush1.msra.mxu0 0.0
    %1389 = vmatprep.subr.mxu0 0.0
    %1390 = vmatpush1.msra.mxu0 0.0
    %1391 = vmatprep.subr.mxu0 0.0
    %1392 = vmatpush1.msra.mxu0 0.0
    %1393 = vmatprep.subr.mxu0 0.0
    %1394 = vmatpush1.msra.mxu0 0.0
    %1395 = vmatprep.subr.mxu0 0.0
    %1396 = vmatpush1.msra.mxu0 0.0
    %1397 = vmatprep.subr.mxu0 0.0
    %1398 = vmatpush1.msra.mxu0 0.0
    %1399 = vmatprep.subr.mxu0 0.0
    %1400 = vmatpush1.msra.mxu0 0.0
    %1401 = vmatprep.subr.mxu0 0.0
    %1402 = vmatpush1.msra.mxu0 0.0
    %1403 = vmatprep.subr.mxu0 0.0
    %1404 = vmatpush1.msra.mxu0 0.0
    %1405 = vmatprep.subr.mxu0 0.0
    %1406 = vmatpush1.msra.mxu0 0.0
    %1407 = vmatprep.subr.mxu0 0.0
    %1408 = vmatpush1.msra.mxu0 %v619
    %1409 = vmatprep.subr.mxu0 0.0
    %1410 = vmatpush1.msra.mxu0 %v618
    %1411 = vmatprep.subr.mxu0 0.0
    %1412 = vmatpush1.msra.mxu0 %v617
    %1413 = vmatprep.subr.mxu0 0.0
    %1414 = vmatpush1.msra.mxu0 %v616
    %1415 = vmatprep.subr.mxu0 0.0
    %1416 = vmatpush2.msra.mxu0 0.0
    %1417 = vmatprep.subr.mxu0 0.0
    %1418 = vmatpush2.msra.mxu0 0.0
    %1419 = vmatprep.subr.mxu0 0.0
    %1420 = vmatpush2.msra.mxu0 0.0
    %1421 = vmatprep.subr.mxu0 0.0
    %1422 = vmatpush2.msra.mxu0 0.0
    %1423 = vmatprep.subr.mxu0 0.0
    %1424 = vmatpush2.msra.mxu0 0.0
    %1425 = vmatprep.subr.mxu0 0.0
    %1426 = vmatpush2.msra.mxu0 0.0
    %1427 = vmatprep.subr.mxu0 0.0
    %1428 = vmatpush2.msra.mxu0 0.0
    %1429 = vmatprep.subr.mxu0 0.0
    %1430 = vmatpush2.msra.mxu0 0.0
    %1431 = vmatprep.subr.mxu0 0.0
    %1432 = vmatpush2.msra.mxu0 0.0
    %1433 = vmatprep.subr.mxu0 0.0
    %1434 = vmatpush2.msra.mxu0 0.0
    %1435 = vmatprep.subr.mxu0 0.0
    %1436 = vmatpush2.msra.mxu0 0.0
    %1437 = vmatprep.subr.mxu0 0.0
    %1438 = vmatpush2.msra.mxu0 0.0
    %1439 = vmatprep.subr.mxu0 0.0
    %1440 = vmatpush2.msra.mxu0 0.0
    %1441 = vmatprep.subr.mxu0 0.0
    %1442 = vmatpush2.msra.mxu0 0.0
    %1443 = vmatprep.subr.mxu0 0.0
    %1444 = vmatpush2.msra.mxu0 0.0
    %1445 = vmatprep.subr.mxu0 0.0
    %1446 = vmatpush2.msra.mxu0 0.0
    %1447 = vmatprep.mubr.f32.mxu0 0.0
    %1448 = vmatmul.mubr.f32.gmra.mxu0 %v1381
    %v1449 = vpop.f32.mrf.mxu0
    %v1450 = vadd.f32 %v626, %v1449
    %v1451 = vpop.f32.mrf.mxu0
    %1452 = vdwg.mxu0
    %1454 = vrot.lane.b32.xlu0 %v1083, 32
    %v1455 = vpop.permute.xlu0 %1454
    %v1456 = vsel %vm258, %v1455, 0
    %1458 = vmatprep.subr.mxu0 0.0
    %1459 = vmatpush1.msra.mxu0 0.0
    %1460 = vmatprep.subr.mxu0 0.0
    %1461 = vmatpush1.msra.mxu0 0.0
    %1462 = vmatprep.subr.mxu0 0.0
    %1463 = vmatpush1.msra.mxu0 0.0
    %1464 = vmatprep.subr.mxu0 0.0
    %1465 = vmatpush1.msra.mxu0 0.0
    %1466 = vmatprep.subr.mxu0 0.0
    %1467 = vmatpush1.msra.mxu0 0.0
    %1468 = vmatprep.subr.mxu0 0.0
    %1469 = vmatpush1.msra.mxu0 0.0
    %1470 = vmatprep.subr.mxu0 0.0
    %1471 = vmatpush1.msra.mxu0 0.0
    %1472 = vmatprep.subr.mxu0 0.0
    %1473 = vmatpush1.msra.mxu0 0.0
    %1474 = vmatprep.subr.mxu0 0.0
    %1475 = vmatpush1.msra.mxu0 0.0
    %1476 = vmatprep.subr.mxu0 0.0
    %1477 = vmatpush1.msra.mxu0 0.0
    %1478 = vmatprep.subr.mxu0 0.0
    %1479 = vmatpush1.msra.mxu0 0.0
    %1480 = vmatprep.subr.mxu0 0.0
    %1481 = vmatpush1.msra.mxu0 0.0
    %1482 = vmatprep.subr.mxu0 0.0
    %1483 = vmatpush1.msra.mxu0 %v702
    %1484 = vmatprep.subr.mxu0 0.0
    %1485 = vmatpush1.msra.mxu0 %v701
    %1486 = vmatprep.subr.mxu0 0.0
    %1487 = vmatpush1.msra.mxu0 %v700
    %1488 = vmatprep.subr.mxu0 0.0
    %1489 = vmatpush1.msra.mxu0 %v699
    %1490 = vmatprep.subr.mxu0 0.0
    %1491 = vmatpush2.msra.mxu0 0.0
    %1492 = vmatprep.subr.mxu0 0.0
    %1493 = vmatpush2.msra.mxu0 0.0
    %1494 = vmatprep.subr.mxu0 0.0
    %1495 = vmatpush2.msra.mxu0 0.0
    %1496 = vmatprep.subr.mxu0 0.0
    %1497 = vmatpush2.msra.mxu0 0.0
    %1498 = vmatprep.subr.mxu0 0.0
    %1499 = vmatpush2.msra.mxu0 0.0
    %1500 = vmatprep.subr.mxu0 0.0
    %1501 = vmatpush2.msra.mxu0 0.0
    %1502 = vmatprep.subr.mxu0 0.0
    %1503 = vmatpush2.msra.mxu0 0.0
    %1504 = vmatprep.subr.mxu0 0.0
    %1505 = vmatpush2.msra.mxu0 0.0
    %1506 = vmatprep.subr.mxu0 0.0
    %1507 = vmatpush2.msra.mxu0 0.0
    %1508 = vmatprep.subr.mxu0 0.0
    %1509 = vmatpush2.msra.mxu0 0.0
    %1510 = vmatprep.subr.mxu0 0.0
    %1511 = vmatpush2.msra.mxu0 0.0
    %1512 = vmatprep.subr.mxu0 0.0
    %1513 = vmatpush2.msra.mxu0 0.0
    %1514 = vmatprep.subr.mxu0 0.0
    %1515 = vmatpush2.msra.mxu0 0.0
    %1516 = vmatprep.subr.mxu0 0.0
    %1517 = vmatpush2.msra.mxu0 0.0
    %1518 = vmatprep.subr.mxu0 0.0
    %1519 = vmatpush2.msra.mxu0 0.0
    %1520 = vmatprep.subr.mxu0 0.0
    %1521 = vmatpush2.msra.mxu0 0.0
    %1522 = vmatprep.mubr.f32.mxu0 0.0
    %1523 = vmatmul.mubr.f32.gmra.mxu0 %v1456
    %v1524 = vpop.f32.mrf.mxu0
    %v1525 = vadd.f32 0.0, %v1524
    %v1526 = vpop.f32.mrf.mxu0
    %1527 = vdwg.mxu0
    %v1528 = vadd.f32 %v1450, %v1525
    %v1529 = vxor.u32 %v1528, 2147483648
    %v1530 = vmul.f32 %v1529, 1.442695
    %v1531 = vpow.pop %v1530
    %v1532 = vadd.f32 %v1531, 1.0
    %v1533 = vrcp.pop %v1532
    %v1534 = vmul.f32 1.0, %v1533
    %v1535 = vmul.f32 %v1534, 2.0
    %v1536 = vsub.f32 %v1535, 1.0
    %v1537 = vmul.f32 %v1534, %v1084
    %1539 = vrot.lane.b32.xlu0 %v1536, 64
    %v1540 = vpop.permute.xlu0 %1539
    %v1542 = vmul.f32 %v1534, %v1540
    %1544 = vrot.lane.b32.xlu0 %v1542, 32
    %v1545 = vpop.permute.xlu0 %1544
    %v1547 = vadd.f32 %v1537, %v1545
    %v1548 = vtanh.pop %v1547
    %1550 = vrot.lane.b32.xlu0 %v1548, 64
    %v1551 = vpop.permute.xlu0 %1550
    %v1553 = vmul.f32 %v1534, %v1551
    %v1554 = vsel %vm903, %v1553, %v1083
    %v1555 = vsel %vm903, %v1547, %v1084
    %v1556 = vsel %vm903, %v1553, 0.0
    %1558 = vrot.lane.b32.xlu0 %v1085, 32
    %v1559 = vpop.permute.xlu0 %1558
    %v1560 = vsel %vm258, %v1559, 0
    %1562 = vmatprep.subr.mxu0 0.0
    %1563 = vmatpush1.msra.mxu0 0.0
    %1564 = vmatprep.subr.mxu0 0.0
    %1565 = vmatpush1.msra.mxu0 0.0
    %1566 = vmatprep.subr.mxu0 0.0
    %1567 = vmatpush1.msra.mxu0 0.0
    %1568 = vmatprep.subr.mxu0 0.0
    %1569 = vmatpush1.msra.mxu0 0.0
    %1570 = vmatprep.subr.mxu0 0.0
    %1571 = vmatpush1.msra.mxu0 0.0
    %1572 = vmatprep.subr.mxu0 0.0
    %1573 = vmatpush1.msra.mxu0 0.0
    %1574 = vmatprep.subr.mxu0 0.0
    %1575 = vmatpush1.msra.mxu0 0.0
    %1576 = vmatprep.subr.mxu0 0.0
    %1577 = vmatpush1.msra.mxu0 0.0
    %1578 = vmatprep.subr.mxu0 0.0
    %1579 = vmatpush1.msra.mxu0 0.0
    %1580 = vmatprep.subr.mxu0 0.0
    %1581 = vmatpush1.msra.mxu0 0.0
    %1582 = vmatprep.subr.mxu0 0.0
    %1583 = vmatpush1.msra.mxu0 0.0
    %1584 = vmatprep.subr.mxu0 0.0
    %1585 = vmatpush1.msra.mxu0 0.0
    %1586 = vmatprep.subr.mxu0 0.0
    %1587 = vmatpush1.msra.mxu0 %v1090
    %1588 = vmatprep.subr.mxu0 0.0
    %1589 = vmatpush1.msra.mxu0 %v1089
    %1590 = vmatprep.subr.mxu0 0.0
    %1591 = vmatpush1.msra.mxu0 %v1088
    %1592 = vmatprep.subr.mxu0 0.0
    %1593 = vmatpush1.msra.mxu0 %v1087
    %1594 = vmatprep.subr.mxu0 0.0
    %1595 = vmatpush2.msra.mxu0 0.0
    %1596 = vmatprep.subr.mxu0 0.0
    %1597 = vmatpush2.msra.mxu0 0.0
    %1598 = vmatprep.subr.mxu0 0.0
    %1599 = vmatpush2.msra.mxu0 0.0
    %1600 = vmatprep.subr.mxu0 0.0
    %1601 = vmatpush2.msra.mxu0 0.0
    %1602 = vmatprep.subr.mxu0 0.0
    %1603 = vmatpush2.msra.mxu0 0.0
    %1604 = vmatprep.subr.mxu0 0.0
    %1605 = vmatpush2.msra.mxu0 0.0
    %1606 = vmatprep.subr.mxu0 0.0
    %1607 = vmatpush2.msra.mxu0 0.0
    %1608 = vmatprep.subr.mxu0 0.0
    %1609 = vmatpush2.msra.mxu0 0.0
    %1610 = vmatprep.subr.mxu0 0.0
    %1611 = vmatpush2.msra.mxu0 0.0
    %1612 = vmatprep.subr.mxu0 0.0
    %1613 = vmatpush2.msra.mxu0 0.0
    %1614 = vmatprep.subr.mxu0 0.0
    %1615 = vmatpush2.msra.mxu0 0.0
    %1616 = vmatprep.subr.mxu0 0.0
    %1617 = vmatpush2.msra.mxu0 0.0
    %1618 = vmatprep.subr.mxu0 0.0
    %1619 = vmatpush2.msra.mxu0 0.0
    %1620 = vmatprep.subr.mxu0 0.0
    %1621 = vmatpush2.msra.mxu0 0.0
    %1622 = vmatprep.subr.mxu0 0.0
    %1623 = vmatpush2.msra.mxu0 0.0
    %1624 = vmatprep.subr.mxu0 0.0
    %1625 = vmatpush2.msra.mxu0 0.0
    %1626 = vmatprep.mubr.f32.mxu0 0.0
    %1627 = vmatmul.mubr.f32.gmra.mxu0 %v1560
    %v1628 = vpop.f32.mrf.mxu0
    %v1629 = vadd.f32 %v1097, %v1628
    %v1630 = vpop.f32.mrf.mxu0
    %1631 = vdwg.mxu0
    %1633 = vrot.lane.b32.xlu0 %v1270, 32
    %v1634 = vpop.permute.xlu0 %1633
    %v1635 = vsel %vm258, %v1634, 0
    %1637 = vmatprep.subr.mxu0 0.0
    %1638 = vmatpush1.msra.mxu0 0.0
    %1639 = vmatprep.subr.mxu0 0.0
    %1640 = vmatpush1.msra.mxu0 0.0
    %1641 = vmatprep.subr.mxu0 0.0
    %1642 = vmatpush1.msra.mxu0 0.0
    %1643 = vmatprep.subr.mxu0 0.0
    %1644 = vmatpush1.msra.mxu0 0.0
    %1645 = vmatprep.subr.mxu0 0.0
    %1646 = vmatpush1.msra.mxu0 0.0
    %1647 = vmatprep.subr.mxu0 0.0
    %1648 = vmatpush1.msra.mxu0 0.0
    %1649 = vmatprep.subr.mxu0 0.0
    %1650 = vmatpush1.msra.mxu0 0.0
    %1651 = vmatprep.subr.mxu0 0.0
    %1652 = vmatpush1.msra.mxu0 0.0
    %1653 = vmatprep.subr.mxu0 0.0
    %1654 = vmatpush1.msra.mxu0 0.0
    %1655 = vmatprep.subr.mxu0 0.0
    %1656 = vmatpush1.msra.mxu0 0.0
    %1657 = vmatprep.subr.mxu0 0.0
    %1658 = vmatpush1.msra.mxu0 0.0
    %1659 = vmatprep.subr.mxu0 0.0
    %1660 = vmatpush1.msra.mxu0 0.0
    %1661 = vmatprep.subr.mxu0 0.0
    %1662 = vmatpush1.msra.mxu0 %v1173
    %1663 = vmatprep.subr.mxu0 0.0
    %1664 = vmatpush1.msra.mxu0 %v1172
    %1665 = vmatprep.subr.mxu0 0.0
    %1666 = vmatpush1.msra.mxu0 %v1171
    %1667 = vmatprep.subr.mxu0 0.0
    %1668 = vmatpush1.msra.mxu0 %v1170
    %1669 = vmatprep.subr.mxu0 0.0
    %1670 = vmatpush2.msra.mxu0 0.0
    %1671 = vmatprep.subr.mxu0 0.0
    %1672 = vmatpush2.msra.mxu0 0.0
    %1673 = vmatprep.subr.mxu0 0.0
    %1674 = vmatpush2.msra.mxu0 0.0
    %1675 = vmatprep.subr.mxu0 0.0
    %1676 = vmatpush2.msra.mxu0 0.0
    %1677 = vmatprep.subr.mxu0 0.0
    %1678 = vmatpush2.msra.mxu0 0.0
    %1679 = vmatprep.subr.mxu0 0.0
    %1680 = vmatpush2.msra.mxu0 0.0
    %1681 = vmatprep.subr.mxu0 0.0
    %1682 = vmatpush2.msra.mxu0 0.0
    %1683 = vmatprep.subr.mxu0 0.0
    %1684 = vmatpush2.msra.mxu0 0.0
    %1685 = vmatprep.subr.mxu0 0.0
    %1686 = vmatpush2.msra.mxu0 0.0
    %1687 = vmatprep.subr.mxu0 0.0
    %1688 = vmatpush2.msra.mxu0 0.0
    %1689 = vmatprep.subr.mxu0 0.0
    %1690 = vmatpush2.msra.mxu0 0.0
    %1691 = vmatprep.subr.mxu0 0.0
    %1692 = vmatpush2.msra.mxu0 0.0
    %1693 = vmatprep.subr.mxu0 0.0
    %1694 = vmatpush2.msra.mxu0 0.0
    %1695 = vmatprep.subr.mxu0 0.0
    %1696 = vmatpush2.msra.mxu0 0.0
    %1697 = vmatprep.subr.mxu0 0.0
    %1698 = vmatpush2.msra.mxu0 0.0
    %1699 = vmatprep.subr.mxu0 0.0
    %1700 = vmatpush2.msra.mxu0 0.0
    %1701 = vmatprep.mubr.f32.mxu0 0.0
    %1702 = vmatmul.mubr.f32.gmra.mxu0 %v1635
    %v1703 = vpop.f32.mrf.mxu0
    %v1704 = vadd.f32 0.0, %v1703
    %v1705 = vpop.f32.mrf.mxu0
    %1706 = vdwg.mxu0
    %v1707 = vadd.f32 %v1629, %v1704
    %v1708 = vxor.u32 %v1707, 2147483648
    %v1709 = vmul.f32 %v1708, 1.442695
    %v1710 = vpow.pop %v1709
    %v1711 = vadd.f32 %v1710, 1.0
    %v1712 = vrcp.pop %v1711
    %v1713 = vmul.f32 1.0, %v1712
    %v1714 = vmul.f32 %v1713, 2.0
    %v1715 = vsub.f32 %v1714, 1.0
    %v1716 = vmul.f32 %v1713, %v1271
    %1718 = vrot.lane.b32.xlu0 %v1715, 64
    %v1719 = vpop.permute.xlu0 %1718
    %v1721 = vmul.f32 %v1713, %v1719
    %1723 = vrot.lane.b32.xlu0 %v1721, 32
    %v1724 = vpop.permute.xlu0 %1723
    %v1726 = vadd.f32 %v1716, %v1724
    %v1727 = vtanh.pop %v1726
    %1729 = vrot.lane.b32.xlu0 %v1727, 64
    %v1730 = vpop.permute.xlu0 %1729
    %v1732 = vmul.f32 %v1713, %v1730
    %v1733 = vsel %vm611, %v1732, %v1270
    %v1734 = vsel %vm611, %v1726, %v1271
    %v1735 = vsel %vm611, %v1732, 0.0
    %v1736 = vld [vmem:[#allocation2 + $0x20] sm:$0xff]
    %1738 = vrot.lane.b32.xlu0 %v1375, 32
    %v1739 = vpop.permute.xlu0 %1738
    %v1740 = vsel %vm258, %v1739, 0
    %1742 = vmatprep.subr.mxu0 0.0
    %1743 = vmatpush1.msra.mxu0 0.0
    %1744 = vmatprep.subr.mxu0 0.0
    %1745 = vmatpush1.msra.mxu0 0.0
    %1746 = vmatprep.subr.mxu0 0.0
    %1747 = vmatpush1.msra.mxu0 0.0
    %1748 = vmatprep.subr.mxu0 0.0
    %1749 = vmatpush1.msra.mxu0 0.0
    %1750 = vmatprep.subr.mxu0 0.0
    %1751 = vmatpush1.msra.mxu0 0.0
    %1752 = vmatprep.subr.mxu0 0.0
    %1753 = vmatpush1.msra.mxu0 0.0
    %1754 = vmatprep.subr.mxu0 0.0
    %1755 = vmatpush1.msra.mxu0 0.0
    %1756 = vmatprep.subr.mxu0 0.0
    %1757 = vmatpush1.msra.mxu0 0.0
    %1758 = vmatprep.subr.mxu0 0.0
    %1759 = vmatpush1.msra.mxu0 0.0
    %1760 = vmatprep.subr.mxu0 0.0
    %1761 = vmatpush1.msra.mxu0 0.0
    %1762 = vmatprep.subr.mxu0 0.0
    %1763 = vmatpush1.msra.mxu0 0.0
    %1764 = vmatprep.subr.mxu0 0.0
    %1765 = vmatpush1.msra.mxu0 0.0
    %1766 = vmatprep.subr.mxu0 0.0
    %1767 = vmatpush1.msra.mxu0 %v406
    %1768 = vmatprep.subr.mxu0 0.0
    %1769 = vmatpush1.msra.mxu0 %v405
    %1770 = vmatprep.subr.mxu0 0.0
    %1771 = vmatpush1.msra.mxu0 %v404
    %1772 = vmatprep.subr.mxu0 0.0
    %1773 = vmatpush1.msra.mxu0 %v403
    %1774 = vmatprep.subr.mxu0 0.0
    %1775 = vmatpush2.msra.mxu0 0.0
    %1776 = vmatprep.subr.mxu0 0.0
    %1777 = vmatpush2.msra.mxu0 0.0
    %1778 = vmatprep.subr.mxu0 0.0
    %1779 = vmatpush2.msra.mxu0 0.0
    %1780 = vmatprep.subr.mxu0 0.0
    %1781 = vmatpush2.msra.mxu0 0.0
    %1782 = vmatprep.subr.mxu0 0.0
    %1783 = vmatpush2.msra.mxu0 0.0
    %1784 = vmatprep.subr.mxu0 0.0
    %1785 = vmatpush2.msra.mxu0 0.0
    %1786 = vmatprep.subr.mxu0 0.0
    %1787 = vmatpush2.msra.mxu0 0.0
    %1788 = vmatprep.subr.mxu0 0.0
    %1789 = vmatpush2.msra.mxu0 0.0
    %1790 = vmatprep.subr.mxu0 0.0
    %1791 = vmatpush2.msra.mxu0 0.0
    %1792 = vmatprep.subr.mxu0 0.0
    %1793 = vmatpush2.msra.mxu0 0.0
    %1794 = vmatprep.subr.mxu0 0.0
    %1795 = vmatpush2.msra.mxu0 0.0
    %1796 = vmatprep.subr.mxu0 0.0
    %1797 = vmatpush2.msra.mxu0 0.0
    %1798 = vmatprep.subr.mxu0 0.0
    %1799 = vmatpush2.msra.mxu0 0.0
    %1800 = vmatprep.subr.mxu0 0.0
    %1801 = vmatpush2.msra.mxu0 0.0
    %1802 = vmatprep.subr.mxu0 0.0
    %1803 = vmatpush2.msra.mxu0 0.0
    %1804 = vmatprep.subr.mxu0 0.0
    %1805 = vmatpush2.msra.mxu0 0.0
    %1806 = vmatprep.mubr.f32.mxu0 0.0
    %1807 = vmatmul.mubr.f32.gmra.mxu0 %v1740
    %v1808 = vpop.f32.mrf.mxu0
    %v1809 = vadd.f32 0.0, %v1808
    %v1810 = vpop.f32.mrf.mxu0
    %1811 = vdwg.mxu0
    %v1812 = vadd.f32 %v1736, %v1809
    %v1813 = vxor.u32 %v1812, 2147483648
    %v1814 = vmul.f32 %v1813, 1.442695
    %v1815 = vpow.pop %v1814
    %v1816 = vadd.f32 %v1815, 1.0
    %v1817 = vrcp.pop %v1816
    %v1818 = vmul.f32 1.0, %v1817
    %v1819 = vmul.f32 %v1818, 2.0
    %v1820 = vsub.f32 %v1819, 1.0
    %v1821 = vmul.f32 %v1818, %v1376
    %1823 = vrot.lane.b32.xlu0 %v1820, 64
    %v1824 = vpop.permute.xlu0 %1823
    %v1826 = vmul.f32 %v1818, %v1824
    %1828 = vrot.lane.b32.xlu0 %v1826, 32
    %v1829 = vpop.permute.xlu0 %1828
    %v1831 = vadd.f32 %v1821, %v1829
    %v1832 = vtanh.pop %v1831
    %1834 = vrot.lane.b32.xlu0 %v1832, 64
    %v1835 = vpop.permute.xlu0 %1834
    %v1837 = vmul.f32 %v1818, %v1835
    %vm1838 = vcmp.gt.f32.partialorder %v400, 4.0
    %v1839 = vsel %vm1838, %v1837, %v1375
    %v1840 = vsel %vm1838, %v1831, %v1376
    %v1841 = vsel %vm1838, %v1837, 0.0
    %1843 = vrot.lane.b32.xlu0 %v1377, 32
    %v1844 = vpop.permute.xlu0 %1843
    %v1845 = vsel %vm258, %v1844, 0
    %1847 = vmatprep.subr.mxu0 0.0
    %1848 = vmatpush1.msra.mxu0 0.0
    %1849 = vmatprep.subr.mxu0 0.0
    %1850 = vmatpush1.msra.mxu0 0.0
    %1851 = vmatprep.subr.mxu0 0.0
    %1852 = vmatpush1.msra.mxu0 0.0
    %1853 = vmatprep.subr.mxu0 0.0
    %1854 = vmatpush1.msra.mxu0 0.0
    %1855 = vmatprep.subr.mxu0 0.0
    %1856 = vmatpush1.msra.mxu0 0.0
    %1857 = vmatprep.subr.mxu0 0.0
    %1858 = vmatpush1.msra.mxu0 0.0
    %1859 = vmatprep.subr.mxu0 0.0
    %1860 = vmatpush1.msra.mxu0 0.0
    %1861 = vmatprep.subr.mxu0 0.0
    %1862 = vmatpush1.msra.mxu0 0.0
    %1863 = vmatprep.subr.mxu0 0.0
    %1864 = vmatpush1.msra.mxu0 0.0
    %1865 = vmatprep.subr.mxu0 0.0
    %1866 = vmatpush1.msra.mxu0 0.0
    %1867 = vmatprep.subr.mxu0 0.0
    %1868 = vmatpush1.msra.mxu0 0.0
    %1869 = vmatprep.subr.mxu0 0.0
    %1870 = vmatpush1.msra.mxu0 0.0
    %1871 = vmatprep.subr.mxu0 0.0
    %1872 = vmatpush1.msra.mxu0 %v619
    %1873 = vmatprep.subr.mxu0 0.0
    %1874 = vmatpush1.msra.mxu0 %v618
    %1875 = vmatprep.subr.mxu0 0.0
    %1876 = vmatpush1.msra.mxu0 %v617
    %1877 = vmatprep.subr.mxu0 0.0
    %1878 = vmatpush1.msra.mxu0 %v616
    %1879 = vmatprep.subr.mxu0 0.0
    %1880 = vmatpush2.msra.mxu0 0.0
    %1881 = vmatprep.subr.mxu0 0.0
    %1882 = vmatpush2.msra.mxu0 0.0
    %1883 = vmatprep.subr.mxu0 0.0
    %1884 = vmatpush2.msra.mxu0 0.0
    %1885 = vmatprep.subr.mxu0 0.0
    %1886 = vmatpush2.msra.mxu0 0.0
    %1887 = vmatprep.subr.mxu0 0.0
    %1888 = vmatpush2.msra.mxu0 0.0
    %1889 = vmatprep.subr.mxu0 0.0
    %1890 = vmatpush2.msra.mxu0 0.0
    %1891 = vmatprep.subr.mxu0 0.0
    %1892 = vmatpush2.msra.mxu0 0.0
    %1893 = vmatprep.subr.mxu0 0.0
    %1894 = vmatpush2.msra.mxu0 0.0
    %1895 = vmatprep.subr.mxu0 0.0
    %1896 = vmatpush2.msra.mxu0 0.0
    %1897 = vmatprep.subr.mxu0 0.0
    %1898 = vmatpush2.msra.mxu0 0.0
    %1899 = vmatprep.subr.mxu0 0.0
    %1900 = vmatpush2.msra.mxu0 0.0
    %1901 = vmatprep.subr.mxu0 0.0
    %1902 = vmatpush2.msra.mxu0 0.0
    %1903 = vmatprep.subr.mxu0 0.0
    %1904 = vmatpush2.msra.mxu0 0.0
    %1905 = vmatprep.subr.mxu0 0.0
    %1906 = vmatpush2.msra.mxu0 0.0
    %1907 = vmatprep.subr.mxu0 0.0
    %1908 = vmatpush2.msra.mxu0 0.0
    %1909 = vmatprep.subr.mxu0 0.0
    %1910 = vmatpush2.msra.mxu0 0.0
    %1911 = vmatprep.mubr.f32.mxu0 0.0
    %1912 = vmatmul.mubr.f32.gmra.mxu0 %v1845
    %v1913 = vpop.f32.mrf.mxu0
    %v1914 = vadd.f32 %v626, %v1913
    %v1915 = vpop.f32.mrf.mxu0
    %1916 = vdwg.mxu0
    %1918 = vrot.lane.b32.xlu0 %v1554, 32
    %v1919 = vpop.permute.xlu0 %1918
    %v1920 = vsel %vm258, %v1919, 0
    %1922 = vmatprep.subr.mxu0 0.0
    %1923 = vmatpush1.msra.mxu0 0.0
    %1924 = vmatprep.subr.mxu0 0.0
    %1925 = vmatpush1.msra.mxu0 0.0
    %1926 = vmatprep.subr.mxu0 0.0
    %1927 = vmatpush1.msra.mxu0 0.0
    %1928 = vmatprep.subr.mxu0 0.0
    %1929 = vmatpush1.msra.mxu0 0.0
    %1930 = vmatprep.subr.mxu0 0.0
    %1931 = vmatpush1.msra.mxu0 0.0
    %1932 = vmatprep.subr.mxu0 0.0
    %1933 = vmatpush1.msra.mxu0 0.0
    %1934 = vmatprep.subr.mxu0 0.0
    %1935 = vmatpush1.msra.mxu0 0.0
    %1936 = vmatprep.subr.mxu0 0.0
    %1937 = vmatpush1.msra.mxu0 0.0
    %1938 = vmatprep.subr.mxu0 0.0
    %1939 = vmatpush1.msra.mxu0 0.0
    %1940 = vmatprep.subr.mxu0 0.0
    %1941 = vmatpush1.msra.mxu0 0.0
    %1942 = vmatprep.subr.mxu0 0.0
    %1943 = vmatpush1.msra.mxu0 0.0
    %1944 = vmatprep.subr.mxu0 0.0
    %1945 = vmatpush1.msra.mxu0 0.0
    %1946 = vmatprep.subr.mxu0 0.0
    %1947 = vmatpush1.msra.mxu0 %v702
    %1948 = vmatprep.subr.mxu0 0.0
    %1949 = vmatpush1.msra.mxu0 %v701
    %1950 = vmatprep.subr.mxu0 0.0
    %1951 = vmatpush1.msra.mxu0 %v700
    %1952 = vmatprep.subr.mxu0 0.0
    %1953 = vmatpush1.msra.mxu0 %v699
    %1954 = vmatprep.subr.mxu0 0.0
    %1955 = vmatpush2.msra.mxu0 0.0
    %1956 = vmatprep.subr.mxu0 0.0
    %1957 = vmatpush2.msra.mxu0 0.0
    %1958 = vmatprep.subr.mxu0 0.0
    %1959 = vmatpush2.msra.mxu0 0.0
    %1960 = vmatprep.subr.mxu0 0.0
    %1961 = vmatpush2.msra.mxu0 0.0
    %1962 = vmatprep.subr.mxu0 0.0
    %1963 = vmatpush2.msra.mxu0 0.0
    %1964 = vmatprep.subr.mxu0 0.0
    %1965 = vmatpush2.msra.mxu0 0.0
    %1966 = vmatprep.subr.mxu0 0.0
    %1967 = vmatpush2.msra.mxu0 0.0
    %1968 = vmatprep.subr.mxu0 0.0
    %1969 = vmatpush2.msra.mxu0 0.0
    %1970 = vmatprep.subr.mxu0 0.0
    %1971 = vmatpush2.msra.mxu0 0.0
    %1972 = vmatprep.subr.mxu0 0.0
    %1973 = vmatpush2.msra.mxu0 0.0
    %1974 = vmatprep.subr.mxu0 0.0
    %1975 = vmatpush2.msra.mxu0 0.0
    %1976 = vmatprep.subr.mxu0 0.0
    %1977 = vmatpush2.msra.mxu0 0.0
    %1978 = vmatprep.subr.mxu0 0.0
    %1979 = vmatpush2.msra.mxu0 0.0
    %1980 = vmatprep.subr.mxu0 0.0
    %1981 = vmatpush2.msra.mxu0 0.0
    %1982 = vmatprep.subr.mxu0 0.0
    %1983 = vmatpush2.msra.mxu0 0.0
    %1984 = vmatprep.subr.mxu0 0.0
    %1985 = vmatpush2.msra.mxu0 0.0
    %1986 = vmatprep.mubr.f32.mxu0 0.0
    %1987 = vmatmul.mubr.f32.gmra.mxu0 %v1920
    %v1988 = vpop.f32.mrf.mxu0
    %v1989 = vadd.f32 0.0, %v1988
    %v1990 = vpop.f32.mrf.mxu0
    %1991 = vdwg.mxu0
    %v1992 = vadd.f32 %v1914, %v1989
    %v1993 = vxor.u32 %v1992, 2147483648
    %v1994 = vmul.f32 %v1993, 1.442695
    %v1995 = vpow.pop %v1994
    %v1996 = vadd.f32 %v1995, 1.0
    %v1997 = vrcp.pop %v1996
    %v1998 = vmul.f32 1.0, %v1997
    %v1999 = vmul.f32 %v1998, 2.0
    %v2000 = vsub.f32 %v1999, 1.0
    %v2001 = vmul.f32 %v1998, %v1555
    %2003 = vrot.lane.b32.xlu0 %v2000, 64
    %v2004 = vpop.permute.xlu0 %2003
    %v2006 = vmul.f32 %v1998, %v2004
    %2008 = vrot.lane.b32.xlu0 %v2006, 32
    %v2009 = vpop.permute.xlu0 %2008
    %v2011 = vadd.f32 %v2001, %v2009
    %v2012 = vtanh.pop %v2011
    %2014 = vrot.lane.b32.xlu0 %v2012, 64
    %v2015 = vpop.permute.xlu0 %2014
    %v2017 = vmul.f32 %v1998, %v2015
    %v2018 = vsel %vm1374, %v2017, %v1554
    %v2019 = vsel %vm1374, %v2011, %v1555
    %v2020 = vsel %vm1374, %v2017, 0.0
    %2022 = vrot.lane.b32.xlu0 %v1556, 32
    %v2023 = vpop.permute.xlu0 %2022
    %v2024 = vsel %vm258, %v2023, 0
    %2026 = vmatprep.subr.mxu0 0.0
    %2027 = vmatpush1.msra.mxu0 0.0
    %2028 = vmatprep.subr.mxu0 0.0
    %2029 = vmatpush1.msra.mxu0 0.0
    %2030 = vmatprep.subr.mxu0 0.0
    %2031 = vmatpush1.msra.mxu0 0.0
    %2032 = vmatprep.subr.mxu0 0.0
    %2033 = vmatpush1.msra.mxu0 0.0
    %2034 = vmatprep.subr.mxu0 0.0
    %2035 = vmatpush1.msra.mxu0 0.0
    %2036 = vmatprep.subr.mxu0 0.0
    %2037 = vmatpush1.msra.mxu0 0.0
    %2038 = vmatprep.subr.mxu0 0.0
    %2039 = vmatpush1.msra.mxu0 0.0
    %2040 = vmatprep.subr.mxu0 0.0
    %2041 = vmatpush1.msra.mxu0 0.0
    %2042 = vmatprep.subr.mxu0 0.0
    %2043 = vmatpush1.msra.mxu0 0.0
    %2044 = vmatprep.subr.mxu0 0.0
    %2045 = vmatpush1.msra.mxu0 0.0
    %2046 = vmatprep.subr.mxu0 0.0
    %2047 = vmatpush1.msra.mxu0 0.0
    %2048 = vmatprep.subr.mxu0 0.0
    %2049 = vmatpush1.msra.mxu0 0.0
    %2050 = vmatprep.subr.mxu0 0.0
    %2051 = vmatpush1.msra.mxu0 %v1090
    %2052 = vmatprep.subr.mxu0 0.0
    %2053 = vmatpush1.msra.mxu0 %v1089
    %2054 = vmatprep.subr.mxu0 0.0
    %2055 = vmatpush1.msra.mxu0 %v1088
    %2056 = vmatprep.subr.mxu0 0.0
    %2057 = vmatpush1.msra.mxu0 %v1087
    %2058 = vmatprep.subr.mxu0 0.0
    %2059 = vmatpush2.msra.mxu0 0.0
    %2060 = vmatprep.subr.mxu0 0.0
    %2061 = vmatpush2.msra.mxu0 0.0
    %2062 = vmatprep.subr.mxu0 0.0
    %2063 = vmatpush2.msra.mxu0 0.0
    %2064 = vmatprep.subr.mxu0 0.0
    %2065 = vmatpush2.msra.mxu0 0.0
    %2066 = vmatprep.subr.mxu0 0.0
    %2067 = vmatpush2.msra.mxu0 0.0
    %2068 = vmatprep.subr.mxu0 0.0
    %2069 = vmatpush2.msra.mxu0 0.0
    %2070 = vmatprep.subr.mxu0 0.0
    %2071 = vmatpush2.msra.mxu0 0.0
    %2072 = vmatprep.subr.mxu0 0.0
    %2073 = vmatpush2.msra.mxu0 0.0
    %2074 = vmatprep.subr.mxu0 0.0
    %2075 = vmatpush2.msra.mxu0 0.0
    %2076 = vmatprep.subr.mxu0 0.0
    %2077 = vmatpush2.msra.mxu0 0.0
    %2078 = vmatprep.subr.mxu0 0.0
    %2079 = vmatpush2.msra.mxu0 0.0
    %2080 = vmatprep.subr.mxu0 0.0
    %2081 = vmatpush2.msra.mxu0 0.0
    %2082 = vmatprep.subr.mxu0 0.0
    %2083 = vmatpush2.msra.mxu0 0.0
    %2084 = vmatprep.subr.mxu0 0.0
    %2085 = vmatpush2.msra.mxu0 0.0
    %2086 = vmatprep.subr.mxu0 0.0
    %2087 = vmatpush2.msra.mxu0 0.0
    %2088 = vmatprep.subr.mxu0 0.0
    %2089 = vmatpush2.msra.mxu0 0.0
    %2090 = vmatprep.mubr.f32.mxu0 0.0
    %2091 = vmatmul.mubr.f32.gmra.mxu0 %v2024
    %v2092 = vpop.f32.mrf.mxu0
    %v2093 = vadd.f32 %v1097, %v2092
    %v2094 = vpop.f32.mrf.mxu0
    %2095 = vdwg.mxu0
    %2097 = vrot.lane.b32.xlu0 %v1733, 32
    %v2098 = vpop.permute.xlu0 %2097
    %v2099 = vsel %vm258, %v2098, 0
    %2101 = vmatprep.subr.mxu0 0.0
    %2102 = vmatpush1.msra.mxu0 0.0
    %2103 = vmatprep.subr.mxu0 0.0
    %2104 = vmatpush1.msra.mxu0 0.0
    %2105 = vmatprep.subr.mxu0 0.0
    %2106 = vmatpush1.msra.mxu0 0.0
    %2107 = vmatprep.subr.mxu0 0.0
    %2108 = vmatpush1.msra.mxu0 0.0
    %2109 = vmatprep.subr.mxu0 0.0
    %2110 = vmatpush1.msra.mxu0 0.0
    %2111 = vmatprep.subr.mxu0 0.0
    %2112 = vmatpush1.msra.mxu0 0.0
    %2113 = vmatprep.subr.mxu0 0.0
    %2114 = vmatpush1.msra.mxu0 0.0
    %2115 = vmatprep.subr.mxu0 0.0
    %2116 = vmatpush1.msra.mxu0 0.0
    %2117 = vmatprep.subr.mxu0 0.0
    %2118 = vmatpush1.msra.mxu0 0.0
    %2119 = vmatprep.subr.mxu0 0.0
    %2120 = vmatpush1.msra.mxu0 0.0
    %2121 = vmatprep.subr.mxu0 0.0
    %2122 = vmatpush1.msra.mxu0 0.0
    %2123 = vmatprep.subr.mxu0 0.0
    %2124 = vmatpush1.msra.mxu0 0.0
    %2125 = vmatprep.subr.mxu0 0.0
    %2126 = vmatpush1.msra.mxu0 %v1173
    %2127 = vmatprep.subr.mxu0 0.0
    %2128 = vmatpush1.msra.mxu0 %v1172
    %2129 = vmatprep.subr.mxu0 0.0
    %2130 = vmatpush1.msra.mxu0 %v1171
    %2131 = vmatprep.subr.mxu0 0.0
    %2132 = vmatpush1.msra.mxu0 %v1170
    %2133 = vmatprep.subr.mxu0 0.0
    %2134 = vmatpush2.msra.mxu0 0.0
    %2135 = vmatprep.subr.mxu0 0.0
    %2136 = vmatpush2.msra.mxu0 0.0
    %2137 = vmatprep.subr.mxu0 0.0
    %2138 = vmatpush2.msra.mxu0 0.0
    %2139 = vmatprep.subr.mxu0 0.0
    %2140 = vmatpush2.msra.mxu0 0.0
    %2141 = vmatprep.subr.mxu0 0.0
    %2142 = vmatpush2.msra.mxu0 0.0
    %2143 = vmatprep.subr.mxu0 0.0
    %2144 = vmatpush2.msra.mxu0 0.0
    %2145 = vmatprep.subr.mxu0 0.0
    %2146 = vmatpush2.msra.mxu0 0.0
    %2147 = vmatprep.subr.mxu0 0.0
    %2148 = vmatpush2.msra.mxu0 0.0
    %2149 = vmatprep.subr.mxu0 0.0
    %2150 = vmatpush2.msra.mxu0 0.0
    %2151 = vmatprep.subr.mxu0 0.0
    %2152 = vmatpush2.msra.mxu0 0.0
    %2153 = vmatprep.subr.mxu0 0.0
    %2154 = vmatpush2.msra.mxu0 0.0
    %2155 = vmatprep.subr.mxu0 0.0
    %2156 = vmatpush2.msra.mxu0 0.0
    %2157 = vmatprep.subr.mxu0 0.0
    %2158 = vmatpush2.msra.mxu0 0.0
    %2159 = vmatprep.subr.mxu0 0.0
    %2160 = vmatpush2.msra.mxu0 0.0
    %2161 = vmatprep.subr.mxu0 0.0
    %2162 = vmatpush2.msra.mxu0 0.0
    %2163 = vmatprep.subr.mxu0 0.0
    %2164 = vmatpush2.msra.mxu0 0.0
    %2165 = vmatprep.mubr.f32.mxu0 0.0
    %2166 = vmatmul.mubr.f32.gmra.mxu0 %v2099
    %v2167 = vpop.f32.mrf.mxu0
    %v2168 = vadd.f32 0.0, %v2167
    %v2169 = vpop.f32.mrf.mxu0
    %2170 = vdwg.mxu0
    %v2171 = vadd.f32 %v2093, %v2168
    %v2172 = vxor.u32 %v2171, 2147483648
    %v2173 = vmul.f32 %v2172, 1.442695
    %v2174 = vpow.pop %v2173
    %v2175 = vadd.f32 %v2174, 1.0
    %v2176 = vrcp.pop %v2175
    %v2177 = vmul.f32 1.0, %v2176
    %v2178 = vmul.f32 %v2177, 2.0
    %v2179 = vsub.f32 %v2178, 1.0
    %v2180 = vmul.f32 %v2177, %v1734
    %2182 = vrot.lane.b32.xlu0 %v2179, 64
    %v2183 = vpop.permute.xlu0 %2182
    %v2185 = vmul.f32 %v2177, %v2183
    %2187 = vrot.lane.b32.xlu0 %v2185, 32
    %v2188 = vpop.permute.xlu0 %2187
    %v2190 = vadd.f32 %v2180, %v2188
    %v2191 = vtanh.pop %v2190
    %2193 = vrot.lane.b32.xlu0 %v2191, 64
    %v2194 = vpop.permute.xlu0 %2193
    %v2196 = vmul.f32 %v2177, %v2194
    %v2197 = vsel %vm903, %v2196, %v1733
    %v2198 = vsel %vm903, %v2190, %v1734
    %v2199 = vsel %vm903, %v2196, 0.0
    %v2200 = vld [vmem:[#allocation2 + $0x28] sm:$0xff]
    %2202 = vrot.lane.b32.xlu0 %v1839, 32
    %v2203 = vpop.permute.xlu0 %2202
    %v2204 = vsel %vm258, %v2203, 0
    %2206 = vmatprep.subr.mxu0 0.0
    %2207 = vmatpush1.msra.mxu0 0.0
    %2208 = vmatprep.subr.mxu0 0.0
    %2209 = vmatpush1.msra.mxu0 0.0
    %2210 = vmatprep.subr.mxu0 0.0
    %2211 = vmatpush1.msra.mxu0 0.0
    %2212 = vmatprep.subr.mxu0 0.0
    %2213 = vmatpush1.msra.mxu0 0.0
    %2214 = vmatprep.subr.mxu0 0.0
    %2215 = vmatpush1.msra.mxu0 0.0
    %2216 = vmatprep.subr.mxu0 0.0
    %2217 = vmatpush1.msra.mxu0 0.0
    %2218 = vmatprep.subr.mxu0 0.0
    %2219 = vmatpush1.msra.mxu0 0.0
    %2220 = vmatprep.subr.mxu0 0.0
    %2221 = vmatpush1.msra.mxu0 0.0
    %2222 = vmatprep.subr.mxu0 0.0
    %2223 = vmatpush1.msra.mxu0 0.0
    %2224 = vmatprep.subr.mxu0 0.0
    %2225 = vmatpush1.msra.mxu0 0.0
    %2226 = vmatprep.subr.mxu0 0.0
    %2227 = vmatpush1.msra.mxu0 0.0
    %2228 = vmatprep.subr.mxu0 0.0
    %2229 = vmatpush1.msra.mxu0 0.0
    %2230 = vmatprep.subr.mxu0 0.0
    %2231 = vmatpush1.msra.mxu0 %v406
    %2232 = vmatprep.subr.mxu0 0.0
    %2233 = vmatpush1.msra.mxu0 %v405
    %2234 = vmatprep.subr.mxu0 0.0
    %2235 = vmatpush1.msra.mxu0 %v404
    %2236 = vmatprep.subr.mxu0 0.0
    %2237 = vmatpush1.msra.mxu0 %v403
    %2238 = vmatprep.subr.mxu0 0.0
    %2239 = vmatpush2.msra.mxu0 0.0
    %2240 = vmatprep.subr.mxu0 0.0
    %2241 = vmatpush2.msra.mxu0 0.0
    %2242 = vmatprep.subr.mxu0 0.0
    %2243 = vmatpush2.msra.mxu0 0.0
    %2244 = vmatprep.subr.mxu0 0.0
    %2245 = vmatpush2.msra.mxu0 0.0
    %2246 = vmatprep.subr.mxu0 0.0
    %2247 = vmatpush2.msra.mxu0 0.0
    %2248 = vmatprep.subr.mxu0 0.0
    %2249 = vmatpush2.msra.mxu0 0.0
    %2250 = vmatprep.subr.mxu0 0.0
    %2251 = vmatpush2.msra.mxu0 0.0
    %2252 = vmatprep.subr.mxu0 0.0
    %2253 = vmatpush2.msra.mxu0 0.0
    %2254 = vmatprep.subr.mxu0 0.0
    %2255 = vmatpush2.msra.mxu0 0.0
    %2256 = vmatprep.subr.mxu0 0.0
    %2257 = vmatpush2.msra.mxu0 0.0
    %2258 = vmatprep.subr.mxu0 0.0
    %2259 = vmatpush2.msra.mxu0 0.0
    %2260 = vmatprep.subr.mxu0 0.0
    %2261 = vmatpush2.msra.mxu0 0.0
    %2262 = vmatprep.subr.mxu0 0.0
    %2263 = vmatpush2.msra.mxu0 0.0
    %2264 = vmatprep.subr.mxu0 0.0
    %2265 = vmatpush2.msra.mxu0 0.0
    %2266 = vmatprep.subr.mxu0 0.0
    %2267 = vmatpush2.msra.mxu0 0.0
    %2268 = vmatprep.subr.mxu0 0.0
    %2269 = vmatpush2.msra.mxu0 0.0
    %2270 = vmatprep.mubr.f32.mxu0 0.0
    %2271 = vmatmul.mubr.f32.gmra.mxu0 %v2204
    %v2272 = vpop.f32.mrf.mxu0
    %v2273 = vadd.f32 0.0, %v2272
    %v2274 = vpop.f32.mrf.mxu0
    %2275 = vdwg.mxu0
    %v2276 = vadd.f32 %v2200, %v2273
    %v2277 = vxor.u32 %v2276, 2147483648
    %v2278 = vmul.f32 %v2277, 1.442695
    %v2279 = vpow.pop %v2278
    %v2280 = vadd.f32 %v2279, 1.0
    %v2281 = vrcp.pop %v2280
    %v2282 = vmul.f32 1.0, %v2281
    %v2283 = vmul.f32 %v2282, 2.0
    %v2284 = vsub.f32 %v2283, 1.0
    %v2285 = vmul.f32 %v2282, %v1840
    %2287 = vrot.lane.b32.xlu0 %v2284, 64
    %v2288 = vpop.permute.xlu0 %2287
    %v2290 = vmul.f32 %v2282, %v2288
    %2292 = vrot.lane.b32.xlu0 %v2290, 32
    %v2293 = vpop.permute.xlu0 %2292
    %v2295 = vadd.f32 %v2285, %v2293
    %v2296 = vtanh.pop %v2295
    %2298 = vrot.lane.b32.xlu0 %v2296, 64
    %v2299 = vpop.permute.xlu0 %2298
    %v2301 = vmul.f32 %v2282, %v2299
    %vm2302 = vcmp.gt.f32.partialorder %v400, 5.0
    %v2303 = vsel %vm2302, %v2301, %v1839
    %v2304 = vsel %vm2302, %v2295, %v1840
    %v2305 = vsel %vm2302, %v2301, 0.0
    %2307 = vrot.lane.b32.xlu0 %v1841, 32
    %v2308 = vpop.permute.xlu0 %2307
    %v2309 = vsel %vm258, %v2308, 0
    %2311 = vmatprep.subr.mxu0 0.0
    %2312 = vmatpush1.msra.mxu0 0.0
    %2313 = vmatprep.subr.mxu0 0.0
    %2314 = vmatpush1.msra.mxu0 0.0
    %2315 = vmatprep.subr.mxu0 0.0
    %2316 = vmatpush1.msra.mxu0 0.0
    %2317 = vmatprep.subr.mxu0 0.0
    %2318 = vmatpush1.msra.mxu0 0.0
    %2319 = vmatprep.subr.mxu0 0.0
    %2320 = vmatpush1.msra.mxu0 0.0
    %2321 = vmatprep.subr.mxu0 0.0
    %2322 = vmatpush1.msra.mxu0 0.0
    %2323 = vmatprep.subr.mxu0 0.0
    %2324 = vmatpush1.msra.mxu0 0.0
    %2325 = vmatprep.subr.mxu0 0.0
    %2326 = vmatpush1.msra.mxu0 0.0
    %2327 = vmatprep.subr.mxu0 0.0
    %2328 = vmatpush1.msra.mxu0 0.0
    %2329 = vmatprep.subr.mxu0 0.0
    %2330 = vmatpush1.msra.mxu0 0.0
    %2331 = vmatprep.subr.mxu0 0.0
    %2332 = vmatpush1.msra.mxu0 0.0
    %2333 = vmatprep.subr.mxu0 0.0
    %2334 = vmatpush1.msra.mxu0 0.0
    %2335 = vmatprep.subr.mxu0 0.0
    %2336 = vmatpush1.msra.mxu0 %v619
    %2337 = vmatprep.subr.mxu0 0.0
    %2338 = vmatpush1.msra.mxu0 %v618
    %2339 = vmatprep.subr.mxu0 0.0
    %2340 = vmatpush1.msra.mxu0 %v617
    %2341 = vmatprep.subr.mxu0 0.0
    %2342 = vmatpush1.msra.mxu0 %v616
    %2343 = vmatprep.subr.mxu0 0.0
    %2344 = vmatpush2.msra.mxu0 0.0
    %2345 = vmatprep.subr.mxu0 0.0
    %2346 = vmatpush2.msra.mxu0 0.0
    %2347 = vmatprep.subr.mxu0 0.0
    %2348 = vmatpush2.msra.mxu0 0.0
    %2349 = vmatprep.subr.mxu0 0.0
    %2350 = vmatpush2.msra.mxu0 0.0
    %2351 = vmatprep.subr.mxu0 0.0
    %2352 = vmatpush2.msra.mxu0 0.0
    %2353 = vmatprep.subr.mxu0 0.0
    %2354 = vmatpush2.msra.mxu0 0.0
    %2355 = vmatprep.subr.mxu0 0.0
    %2356 = vmatpush2.msra.mxu0 0.0
    %2357 = vmatprep.subr.mxu0 0.0
    %2358 = vmatpush2.msra.mxu0 0.0
    %2359 = vmatprep.subr.mxu0 0.0
    %2360 = vmatpush2.msra.mxu0 0.0
    %2361 = vmatprep.subr.mxu0 0.0
    %2362 = vmatpush2.msra.mxu0 0.0
    %2363 = vmatprep.subr.mxu0 0.0
    %2364 = vmatpush2.msra.mxu0 0.0
    %2365 = vmatprep.subr.mxu0 0.0
    %2366 = vmatpush2.msra.mxu0 0.0
    %2367 = vmatprep.subr.mxu0 0.0
    %2368 = vmatpush2.msra.mxu0 0.0
    %2369 = vmatprep.subr.mxu0 0.0
    %2370 = vmatpush2.msra.mxu0 0.0
    %2371 = vmatprep.subr.mxu0 0.0
    %2372 = vmatpush2.msra.mxu0 0.0
    %2373 = vmatprep.subr.mxu0 0.0
    %2374 = vmatpush2.msra.mxu0 0.0
    %2375 = vmatprep.mubr.f32.mxu0 0.0
    %2376 = vmatmul.mubr.f32.gmra.mxu0 %v2309
    %v2377 = vpop.f32.mrf.mxu0
    %v2378 = vadd.f32 %v626, %v2377
    %v2379 = vpop.f32.mrf.mxu0
    %2380 = vdwg.mxu0
    %2382 = vrot.lane.b32.xlu0 %v2018, 32
    %v2383 = vpop.permute.xlu0 %2382
    %v2384 = vsel %vm258, %v2383, 0
    %2386 = vmatprep.subr.mxu0 0.0
    %2387 = vmatpush1.msra.mxu0 0.0
    %2388 = vmatprep.subr.mxu0 0.0
    %2389 = vmatpush1.msra.mxu0 0.0
    %2390 = vmatprep.subr.mxu0 0.0
    %2391 = vmatpush1.msra.mxu0 0.0
    %2392 = vmatprep.subr.mxu0 0.0
    %2393 = vmatpush1.msra.mxu0 0.0
    %2394 = vmatprep.subr.mxu0 0.0
    %2395 = vmatpush1.msra.mxu0 0.0
    %2396 = vmatprep.subr.mxu0 0.0
    %2397 = vmatpush1.msra.mxu0 0.0
    %2398 = vmatprep.subr.mxu0 0.0
    %2399 = vmatpush1.msra.mxu0 0.0
    %2400 = vmatprep.subr.mxu0 0.0
    %2401 = vmatpush1.msra.mxu0 0.0
    %2402 = vmatprep.subr.mxu0 0.0
    %2403 = vmatpush1.msra.mxu0 0.0
    %2404 = vmatprep.subr.mxu0 0.0
    %2405 = vmatpush1.msra.mxu0 0.0
    %2406 = vmatprep.subr.mxu0 0.0
    %2407 = vmatpush1.msra.mxu0 0.0
    %2408 = vmatprep.subr.mxu0 0.0
    %2409 = vmatpush1.msra.mxu0 0.0
    %2410 = vmatprep.subr.mxu0 0.0
    %2411 = vmatpush1.msra.mxu0 %v702
    %2412 = vmatprep.subr.mxu0 0.0
    %2413 = vmatpush1.msra.mxu0 %v701
    %2414 = vmatprep.subr.mxu0 0.0
    %2415 = vmatpush1.msra.mxu0 %v700
    %2416 = vmatprep.subr.mxu0 0.0
    %2417 = vmatpush1.msra.mxu0 %v699
    %2418 = vmatprep.subr.mxu0 0.0
    %2419 = vmatpush2.msra.mxu0 0.0
    %2420 = vmatprep.subr.mxu0 0.0
    %2421 = vmatpush2.msra.mxu0 0.0
    %2422 = vmatprep.subr.mxu0 0.0
    %2423 = vmatpush2.msra.mxu0 0.0
    %2424 = vmatprep.subr.mxu0 0.0
    %2425 = vmatpush2.msra.mxu0 0.0
    %2426 = vmatprep.subr.mxu0 0.0
    %2427 = vmatpush2.msra.mxu0 0.0
    %2428 = vmatprep.subr.mxu0 0.0
    %2429 = vmatpush2.msra.mxu0 0.0
    %2430 = vmatprep.subr.mxu0 0.0
    %2431 = vmatpush2.msra.mxu0 0.0
    %2432 = vmatprep.subr.mxu0 0.0
    %2433 = vmatpush2.msra.mxu0 0.0
    %2434 = vmatprep.subr.mxu0 0.0
    %2435 = vmatpush2.msra.mxu0 0.0
    %2436 = vmatprep.subr.mxu0 0.0
    %2437 = vmatpush2.msra.mxu0 0.0
    %2438 = vmatprep.subr.mxu0 0.0
    %2439 = vmatpush2.msra.mxu0 0.0
    %2440 = vmatprep.subr.mxu0 0.0
    %2441 = vmatpush2.msra.mxu0 0.0
    %2442 = vmatprep.subr.mxu0 0.0
    %2443 = vmatpush2.msra.mxu0 0.0
    %2444 = vmatprep.subr.mxu0 0.0
    %2445 = vmatpush2.msra.mxu0 0.0
    %2446 = vmatprep.subr.mxu0 0.0
    %2447 = vmatpush2.msra.mxu0 0.0
    %2448 = vmatprep.subr.mxu0 0.0
    %2449 = vmatpush2.msra.mxu0 0.0
    %2450 = vmatprep.mubr.f32.mxu0 0.0
    %2451 = vmatmul.mubr.f32.gmra.mxu0 %v2384
    %v2452 = vpop.f32.mrf.mxu0
    %v2453 = vadd.f32 0.0, %v2452
    %v2454 = vpop.f32.mrf.mxu0
    %2455 = vdwg.mxu0
    %v2456 = vadd.f32 %v2378, %v2453
    %v2457 = vxor.u32 %v2456, 2147483648
    %v2458 = vmul.f32 %v2457, 1.442695
    %v2459 = vpow.pop %v2458
    %v2460 = vadd.f32 %v2459, 1.0
    %v2461 = vrcp.pop %v2460
    %v2462 = vmul.f32 1.0, %v2461
    %v2463 = vmul.f32 %v2462, 2.0
    %v2464 = vsub.f32 %v2463, 1.0
    %v2465 = vmul.f32 %v2462, %v2019
    %2467 = vrot.lane.b32.xlu0 %v2464, 64
    %v2468 = vpop.permute.xlu0 %2467
    %v2470 = vmul.f32 %v2462, %v2468
    %2472 = vrot.lane.b32.xlu0 %v2470, 32
    %v2473 = vpop.permute.xlu0 %2472
    %v2475 = vadd.f32 %v2465, %v2473
    %v2476 = vtanh.pop %v2475
    %2478 = vrot.lane.b32.xlu0 %v2476, 64
    %v2479 = vpop.permute.xlu0 %2478
    %v2481 = vmul.f32 %v2462, %v2479
    %v2482 = vsel %vm1838, %v2481, %v2018
    %v2483 = vsel %vm1838, %v2475, %v2019
    %v2484 = vsel %vm1838, %v2481, 0.0
    %2486 = vrot.lane.b32.xlu0 %v2020, 32
    %v2487 = vpop.permute.xlu0 %2486
    %v2488 = vsel %vm258, %v2487, 0
    %2490 = vmatprep.subr.mxu0 0.0
    %2491 = vmatpush1.msra.mxu0 0.0
    %2492 = vmatprep.subr.mxu0 0.0
    %2493 = vmatpush1.msra.mxu0 0.0
    %2494 = vmatprep.subr.mxu0 0.0
    %2495 = vmatpush1.msra.mxu0 0.0
    %2496 = vmatprep.subr.mxu0 0.0
    %2497 = vmatpush1.msra.mxu0 0.0
    %2498 = vmatprep.subr.mxu0 0.0
    %2499 = vmatpush1.msra.mxu0 0.0
    %2500 = vmatprep.subr.mxu0 0.0
    %2501 = vmatpush1.msra.mxu0 0.0
    %2502 = vmatprep.subr.mxu0 0.0
    %2503 = vmatpush1.msra.mxu0 0.0
    %2504 = vmatprep.subr.mxu0 0.0
    %2505 = vmatpush1.msra.mxu0 0.0
    %2506 = vmatprep.subr.mxu0 0.0
    %2507 = vmatpush1.msra.mxu0 0.0
    %2508 = vmatprep.subr.mxu0 0.0
    %2509 = vmatpush1.msra.mxu0 0.0
    %2510 = vmatprep.subr.mxu0 0.0
    %2511 = vmatpush1.msra.mxu0 0.0
    %2512 = vmatprep.subr.mxu0 0.0
    %2513 = vmatpush1.msra.mxu0 0.0
    %2514 = vmatprep.subr.mxu0 0.0
    %2515 = vmatpush1.msra.mxu0 %v1090
    %2516 = vmatprep.subr.mxu0 0.0
    %2517 = vmatpush1.msra.mxu0 %v1089
    %2518 = vmatprep.subr.mxu0 0.0
    %2519 = vmatpush1.msra.mxu0 %v1088
    %2520 = vmatprep.subr.mxu0 0.0
    %2521 = vmatpush1.msra.mxu0 %v1087
    %2522 = vmatprep.subr.mxu0 0.0
    %2523 = vmatpush2.msra.mxu0 0.0
    %2524 = vmatprep.subr.mxu0 0.0
    %2525 = vmatpush2.msra.mxu0 0.0
    %2526 = vmatprep.subr.mxu0 0.0
    %2527 = vmatpush2.msra.mxu0 0.0
    %2528 = vmatprep.subr.mxu0 0.0
    %2529 = vmatpush2.msra.mxu0 0.0
    %2530 = vmatprep.subr.mxu0 0.0
    %2531 = vmatpush2.msra.mxu0 0.0
    %2532 = vmatprep.subr.mxu0 0.0
    %2533 = vmatpush2.msra.mxu0 0.0
    %2534 = vmatprep.subr.mxu0 0.0
    %2535 = vmatpush2.msra.mxu0 0.0
    %2536 = vmatprep.subr.mxu0 0.0
    %2537 = vmatpush2.msra.mxu0 0.0
    %2538 = vmatprep.subr.mxu0 0.0
    %2539 = vmatpush2.msra.mxu0 0.0
    %2540 = vmatprep.subr.mxu0 0.0
    %2541 = vmatpush2.msra.mxu0 0.0
    %2542 = vmatprep.subr.mxu0 0.0
    %2543 = vmatpush2.msra.mxu0 0.0
    %2544 = vmatprep.subr.mxu0 0.0
    %2545 = vmatpush2.msra.mxu0 0.0
    %2546 = vmatprep.subr.mxu0 0.0
    %2547 = vmatpush2.msra.mxu0 0.0
    %2548 = vmatprep.subr.mxu0 0.0
    %2549 = vmatpush2.msra.mxu0 0.0
    %2550 = vmatprep.subr.mxu0 0.0
    %2551 = vmatpush2.msra.mxu0 0.0
    %2552 = vmatprep.subr.mxu0 0.0
    %2553 = vmatpush2.msra.mxu0 0.0
    %2554 = vmatprep.mubr.f32.mxu0 0.0
    %2555 = vmatmul.mubr.f32.gmra.mxu0 %v2488
    %v2556 = vpop.f32.mrf.mxu0
    %v2557 = vadd.f32 %v1097, %v2556
    %v2558 = vpop.f32.mrf.mxu0
    %2559 = vdwg.mxu0
    %2561 = vrot.lane.b32.xlu0 %v2197, 32
    %v2562 = vpop.permute.xlu0 %2561
    %v2563 = vsel %vm258, %v2562, 0
    %2565 = vmatprep.subr.mxu0 0.0
    %2566 = vmatpush1.msra.mxu0 0.0
    %2567 = vmatprep.subr.mxu0 0.0
    %2568 = vmatpush1.msra.mxu0 0.0
    %2569 = vmatprep.subr.mxu0 0.0
    %2570 = vmatpush1.msra.mxu0 0.0
    %2571 = vmatprep.subr.mxu0 0.0
    %2572 = vmatpush1.msra.mxu0 0.0
    %2573 = vmatprep.subr.mxu0 0.0
    %2574 = vmatpush1.msra.mxu0 0.0
    %2575 = vmatprep.subr.mxu0 0.0
    %2576 = vmatpush1.msra.mxu0 0.0
    %2577 = vmatprep.subr.mxu0 0.0
    %2578 = vmatpush1.msra.mxu0 0.0
    %2579 = vmatprep.subr.mxu0 0.0
    %2580 = vmatpush1.msra.mxu0 0.0
    %2581 = vmatprep.subr.mxu0 0.0
    %2582 = vmatpush1.msra.mxu0 0.0
    %2583 = vmatprep.subr.mxu0 0.0
    %2584 = vmatpush1.msra.mxu0 0.0
    %2585 = vmatprep.subr.mxu0 0.0
    %2586 = vmatpush1.msra.mxu0 0.0
    %2587 = vmatprep.subr.mxu0 0.0
    %2588 = vmatpush1.msra.mxu0 0.0
    %2589 = vmatprep.subr.mxu0 0.0
    %2590 = vmatpush1.msra.mxu0 %v1173
    %2591 = vmatprep.subr.mxu0 0.0
    %2592 = vmatpush1.msra.mxu0 %v1172
    %2593 = vmatprep.subr.mxu0 0.0
    %2594 = vmatpush1.msra.mxu0 %v1171
    %2595 = vmatprep.subr.mxu0 0.0
    %2596 = vmatpush1.msra.mxu0 %v1170
    %2597 = vmatprep.subr.mxu0 0.0
    %2598 = vmatpush2.msra.mxu0 0.0
    %2599 = vmatprep.subr.mxu0 0.0
    %2600 = vmatpush2.msra.mxu0 0.0
    %2601 = vmatprep.subr.mxu0 0.0
    %2602 = vmatpush2.msra.mxu0 0.0
    %2603 = vmatprep.subr.mxu0 0.0
    %2604 = vmatpush2.msra.mxu0 0.0
    %2605 = vmatprep.subr.mxu0 0.0
    %2606 = vmatpush2.msra.mxu0 0.0
    %2607 = vmatprep.subr.mxu0 0.0
    %2608 = vmatpush2.msra.mxu0 0.0
    %2609 = vmatprep.subr.mxu0 0.0
    %2610 = vmatpush2.msra.mxu0 0.0
    %2611 = vmatprep.subr.mxu0 0.0
    %2612 = vmatpush2.msra.mxu0 0.0
    %2613 = vmatprep.subr.mxu0 0.0
    %2614 = vmatpush2.msra.mxu0 0.0
    %2615 = vmatprep.subr.mxu0 0.0
    %2616 = vmatpush2.msra.mxu0 0.0
    %2617 = vmatprep.subr.mxu0 0.0
    %2618 = vmatpush2.msra.mxu0 0.0
    %2619 = vmatprep.subr.mxu0 0.0
    %2620 = vmatpush2.msra.mxu0 0.0
    %2621 = vmatprep.subr.mxu0 0.0
    %2622 = vmatpush2.msra.mxu0 0.0
    %2623 = vmatprep.subr.mxu0 0.0
    %2624 = vmatpush2.msra.mxu0 0.0
    %2625 = vmatprep.subr.mxu0 0.0
    %2626 = vmatpush2.msra.mxu0 0.0
    %2627 = vmatprep.subr.mxu0 0.0
    %2628 = vmatpush2.msra.mxu0 0.0
    %2629 = vmatprep.mubr.f32.mxu0 0.0
    %2630 = vmatmul.mubr.f32.gmra.mxu0 %v2563
    %v2631 = vpop.f32.mrf.mxu0
    %v2632 = vadd.f32 0.0, %v2631
    %v2633 = vpop.f32.mrf.mxu0
    %2634 = vdwg.mxu0
    %v2635 = vadd.f32 %v2557, %v2632
    %v2636 = vxor.u32 %v2635, 2147483648
    %v2637 = vmul.f32 %v2636, 1.442695
    %v2638 = vpow.pop %v2637
    %v2639 = vadd.f32 %v2638, 1.0
    %v2640 = vrcp.pop %v2639
    %v2641 = vmul.f32 1.0, %v2640
    %v2642 = vmul.f32 %v2641, 2.0
    %v2643 = vsub.f32 %v2642, 1.0
    %v2644 = vmul.f32 %v2641, %v2198
    %2646 = vrot.lane.b32.xlu0 %v2643, 64
    %v2647 = vpop.permute.xlu0 %2646
    %v2649 = vmul.f32 %v2641, %v2647
    %2651 = vrot.lane.b32.xlu0 %v2649, 32
    %v2652 = vpop.permute.xlu0 %2651
    %v2654 = vadd.f32 %v2644, %v2652
    %v2655 = vtanh.pop %v2654
    %2657 = vrot.lane.b32.xlu0 %v2655, 64
    %v2658 = vpop.permute.xlu0 %2657
    %v2660 = vmul.f32 %v2641, %v2658
    %v2661 = vsel %vm1374, %v2660, %v2197
    %v2662 = vsel %vm1374, %v2654, %v2198
    %v2663 = vsel %vm1374, %v2660, 0.0
    %v2664 = vld [vmem:[#allocation2 + $0x30] sm:$0xff]
    %2666 = vrot.lane.b32.xlu0 %v2303, 32
    %v2667 = vpop.permute.xlu0 %2666
    %v2668 = vsel %vm258, %v2667, 0
    %2670 = vmatprep.subr.mxu0 0.0
    %2671 = vmatpush1.msra.mxu0 0.0
    %2672 = vmatprep.subr.mxu0 0.0
    %2673 = vmatpush1.msra.mxu0 0.0
    %2674 = vmatprep.subr.mxu0 0.0
    %2675 = vmatpush1.msra.mxu0 0.0
    %2676 = vmatprep.subr.mxu0 0.0
    %2677 = vmatpush1.msra.mxu0 0.0
    %2678 = vmatprep.subr.mxu0 0.0
    %2679 = vmatpush1.msra.mxu0 0.0
    %2680 = vmatprep.subr.mxu0 0.0
    %2681 = vmatpush1.msra.mxu0 0.0
    %2682 = vmatprep.subr.mxu0 0.0
    %2683 = vmatpush1.msra.mxu0 0.0
    %2684 = vmatprep.subr.mxu0 0.0
    %2685 = vmatpush1.msra.mxu0 0.0
    %2686 = vmatprep.subr.mxu0 0.0
    %2687 = vmatpush1.msra.mxu0 0.0
    %2688 = vmatprep.subr.mxu0 0.0
    %2689 = vmatpush1.msra.mxu0 0.0
    %2690 = vmatprep.subr.mxu0 0.0
    %2691 = vmatpush1.msra.mxu0 0.0
    %2692 = vmatprep.subr.mxu0 0.0
    %2693 = vmatpush1.msra.mxu0 0.0
    %2694 = vmatprep.subr.mxu0 0.0
    %2695 = vmatpush1.msra.mxu0 %v406
    %2696 = vmatprep.subr.mxu0 0.0
    %2697 = vmatpush1.msra.mxu0 %v405
    %2698 = vmatprep.subr.mxu0 0.0
    %2699 = vmatpush1.msra.mxu0 %v404
    %2700 = vmatprep.subr.mxu0 0.0
    %2701 = vmatpush1.msra.mxu0 %v403
    %2702 = vmatprep.subr.mxu0 0.0
    %2703 = vmatpush2.msra.mxu0 0.0
    %2704 = vmatprep.subr.mxu0 0.0
    %2705 = vmatpush2.msra.mxu0 0.0
    %2706 = vmatprep.subr.mxu0 0.0
    %2707 = vmatpush2.msra.mxu0 0.0
    %2708 = vmatprep.subr.mxu0 0.0
    %2709 = vmatpush2.msra.mxu0 0.0
    %2710 = vmatprep.subr.mxu0 0.0
    %2711 = vmatpush2.msra.mxu0 0.0
    %2712 = vmatprep.subr.mxu0 0.0
    %2713 = vmatpush2.msra.mxu0 0.0
    %2714 = vmatprep.subr.mxu0 0.0
    %2715 = vmatpush2.msra.mxu0 0.0
    %2716 = vmatprep.subr.mxu0 0.0
    %2717 = vmatpush2.msra.mxu0 0.0
    %2718 = vmatprep.subr.mxu0 0.0
    %2719 = vmatpush2.msra.mxu0 0.0
    %2720 = vmatprep.subr.mxu0 0.0
    %2721 = vmatpush2.msra.mxu0 0.0
    %2722 = vmatprep.subr.mxu0 0.0
    %2723 = vmatpush2.msra.mxu0 0.0
    %2724 = vmatprep.subr.mxu0 0.0
    %2725 = vmatpush2.msra.mxu0 0.0
    %2726 = vmatprep.subr.mxu0 0.0
    %2727 = vmatpush2.msra.mxu0 0.0
    %2728 = vmatprep.subr.mxu0 0.0
    %2729 = vmatpush2.msra.mxu0 0.0
    %2730 = vmatprep.subr.mxu0 0.0
    %2731 = vmatpush2.msra.mxu0 0.0
    %2732 = vmatprep.subr.mxu0 0.0
    %2733 = vmatpush2.msra.mxu0 0.0
    %2734 = vmatprep.mubr.f32.mxu0 0.0
    %2735 = vmatmul.mubr.f32.gmra.mxu0 %v2668
    %v2736 = vpop.f32.mrf.mxu0
    %v2737 = vadd.f32 0.0, %v2736
    %v2738 = vpop.f32.mrf.mxu0
    %2739 = vdwg.mxu0
    %v2740 = vadd.f32 %v2664, %v2737
    %v2741 = vxor.u32 %v2740, 2147483648
    %v2742 = vmul.f32 %v2741, 1.442695
    %v2743 = vpow.pop %v2742
    %v2744 = vadd.f32 %v2743, 1.0
    %v2745 = vrcp.pop %v2744
    %v2746 = vmul.f32 1.0, %v2745
    %v2747 = vmul.f32 %v2746, 2.0
    %v2748 = vsub.f32 %v2747, 1.0
    %v2749 = vmul.f32 %v2746, %v2304
    %2751 = vrot.lane.b32.xlu0 %v2748, 64
    %v2752 = vpop.permute.xlu0 %2751
    %v2754 = vmul.f32 %v2746, %v2752
    %2756 = vrot.lane.b32.xlu0 %v2754, 32
    %v2757 = vpop.permute.xlu0 %2756
    %v2759 = vadd.f32 %v2749, %v2757
    %v2760 = vtanh.pop %v2759
    %2762 = vrot.lane.b32.xlu0 %v2760, 64
    %v2763 = vpop.permute.xlu0 %2762
    %v2765 = vmul.f32 %v2746, %v2763
    %vm2766 = vcmp.gt.f32.partialorder %v400, 6.0
    %v2767 = vsel %vm2766, %v2765, %v2303
    %v2768 = vsel %vm2766, %v2759, %v2304
    %v2769 = vsel %vm2766, %v2765, 0.0
    %2771 = vrot.lane.b32.xlu0 %v2305, 32
    %v2772 = vpop.permute.xlu0 %2771
    %v2773 = vsel %vm258, %v2772, 0
    %2775 = vmatprep.subr.mxu0 0.0
    %2776 = vmatpush1.msra.mxu0 0.0
    %2777 = vmatprep.subr.mxu0 0.0
    %2778 = vmatpush1.msra.mxu0 0.0
    %2779 = vmatprep.subr.mxu0 0.0
    %2780 = vmatpush1.msra.mxu0 0.0
    %2781 = vmatprep.subr.mxu0 0.0
    %2782 = vmatpush1.msra.mxu0 0.0
    %2783 = vmatprep.subr.mxu0 0.0
    %2784 = vmatpush1.msra.mxu0 0.0
    %2785 = vmatprep.subr.mxu0 0.0
    %2786 = vmatpush1.msra.mxu0 0.0
    %2787 = vmatprep.subr.mxu0 0.0
    %2788 = vmatpush1.msra.mxu0 0.0
    %2789 = vmatprep.subr.mxu0 0.0
    %2790 = vmatpush1.msra.mxu0 0.0
    %2791 = vmatprep.subr.mxu0 0.0
    %2792 = vmatpush1.msra.mxu0 0.0
    %2793 = vmatprep.subr.mxu0 0.0
    %2794 = vmatpush1.msra.mxu0 0.0
    %2795 = vmatprep.subr.mxu0 0.0
    %2796 = vmatpush1.msra.mxu0 0.0
    %2797 = vmatprep.subr.mxu0 0.0
    %2798 = vmatpush1.msra.mxu0 0.0
    %2799 = vmatprep.subr.mxu0 0.0
    %2800 = vmatpush1.msra.mxu0 %v619
    %2801 = vmatprep.subr.mxu0 0.0
    %2802 = vmatpush1.msra.mxu0 %v618
    %2803 = vmatprep.subr.mxu0 0.0
    %2804 = vmatpush1.msra.mxu0 %v617
    %2805 = vmatprep.subr.mxu0 0.0
    %2806 = vmatpush1.msra.mxu0 %v616
    %2807 = vmatprep.subr.mxu0 0.0
    %2808 = vmatpush2.msra.mxu0 0.0
    %2809 = vmatprep.subr.mxu0 0.0
    %2810 = vmatpush2.msra.mxu0 0.0
    %2811 = vmatprep.subr.mxu0 0.0
    %2812 = vmatpush2.msra.mxu0 0.0
    %2813 = vmatprep.subr.mxu0 0.0
    %2814 = vmatpush2.msra.mxu0 0.0
    %2815 = vmatprep.subr.mxu0 0.0
    %2816 = vmatpush2.msra.mxu0 0.0
    %2817 = vmatprep.subr.mxu0 0.0
    %2818 = vmatpush2.msra.mxu0 0.0
    %2819 = vmatprep.subr.mxu0 0.0
    %2820 = vmatpush2.msra.mxu0 0.0
    %2821 = vmatprep.subr.mxu0 0.0
    %2822 = vmatpush2.msra.mxu0 0.0
    %2823 = vmatprep.subr.mxu0 0.0
    %2824 = vmatpush2.msra.mxu0 0.0
    %2825 = vmatprep.subr.mxu0 0.0
    %2826 = vmatpush2.msra.mxu0 0.0
    %2827 = vmatprep.subr.mxu0 0.0
    %2828 = vmatpush2.msra.mxu0 0.0
    %2829 = vmatprep.subr.mxu0 0.0
    %2830 = vmatpush2.msra.mxu0 0.0
    %2831 = vmatprep.subr.mxu0 0.0
    %2832 = vmatpush2.msra.mxu0 0.0
    %2833 = vmatprep.subr.mxu0 0.0
    %2834 = vmatpush2.msra.mxu0 0.0
    %2835 = vmatprep.subr.mxu0 0.0
    %2836 = vmatpush2.msra.mxu0 0.0
    %2837 = vmatprep.subr.mxu0 0.0
    %2838 = vmatpush2.msra.mxu0 0.0
    %2839 = vmatprep.mubr.f32.mxu0 0.0
    %2840 = vmatmul.mubr.f32.gmra.mxu0 %v2773
    %v2841 = vpop.f32.mrf.mxu0
    %v2842 = vadd.f32 %v626, %v2841
    %v2843 = vpop.f32.mrf.mxu0
    %2844 = vdwg.mxu0
    %2846 = vrot.lane.b32.xlu0 %v2482, 32
    %v2847 = vpop.permute.xlu0 %2846
    %v2848 = vsel %vm258, %v2847, 0
    %2850 = vmatprep.subr.mxu0 0.0
    %2851 = vmatpush1.msra.mxu0 0.0
    %2852 = vmatprep.subr.mxu0 0.0
    %2853 = vmatpush1.msra.mxu0 0.0
    %2854 = vmatprep.subr.mxu0 0.0
    %2855 = vmatpush1.msra.mxu0 0.0
    %2856 = vmatprep.subr.mxu0 0.0
    %2857 = vmatpush1.msra.mxu0 0.0
    %2858 = vmatprep.subr.mxu0 0.0
    %2859 = vmatpush1.msra.mxu0 0.0
    %2860 = vmatprep.subr.mxu0 0.0
    %2861 = vmatpush1.msra.mxu0 0.0
    %2862 = vmatprep.subr.mxu0 0.0
    %2863 = vmatpush1.msra.mxu0 0.0
    %2864 = vmatprep.subr.mxu0 0.0
    %2865 = vmatpush1.msra.mxu0 0.0
    %2866 = vmatprep.subr.mxu0 0.0
    %2867 = vmatpush1.msra.mxu0 0.0
    %2868 = vmatprep.subr.mxu0 0.0
    %2869 = vmatpush1.msra.mxu0 0.0
    %2870 = vmatprep.subr.mxu0 0.0
    %2871 = vmatpush1.msra.mxu0 0.0
    %2872 = vmatprep.subr.mxu0 0.0
    %2873 = vmatpush1.msra.mxu0 0.0
    %2874 = vmatprep.subr.mxu0 0.0
    %2875 = vmatpush1.msra.mxu0 %v702
    %2876 = vmatprep.subr.mxu0 0.0
    %2877 = vmatpush1.msra.mxu0 %v701
    %2878 = vmatprep.subr.mxu0 0.0
    %2879 = vmatpush1.msra.mxu0 %v700
    %2880 = vmatprep.subr.mxu0 0.0
    %2881 = vmatpush1.msra.mxu0 %v699
    %2882 = vmatprep.subr.mxu0 0.0
    %2883 = vmatpush2.msra.mxu0 0.0
    %2884 = vmatprep.subr.mxu0 0.0
    %2885 = vmatpush2.msra.mxu0 0.0
    %2886 = vmatprep.subr.mxu0 0.0
    %2887 = vmatpush2.msra.mxu0 0.0
    %2888 = vmatprep.subr.mxu0 0.0
    %2889 = vmatpush2.msra.mxu0 0.0
    %2890 = vmatprep.subr.mxu0 0.0
    %2891 = vmatpush2.msra.mxu0 0.0
    %2892 = vmatprep.subr.mxu0 0.0
    %2893 = vmatpush2.msra.mxu0 0.0
    %2894 = vmatprep.subr.mxu0 0.0
    %2895 = vmatpush2.msra.mxu0 0.0
    %2896 = vmatprep.subr.mxu0 0.0
    %2897 = vmatpush2.msra.mxu0 0.0
    %2898 = vmatprep.subr.mxu0 0.0
    %2899 = vmatpush2.msra.mxu0 0.0
    %2900 = vmatprep.subr.mxu0 0.0
    %2901 = vmatpush2.msra.mxu0 0.0
    %2902 = vmatprep.subr.mxu0 0.0
    %2903 = vmatpush2.msra.mxu0 0.0
    %2904 = vmatprep.subr.mxu0 0.0
    %2905 = vmatpush2.msra.mxu0 0.0
    %2906 = vmatprep.subr.mxu0 0.0
    %2907 = vmatpush2.msra.mxu0 0.0
    %2908 = vmatprep.subr.mxu0 0.0
    %2909 = vmatpush2.msra.mxu0 0.0
    %2910 = vmatprep.subr.mxu0 0.0
    %2911 = vmatpush2.msra.mxu0 0.0
    %2912 = vmatprep.subr.mxu0 0.0
    %2913 = vmatpush2.msra.mxu0 0.0
    %2914 = vmatprep.mubr.f32.mxu0 0.0
    %2915 = vmatmul.mubr.f32.gmra.mxu0 %v2848
    %v2916 = vpop.f32.mrf.mxu0
    %v2917 = vadd.f32 0.0, %v2916
    %v2918 = vpop.f32.mrf.mxu0
    %2919 = vdwg.mxu0
    %v2920 = vadd.f32 %v2842, %v2917
    %v2921 = vxor.u32 %v2920, 2147483648
    %v2922 = vmul.f32 %v2921, 1.442695
    %v2923 = vpow.pop %v2922
    %v2924 = vadd.f32 %v2923, 1.0
    %v2925 = vrcp.pop %v2924
    %v2926 = vmul.f32 1.0, %v2925
    %v2927 = vmul.f32 %v2926, 2.0
    %v2928 = vsub.f32 %v2927, 1.0
    %v2929 = vmul.f32 %v2926, %v2483
    %2931 = vrot.lane.b32.xlu0 %v2928, 64
    %v2932 = vpop.permute.xlu0 %2931
    %v2934 = vmul.f32 %v2926, %v2932
    %2936 = vrot.lane.b32.xlu0 %v2934, 32
    %v2937 = vpop.permute.xlu0 %2936
    %v2939 = vadd.f32 %v2929, %v2937
    %v2940 = vtanh.pop %v2939
    %2942 = vrot.lane.b32.xlu0 %v2940, 64
    %v2943 = vpop.permute.xlu0 %2942
    %v2945 = vmul.f32 %v2926, %v2943
    %v2946 = vsel %vm2302, %v2945, %v2482
    %v2947 = vsel %vm2302, %v2939, %v2483
    %v2948 = vsel %vm2302, %v2945, 0.0
    %2950 = vrot.lane.b32.xlu0 %v2484, 32
    %v2951 = vpop.permute.xlu0 %2950
    %v2952 = vsel %vm258, %v2951, 0
    %2954 = vmatprep.subr.mxu0 0.0
    %2955 = vmatpush1.msra.mxu0 0.0
    %2956 = vmatprep.subr.mxu0 0.0
    %2957 = vmatpush1.msra.mxu0 0.0
    %2958 = vmatprep.subr.mxu0 0.0
    %2959 = vmatpush1.msra.mxu0 0.0
    %2960 = vmatprep.subr.mxu0 0.0
    %2961 = vmatpush1.msra.mxu0 0.0
    %2962 = vmatprep.subr.mxu0 0.0
    %2963 = vmatpush1.msra.mxu0 0.0
    %2964 = vmatprep.subr.mxu0 0.0
    %2965 = vmatpush1.msra.mxu0 0.0
    %2966 = vmatprep.subr.mxu0 0.0
    %2967 = vmatpush1.msra.mxu0 0.0
    %2968 = vmatprep.subr.mxu0 0.0
    %2969 = vmatpush1.msra.mxu0 0.0
    %2970 = vmatprep.subr.mxu0 0.0
    %2971 = vmatpush1.msra.mxu0 0.0
    %2972 = vmatprep.subr.mxu0 0.0
    %2973 = vmatpush1.msra.mxu0 0.0
    %2974 = vmatprep.subr.mxu0 0.0
    %2975 = vmatpush1.msra.mxu0 0.0
    %2976 = vmatprep.subr.mxu0 0.0
    %2977 = vmatpush1.msra.mxu0 0.0
    %2978 = vmatprep.subr.mxu0 0.0
    %2979 = vmatpush1.msra.mxu0 %v1090
    %2980 = vmatprep.subr.mxu0 0.0
    %2981 = vmatpush1.msra.mxu0 %v1089
    %2982 = vmatprep.subr.mxu0 0.0
    %2983 = vmatpush1.msra.mxu0 %v1088
    %2984 = vmatprep.subr.mxu0 0.0
    %2985 = vmatpush1.msra.mxu0 %v1087
    %2986 = vmatprep.subr.mxu0 0.0
    %2987 = vmatpush2.msra.mxu0 0.0
    %2988 = vmatprep.subr.mxu0 0.0
    %2989 = vmatpush2.msra.mxu0 0.0
    %2990 = vmatprep.subr.mxu0 0.0
    %2991 = vmatpush2.msra.mxu0 0.0
    %2992 = vmatprep.subr.mxu0 0.0
    %2993 = vmatpush2.msra.mxu0 0.0
    %2994 = vmatprep.subr.mxu0 0.0
    %2995 = vmatpush2.msra.mxu0 0.0
    %2996 = vmatprep.subr.mxu0 0.0
    %2997 = vmatpush2.msra.mxu0 0.0
    %2998 = vmatprep.subr.mxu0 0.0
    %2999 = vmatpush2.msra.mxu0 0.0
    %3000 = vmatprep.subr.mxu0 0.0
    %3001 = vmatpush2.msra.mxu0 0.0
    %3002 = vmatprep.subr.mxu0 0.0
    %3003 = vmatpush2.msra.mxu0 0.0
    %3004 = vmatprep.subr.mxu0 0.0
    %3005 = vmatpush2.msra.mxu0 0.0
    %3006 = vmatprep.subr.mxu0 0.0
    %3007 = vmatpush2.msra.mxu0 0.0
    %3008 = vmatprep.subr.mxu0 0.0
    %3009 = vmatpush2.msra.mxu0 0.0
    %3010 = vmatprep.subr.mxu0 0.0
    %3011 = vmatpush2.msra.mxu0 0.0
    %3012 = vmatprep.subr.mxu0 0.0
    %3013 = vmatpush2.msra.mxu0 0.0
    %3014 = vmatprep.subr.mxu0 0.0
    %3015 = vmatpush2.msra.mxu0 0.0
    %3016 = vmatprep.subr.mxu0 0.0
    %3017 = vmatpush2.msra.mxu0 0.0
    %3018 = vmatprep.mubr.f32.mxu0 0.0
    %3019 = vmatmul.mubr.f32.gmra.mxu0 %v2952
    %v3020 = vpop.f32.mrf.mxu0
    %v3021 = vadd.f32 %v1097, %v3020
    %v3022 = vpop.f32.mrf.mxu0
    %3023 = vdwg.mxu0
    %3025 = vrot.lane.b32.xlu0 %v2661, 32
    %v3026 = vpop.permute.xlu0 %3025
    %v3027 = vsel %vm258, %v3026, 0
    %3029 = vmatprep.subr.mxu0 0.0
    %3030 = vmatpush1.msra.mxu0 0.0
    %3031 = vmatprep.subr.mxu0 0.0
    %3032 = vmatpush1.msra.mxu0 0.0
    %3033 = vmatprep.subr.mxu0 0.0
    %3034 = vmatpush1.msra.mxu0 0.0
    %3035 = vmatprep.subr.mxu0 0.0
    %3036 = vmatpush1.msra.mxu0 0.0
    %3037 = vmatprep.subr.mxu0 0.0
    %3038 = vmatpush1.msra.mxu0 0.0
    %3039 = vmatprep.subr.mxu0 0.0
    %3040 = vmatpush1.msra.mxu0 0.0
    %3041 = vmatprep.subr.mxu0 0.0
    %3042 = vmatpush1.msra.mxu0 0.0
    %3043 = vmatprep.subr.mxu0 0.0
    %3044 = vmatpush1.msra.mxu0 0.0
    %3045 = vmatprep.subr.mxu0 0.0
    %3046 = vmatpush1.msra.mxu0 0.0
    %3047 = vmatprep.subr.mxu0 0.0
    %3048 = vmatpush1.msra.mxu0 0.0
    %3049 = vmatprep.subr.mxu0 0.0
    %3050 = vmatpush1.msra.mxu0 0.0
    %3051 = vmatprep.subr.mxu0 0.0
    %3052 = vmatpush1.msra.mxu0 0.0
    %3053 = vmatprep.subr.mxu0 0.0
    %3054 = vmatpush1.msra.mxu0 %v1173
    %3055 = vmatprep.subr.mxu0 0.0
    %3056 = vmatpush1.msra.mxu0 %v1172
    %3057 = vmatprep.subr.mxu0 0.0
    %3058 = vmatpush1.msra.mxu0 %v1171
    %3059 = vmatprep.subr.mxu0 0.0
    %3060 = vmatpush1.msra.mxu0 %v1170
    %3061 = vmatprep.subr.mxu0 0.0
    %3062 = vmatpush2.msra.mxu0 0.0
    %3063 = vmatprep.subr.mxu0 0.0
    %3064 = vmatpush2.msra.mxu0 0.0
    %3065 = vmatprep.subr.mxu0 0.0
    %3066 = vmatpush2.msra.mxu0 0.0
    %3067 = vmatprep.subr.mxu0 0.0
    %3068 = vmatpush2.msra.mxu0 0.0
    %3069 = vmatprep.subr.mxu0 0.0
    %3070 = vmatpush2.msra.mxu0 0.0
    %3071 = vmatprep.subr.mxu0 0.0
    %3072 = vmatpush2.msra.mxu0 0.0
    %3073 = vmatprep.subr.mxu0 0.0
    %3074 = vmatpush2.msra.mxu0 0.0
    %3075 = vmatprep.subr.mxu0 0.0
    %3076 = vmatpush2.msra.mxu0 0.0
    %3077 = vmatprep.subr.mxu0 0.0
    %3078 = vmatpush2.msra.mxu0 0.0
    %3079 = vmatprep.subr.mxu0 0.0
    %3080 = vmatpush2.msra.mxu0 0.0
    %3081 = vmatprep.subr.mxu0 0.0
    %3082 = vmatpush2.msra.mxu0 0.0
    %3083 = vmatprep.subr.mxu0 0.0
    %3084 = vmatpush2.msra.mxu0 0.0
    %3085 = vmatprep.subr.mxu0 0.0
    %3086 = vmatpush2.msra.mxu0 0.0
    %3087 = vmatprep.subr.mxu0 0.0
    %3088 = vmatpush2.msra.mxu0 0.0
    %3089 = vmatprep.subr.mxu0 0.0
    %3090 = vmatpush2.msra.mxu0 0.0
    %3091 = vmatprep.subr.mxu0 0.0
    %3092 = vmatpush2.msra.mxu0 0.0
    %3093 = vmatprep.mubr.f32.mxu0 0.0
    %3094 = vmatmul.mubr.f32.gmra.mxu0 %v3027
    %v3095 = vpop.f32.mrf.mxu0
    %v3096 = vadd.f32 0.0, %v3095
    %v3097 = vpop.f32.mrf.mxu0
    %3098 = vdwg.mxu0
    %v3099 = vadd.f32 %v3021, %v3096
    %v3100 = vxor.u32 %v3099, 2147483648
    %v3101 = vmul.f32 %v3100, 1.442695
    %v3102 = vpow.pop %v3101
    %v3103 = vadd.f32 %v3102, 1.0
    %v3104 = vrcp.pop %v3103
    %v3105 = vmul.f32 1.0, %v3104
    %v3106 = vmul.f32 %v3105, 2.0
    %v3107 = vsub.f32 %v3106, 1.0
    %v3108 = vmul.f32 %v3105, %v2662
    %3110 = vrot.lane.b32.xlu0 %v3107, 64
    %v3111 = vpop.permute.xlu0 %3110
    %v3113 = vmul.f32 %v3105, %v3111
    %3115 = vrot.lane.b32.xlu0 %v3113, 32
    %v3116 = vpop.permute.xlu0 %3115
    %v3118 = vadd.f32 %v3108, %v3116
    %v3119 = vtanh.pop %v3118
    %3121 = vrot.lane.b32.xlu0 %v3119, 64
    %v3122 = vpop.permute.xlu0 %3121
    %v3124 = vmul.f32 %v3105, %v3122
    %v3125 = vsel %vm1838, %v3124, %v2661
    %v3126 = vsel %vm1838, %v3118, %v2662
    %v3127 = vsel %vm1838, %v3124, 0.0
    %v3128 = vld [vmem:[#allocation2 + $0x38] sm:$0xff]
    %3130 = vrot.lane.b32.xlu0 %v2767, 32
    %v3131 = vpop.permute.xlu0 %3130
    %v3132 = vsel %vm258, %v3131, 0
    %3134 = vmatprep.subr.mxu0 0.0
    %3135 = vmatpush1.msra.mxu0 0.0
    %3136 = vmatprep.subr.mxu0 0.0
    %3137 = vmatpush1.msra.mxu0 0.0
    %3138 = vmatprep.subr.mxu0 0.0
    %3139 = vmatpush1.msra.mxu0 0.0
    %3140 = vmatprep.subr.mxu0 0.0
    %3141 = vmatpush1.msra.mxu0 0.0
    %3142 = vmatprep.subr.mxu0 0.0
    %3143 = vmatpush1.msra.mxu0 0.0
    %3144 = vmatprep.subr.mxu0 0.0
    %3145 = vmatpush1.msra.mxu0 0.0
    %3146 = vmatprep.subr.mxu0 0.0
    %3147 = vmatpush1.msra.mxu0 0.0
    %3148 = vmatprep.subr.mxu0 0.0
    %3149 = vmatpush1.msra.mxu0 0.0
    %3150 = vmatprep.subr.mxu0 0.0
    %3151 = vmatpush1.msra.mxu0 0.0
    %3152 = vmatprep.subr.mxu0 0.0
    %3153 = vmatpush1.msra.mxu0 0.0
    %3154 = vmatprep.subr.mxu0 0.0
    %3155 = vmatpush1.msra.mxu0 0.0
    %3156 = vmatprep.subr.mxu0 0.0
    %3157 = vmatpush1.msra.mxu0 0.0
    %3158 = vmatprep.subr.mxu0 0.0
    %3159 = vmatpush1.msra.mxu0 %v406
    %3160 = vmatprep.subr.mxu0 0.0
    %3161 = vmatpush1.msra.mxu0 %v405
    %3162 = vmatprep.subr.mxu0 0.0
    %3163 = vmatpush1.msra.mxu0 %v404
    %3164 = vmatprep.subr.mxu0 0.0
    %3165 = vmatpush1.msra.mxu0 %v403
    %3166 = vmatprep.subr.mxu0 0.0
    %3167 = vmatpush2.msra.mxu0 0.0
    %3168 = vmatprep.subr.mxu0 0.0
    %3169 = vmatpush2.msra.mxu0 0.0
    %3170 = vmatprep.subr.mxu0 0.0
    %3171 = vmatpush2.msra.mxu0 0.0
    %3172 = vmatprep.subr.mxu0 0.0
    %3173 = vmatpush2.msra.mxu0 0.0
    %3174 = vmatprep.subr.mxu0 0.0
    %3175 = vmatpush2.msra.mxu0 0.0
    %3176 = vmatprep.subr.mxu0 0.0
    %3177 = vmatpush2.msra.mxu0 0.0
    %3178 = vmatprep.subr.mxu0 0.0
    %3179 = vmatpush2.msra.mxu0 0.0
    %3180 = vmatprep.subr.mxu0 0.0
    %3181 = vmatpush2.msra.mxu0 0.0
    %3182 = vmatprep.subr.mxu0 0.0
    %3183 = vmatpush2.msra.mxu0 0.0
    %3184 = vmatprep.subr.mxu0 0.0
    %3185 = vmatpush2.msra.mxu0 0.0
    %3186 = vmatprep.subr.mxu0 0.0
    %3187 = vmatpush2.msra.mxu0 0.0
    %3188 = vmatprep.subr.mxu0 0.0
    %3189 = vmatpush2.msra.mxu0 0.0
    %3190 = vmatprep.subr.mxu0 0.0
    %3191 = vmatpush2.msra.mxu0 0.0
    %3192 = vmatprep.subr.mxu0 0.0
    %3193 = vmatpush2.msra.mxu0 0.0
    %3194 = vmatprep.subr.mxu0 0.0
    %3195 = vmatpush2.msra.mxu0 0.0
    %3196 = vmatprep.subr.mxu0 0.0
    %3197 = vmatpush2.msra.mxu0 0.0
    %3198 = vmatprep.mubr.f32.mxu0 0.0
    %3199 = vmatmul.mubr.f32.gmra.mxu0 %v3132
    %v3200 = vpop.f32.mrf.mxu0
    %v3201 = vadd.f32 0.0, %v3200
    %v3202 = vpop.f32.mrf.mxu0
    %3203 = vdwg.mxu0
    %v3204 = vadd.f32 %v3128, %v3201
    %v3205 = vxor.u32 %v3204, 2147483648
    %v3206 = vmul.f32 %v3205, 1.442695
    %v3207 = vpow.pop %v3206
    %v3208 = vadd.f32 %v3207, 1.0
    %v3209 = vrcp.pop %v3208
    %v3210 = vmul.f32 1.0, %v3209
    %v3211 = vmul.f32 %v3210, 2.0
    %v3212 = vsub.f32 %v3211, 1.0
    %v3213 = vmul.f32 %v3210, %v2768
    %3215 = vrot.lane.b32.xlu0 %v3212, 64
    %v3216 = vpop.permute.xlu0 %3215
    %v3218 = vmul.f32 %v3210, %v3216
    %3220 = vrot.lane.b32.xlu0 %v3218, 32
    %v3221 = vpop.permute.xlu0 %3220
    %v3223 = vadd.f32 %v3213, %v3221
    %v3224 = vtanh.pop %v3223
    %3226 = vrot.lane.b32.xlu0 %v3224, 64
    %v3227 = vpop.permute.xlu0 %3226
    %v3229 = vmul.f32 %v3210, %v3227
    %vm3230 = vcmp.gt.f32.partialorder %v400, 7.0
    %v3231 = vsel %vm3230, %v3229, 0.0
    %3233 = vrot.lane.b32.xlu0 %v2769, 32
    %v3234 = vpop.permute.xlu0 %3233
    %v3235 = vsel %vm258, %v3234, 0
    %3237 = vmatprep.subr.mxu0 0.0
    %3238 = vmatpush1.msra.mxu0 0.0
    %3239 = vmatprep.subr.mxu0 0.0
    %3240 = vmatpush1.msra.mxu0 0.0
    %3241 = vmatprep.subr.mxu0 0.0
    %3242 = vmatpush1.msra.mxu0 0.0
    %3243 = vmatprep.subr.mxu0 0.0
    %3244 = vmatpush1.msra.mxu0 0.0
    %3245 = vmatprep.subr.mxu0 0.0
    %3246 = vmatpush1.msra.mxu0 0.0
    %3247 = vmatprep.subr.mxu0 0.0
    %3248 = vmatpush1.msra.mxu0 0.0
    %3249 = vmatprep.subr.mxu0 0.0
    %3250 = vmatpush1.msra.mxu0 0.0
    %3251 = vmatprep.subr.mxu0 0.0
    %3252 = vmatpush1.msra.mxu0 0.0
    %3253 = vmatprep.subr.mxu0 0.0
    %3254 = vmatpush1.msra.mxu0 0.0
    %3255 = vmatprep.subr.mxu0 0.0
    %3256 = vmatpush1.msra.mxu0 0.0
    %3257 = vmatprep.subr.mxu0 0.0
    %3258 = vmatpush1.msra.mxu0 0.0
    %3259 = vmatprep.subr.mxu0 0.0
    %3260 = vmatpush1.msra.mxu0 0.0
    %3261 = vmatprep.subr.mxu0 0.0
    %3262 = vmatpush1.msra.mxu0 %v619
    %3263 = vmatprep.subr.mxu0 0.0
    %3264 = vmatpush1.msra.mxu0 %v618
    %3265 = vmatprep.subr.mxu0 0.0
    %3266 = vmatpush1.msra.mxu0 %v617
    %3267 = vmatprep.subr.mxu0 0.0
    %3268 = vmatpush1.msra.mxu0 %v616
    %3269 = vmatprep.subr.mxu0 0.0
    %3270 = vmatpush2.msra.mxu0 0.0
    %3271 = vmatprep.subr.mxu0 0.0
    %3272 = vmatpush2.msra.mxu0 0.0
    %3273 = vmatprep.subr.mxu0 0.0
    %3274 = vmatpush2.msra.mxu0 0.0
    %3275 = vmatprep.subr.mxu0 0.0
    %3276 = vmatpush2.msra.mxu0 0.0
    %3277 = vmatprep.subr.mxu0 0.0
    %3278 = vmatpush2.msra.mxu0 0.0
    %3279 = vmatprep.subr.mxu0 0.0
    %3280 = vmatpush2.msra.mxu0 0.0
    %3281 = vmatprep.subr.mxu0 0.0
    %3282 = vmatpush2.msra.mxu0 0.0
    %3283 = vmatprep.subr.mxu0 0.0
    %3284 = vmatpush2.msra.mxu0 0.0
    %3285 = vmatprep.subr.mxu0 0.0
    %3286 = vmatpush2.msra.mxu0 0.0
    %3287 = vmatprep.subr.mxu0 0.0
    %3288 = vmatpush2.msra.mxu0 0.0
    %3289 = vmatprep.subr.mxu0 0.0
    %3290 = vmatpush2.msra.mxu0 0.0
    %3291 = vmatprep.subr.mxu0 0.0
    %3292 = vmatpush2.msra.mxu0 0.0
    %3293 = vmatprep.subr.mxu0 0.0
    %3294 = vmatpush2.msra.mxu0 0.0
    %3295 = vmatprep.subr.mxu0 0.0
    %3296 = vmatpush2.msra.mxu0 0.0
    %3297 = vmatprep.subr.mxu0 0.0
    %3298 = vmatpush2.msra.mxu0 0.0
    %3299 = vmatprep.subr.mxu0 0.0
    %3300 = vmatpush2.msra.mxu0 0.0
    %3301 = vmatprep.mubr.f32.mxu0 0.0
    %3302 = vmatmul.mubr.f32.gmra.mxu0 %v3235
    %v3303 = vpop.f32.mrf.mxu0
    %v3304 = vadd.f32 %v626, %v3303
    %v3305 = vpop.f32.mrf.mxu0
    %3306 = vdwg.mxu0
    %3308 = vrot.lane.b32.xlu0 %v2946, 32
    %v3309 = vpop.permute.xlu0 %3308
    %v3310 = vsel %vm258, %v3309, 0
    %3312 = vmatprep.subr.mxu0 0.0
    %3313 = vmatpush1.msra.mxu0 0.0
    %3314 = vmatprep.subr.mxu0 0.0
    %3315 = vmatpush1.msra.mxu0 0.0
    %3316 = vmatprep.subr.mxu0 0.0
    %3317 = vmatpush1.msra.mxu0 0.0
    %3318 = vmatprep.subr.mxu0 0.0
    %3319 = vmatpush1.msra.mxu0 0.0
    %3320 = vmatprep.subr.mxu0 0.0
    %3321 = vmatpush1.msra.mxu0 0.0
    %3322 = vmatprep.subr.mxu0 0.0
    %3323 = vmatpush1.msra.mxu0 0.0
    %3324 = vmatprep.subr.mxu0 0.0
    %3325 = vmatpush1.msra.mxu0 0.0
    %3326 = vmatprep.subr.mxu0 0.0
    %3327 = vmatpush1.msra.mxu0 0.0
    %3328 = vmatprep.subr.mxu0 0.0
    %3329 = vmatpush1.msra.mxu0 0.0
    %3330 = vmatprep.subr.mxu0 0.0
    %3331 = vmatpush1.msra.mxu0 0.0
    %3332 = vmatprep.subr.mxu0 0.0
    %3333 = vmatpush1.msra.mxu0 0.0
    %3334 = vmatprep.subr.mxu0 0.0
    %3335 = vmatpush1.msra.mxu0 0.0
    %3336 = vmatprep.subr.mxu0 0.0
    %3337 = vmatpush1.msra.mxu0 %v702
    %3338 = vmatprep.subr.mxu0 0.0
    %3339 = vmatpush1.msra.mxu0 %v701
    %3340 = vmatprep.subr.mxu0 0.0
    %3341 = vmatpush1.msra.mxu0 %v700
    %3342 = vmatprep.subr.mxu0 0.0
    %3343 = vmatpush1.msra.mxu0 %v699
    %3344 = vmatprep.subr.mxu0 0.0
    %3345 = vmatpush2.msra.mxu0 0.0
    %3346 = vmatprep.subr.mxu0 0.0
    %3347 = vmatpush2.msra.mxu0 0.0
    %3348 = vmatprep.subr.mxu0 0.0
    %3349 = vmatpush2.msra.mxu0 0.0
    %3350 = vmatprep.subr.mxu0 0.0
    %3351 = vmatpush2.msra.mxu0 0.0
    %3352 = vmatprep.subr.mxu0 0.0
    %3353 = vmatpush2.msra.mxu0 0.0
    %3354 = vmatprep.subr.mxu0 0.0
    %3355 = vmatpush2.msra.mxu0 0.0
    %3356 = vmatprep.subr.mxu0 0.0
    %3357 = vmatpush2.msra.mxu0 0.0
    %3358 = vmatprep.subr.mxu0 0.0
    %3359 = vmatpush2.msra.mxu0 0.0
    %3360 = vmatprep.subr.mxu0 0.0
    %3361 = vmatpush2.msra.mxu0 0.0
    %3362 = vmatprep.subr.mxu0 0.0
    %3363 = vmatpush2.msra.mxu0 0.0
    %3364 = vmatprep.subr.mxu0 0.0
    %3365 = vmatpush2.msra.mxu0 0.0
    %3366 = vmatprep.subr.mxu0 0.0
    %3367 = vmatpush2.msra.mxu0 0.0
    %3368 = vmatprep.subr.mxu0 0.0
    %3369 = vmatpush2.msra.mxu0 0.0
    %3370 = vmatprep.subr.mxu0 0.0
    %3371 = vmatpush2.msra.mxu0 0.0
    %3372 = vmatprep.subr.mxu0 0.0
    %3373 = vmatpush2.msra.mxu0 0.0
    %3374 = vmatprep.subr.mxu0 0.0
    %3375 = vmatpush2.msra.mxu0 0.0
    %3376 = vmatprep.mubr.f32.mxu0 0.0
    %3377 = vmatmul.mubr.f32.gmra.mxu0 %v3310
    %v3378 = vpop.f32.mrf.mxu0
    %v3379 = vadd.f32 0.0, %v3378
    %v3380 = vpop.f32.mrf.mxu0
    %3381 = vdwg.mxu0
    %v3382 = vadd.f32 %v3304, %v3379
    %v3383 = vxor.u32 %v3382, 2147483648
    %v3384 = vmul.f32 %v3383, 1.442695
    %v3385 = vpow.pop %v3384
    %v3386 = vadd.f32 %v3385, 1.0
    %v3387 = vrcp.pop %v3386
    %v3388 = vmul.f32 1.0, %v3387
    %v3389 = vmul.f32 %v3388, 2.0
    %v3390 = vsub.f32 %v3389, 1.0
    %v3391 = vmul.f32 %v3388, %v2947
    %3393 = vrot.lane.b32.xlu0 %v3390, 64
    %v3394 = vpop.permute.xlu0 %3393
    %v3396 = vmul.f32 %v3388, %v3394
    %3398 = vrot.lane.b32.xlu0 %v3396, 32
    %v3399 = vpop.permute.xlu0 %3398
    %v3401 = vadd.f32 %v3391, %v3399
    %v3402 = vtanh.pop %v3401
    %3404 = vrot.lane.b32.xlu0 %v3402, 64
    %v3405 = vpop.permute.xlu0 %3404
    %v3407 = vmul.f32 %v3388, %v3405
    %v3408 = vsel %vm2766, %v3407, %v2946
    %v3409 = vsel %vm2766, %v3401, %v2947
    %v3410 = vsel %vm2766, %v3407, 0.0
    %3412 = vrot.lane.b32.xlu0 %v2948, 32
    %v3413 = vpop.permute.xlu0 %3412
    %v3414 = vsel %vm258, %v3413, 0
    %3416 = vmatprep.subr.mxu0 0.0
    %3417 = vmatpush1.msra.mxu0 0.0
    %3418 = vmatprep.subr.mxu0 0.0
    %3419 = vmatpush1.msra.mxu0 0.0
    %3420 = vmatprep.subr.mxu0 0.0
    %3421 = vmatpush1.msra.mxu0 0.0
    %3422 = vmatprep.subr.mxu0 0.0
    %3423 = vmatpush1.msra.mxu0 0.0
    %3424 = vmatprep.subr.mxu0 0.0
    %3425 = vmatpush1.msra.mxu0 0.0
    %3426 = vmatprep.subr.mxu0 0.0
    %3427 = vmatpush1.msra.mxu0 0.0
    %3428 = vmatprep.subr.mxu0 0.0
    %3429 = vmatpush1.msra.mxu0 0.0
    %3430 = vmatprep.subr.mxu0 0.0
    %3431 = vmatpush1.msra.mxu0 0.0
    %3432 = vmatprep.subr.mxu0 0.0
    %3433 = vmatpush1.msra.mxu0 0.0
    %3434 = vmatprep.subr.mxu0 0.0
    %3435 = vmatpush1.msra.mxu0 0.0
    %3436 = vmatprep.subr.mxu0 0.0
    %3437 = vmatpush1.msra.mxu0 0.0
    %3438 = vmatprep.subr.mxu0 0.0
    %3439 = vmatpush1.msra.mxu0 0.0
    %3440 = vmatprep.subr.mxu0 0.0
    %3441 = vmatpush1.msra.mxu0 %v1090
    %3442 = vmatprep.subr.mxu0 0.0
    %3443 = vmatpush1.msra.mxu0 %v1089
    %3444 = vmatprep.subr.mxu0 0.0
    %3445 = vmatpush1.msra.mxu0 %v1088
    %3446 = vmatprep.subr.mxu0 0.0
    %3447 = vmatpush1.msra.mxu0 %v1087
    %3448 = vmatprep.subr.mxu0 0.0
    %3449 = vmatpush2.msra.mxu0 0.0
    %3450 = vmatprep.subr.mxu0 0.0
    %3451 = vmatpush2.msra.mxu0 0.0
    %3452 = vmatprep.subr.mxu0 0.0
    %3453 = vmatpush2.msra.mxu0 0.0
    %3454 = vmatprep.subr.mxu0 0.0
    %3455 = vmatpush2.msra.mxu0 0.0
    %3456 = vmatprep.subr.mxu0 0.0
    %3457 = vmatpush2.msra.mxu0 0.0
    %3458 = vmatprep.subr.mxu0 0.0
    %3459 = vmatpush2.msra.mxu0 0.0
    %3460 = vmatprep.subr.mxu0 0.0
    %3461 = vmatpush2.msra.mxu0 0.0
    %3462 = vmatprep.subr.mxu0 0.0
    %3463 = vmatpush2.msra.mxu0 0.0
    %3464 = vmatprep.subr.mxu0 0.0
    %3465 = vmatpush2.msra.mxu0 0.0
    %3466 = vmatprep.subr.mxu0 0.0
    %3467 = vmatpush2.msra.mxu0 0.0
    %3468 = vmatprep.subr.mxu0 0.0
    %3469 = vmatpush2.msra.mxu0 0.0
    %3470 = vmatprep.subr.mxu0 0.0
    %3471 = vmatpush2.msra.mxu0 0.0
    %3472 = vmatprep.subr.mxu0 0.0
    %3473 = vmatpush2.msra.mxu0 0.0
    %3474 = vmatprep.subr.mxu0 0.0
    %3475 = vmatpush2.msra.mxu0 0.0
    %3476 = vmatprep.subr.mxu0 0.0
    %3477 = vmatpush2.msra.mxu0 0.0
    %3478 = vmatprep.subr.mxu0 0.0
    %3479 = vmatpush2.msra.mxu0 0.0
    %3480 = vmatprep.mubr.f32.mxu0 0.0
    %3481 = vmatmul.mubr.f32.gmra.mxu0 %v3414
    %v3482 = vpop.f32.mrf.mxu0
    %v3483 = vadd.f32 %v1097, %v3482
    %v3484 = vpop.f32.mrf.mxu0
    %3485 = vdwg.mxu0
    %3487 = vrot.lane.b32.xlu0 %v3125, 32
    %v3488 = vpop.permute.xlu0 %3487
    %v3489 = vsel %vm258, %v3488, 0
    %3491 = vmatprep.subr.mxu0 0.0
    %3492 = vmatpush1.msra.mxu0 0.0
    %3493 = vmatprep.subr.mxu0 0.0
    %3494 = vmatpush1.msra.mxu0 0.0
    %3495 = vmatprep.subr.mxu0 0.0
    %3496 = vmatpush1.msra.mxu0 0.0
    %3497 = vmatprep.subr.mxu0 0.0
    %3498 = vmatpush1.msra.mxu0 0.0
    %3499 = vmatprep.subr.mxu0 0.0
    %3500 = vmatpush1.msra.mxu0 0.0
    %3501 = vmatprep.subr.mxu0 0.0
    %3502 = vmatpush1.msra.mxu0 0.0
    %3503 = vmatprep.subr.mxu0 0.0
    %3504 = vmatpush1.msra.mxu0 0.0
    %3505 = vmatprep.subr.mxu0 0.0
    %3506 = vmatpush1.msra.mxu0 0.0
    %3507 = vmatprep.subr.mxu0 0.0
    %3508 = vmatpush1.msra.mxu0 0.0
    %3509 = vmatprep.subr.mxu0 0.0
    %3510 = vmatpush1.msra.mxu0 0.0
    %3511 = vmatprep.subr.mxu0 0.0
    %3512 = vmatpush1.msra.mxu0 0.0
    %3513 = vmatprep.subr.mxu0 0.0
    %3514 = vmatpush1.msra.mxu0 0.0
    %3515 = vmatprep.subr.mxu0 0.0
    %3516 = vmatpush1.msra.mxu0 %v1173
    %3517 = vmatprep.subr.mxu0 0.0
    %3518 = vmatpush1.msra.mxu0 %v1172
    %3519 = vmatprep.subr.mxu0 0.0
    %3520 = vmatpush1.msra.mxu0 %v1171
    %3521 = vmatprep.subr.mxu0 0.0
    %3522 = vmatpush1.msra.mxu0 %v1170
    %3523 = vmatprep.subr.mxu0 0.0
    %3524 = vmatpush2.msra.mxu0 0.0
    %3525 = vmatprep.subr.mxu0 0.0
    %3526 = vmatpush2.msra.mxu0 0.0
    %3527 = vmatprep.subr.mxu0 0.0
    %3528 = vmatpush2.msra.mxu0 0.0
    %3529 = vmatprep.subr.mxu0 0.0
    %3530 = vmatpush2.msra.mxu0 0.0
    %3531 = vmatprep.subr.mxu0 0.0
    %3532 = vmatpush2.msra.mxu0 0.0
    %3533 = vmatprep.subr.mxu0 0.0
    %3534 = vmatpush2.msra.mxu0 0.0
    %3535 = vmatprep.subr.mxu0 0.0
    %3536 = vmatpush2.msra.mxu0 0.0
    %3537 = vmatprep.subr.mxu0 0.0
    %3538 = vmatpush2.msra.mxu0 0.0
    %3539 = vmatprep.subr.mxu0 0.0
    %3540 = vmatpush2.msra.mxu0 0.0
    %3541 = vmatprep.subr.mxu0 0.0
    %3542 = vmatpush2.msra.mxu0 0.0
    %3543 = vmatprep.subr.mxu0 0.0
    %3544 = vmatpush2.msra.mxu0 0.0
    %3545 = vmatprep.subr.mxu0 0.0
    %3546 = vmatpush2.msra.mxu0 0.0
    %3547 = vmatprep.subr.mxu0 0.0
    %3548 = vmatpush2.msra.mxu0 0.0
    %3549 = vmatprep.subr.mxu0 0.0
    %3550 = vmatpush2.msra.mxu0 0.0
    %3551 = vmatprep.subr.mxu0 0.0
    %3552 = vmatpush2.msra.mxu0 0.0
    %3553 = vmatprep.subr.mxu0 0.0
    %3554 = vmatpush2.msra.mxu0 0.0
    %3555 = vmatprep.mubr.f32.mxu0 0.0
    %3556 = vmatmul.mubr.f32.gmra.mxu0 %v3489
    %v3557 = vpop.f32.mrf.mxu0
    %v3558 = vadd.f32 0.0, %v3557
    %v3559 = vpop.f32.mrf.mxu0
    %3560 = vdwg.mxu0
    %v3561 = vadd.f32 %v3483, %v3558
    %v3562 = vxor.u32 %v3561, 2147483648
    %v3563 = vmul.f32 %v3562, 1.442695
    %v3564 = vpow.pop %v3563
    %v3565 = vadd.f32 %v3564, 1.0
    %v3566 = vrcp.pop %v3565
    %v3567 = vmul.f32 1.0, %v3566
    %v3568 = vmul.f32 %v3567, 2.0
    %v3569 = vsub.f32 %v3568, 1.0
    %v3570 = vmul.f32 %v3567, %v3126
    %3572 = vrot.lane.b32.xlu0 %v3569, 64
    %v3573 = vpop.permute.xlu0 %3572
    %v3575 = vmul.f32 %v3567, %v3573
    %3577 = vrot.lane.b32.xlu0 %v3575, 32
    %v3578 = vpop.permute.xlu0 %3577
    %v3580 = vadd.f32 %v3570, %v3578
    %v3581 = vtanh.pop %v3580
    %3583 = vrot.lane.b32.xlu0 %v3581, 64
    %v3584 = vpop.permute.xlu0 %3583
    %v3586 = vmul.f32 %v3567, %v3584
    %v3587 = vsel %vm2302, %v3586, %v3125
    %v3588 = vsel %vm2302, %v3580, %v3126
    %v3589 = vsel %vm2302, %v3586, 0.0
    %3591 = vrot.lane.b32.xlu0 %v3231, 32
    %v3592 = vpop.permute.xlu0 %3591
    %v3593 = vsel %vm258, %v3592, 0
    %3595 = vmatprep.subr.mxu0 0.0
    %3596 = vmatpush1.msra.mxu0 0.0
    %3597 = vmatprep.subr.mxu0 0.0
    %3598 = vmatpush1.msra.mxu0 0.0
    %3599 = vmatprep.subr.mxu0 0.0
    %3600 = vmatpush1.msra.mxu0 0.0
    %3601 = vmatprep.subr.mxu0 0.0
    %3602 = vmatpush1.msra.mxu0 0.0
    %3603 = vmatprep.subr.mxu0 0.0
    %3604 = vmatpush1.msra.mxu0 0.0
    %3605 = vmatprep.subr.mxu0 0.0
    %3606 = vmatpush1.msra.mxu0 0.0
    %3607 = vmatprep.subr.mxu0 0.0
    %3608 = vmatpush1.msra.mxu0 0.0
    %3609 = vmatprep.subr.mxu0 0.0
    %3610 = vmatpush1.msra.mxu0 0.0
    %3611 = vmatprep.subr.mxu0 0.0
    %3612 = vmatpush1.msra.mxu0 0.0
    %3613 = vmatprep.subr.mxu0 0.0
    %3614 = vmatpush1.msra.mxu0 0.0
    %3615 = vmatprep.subr.mxu0 0.0
    %3616 = vmatpush1.msra.mxu0 0.0
    %3617 = vmatprep.subr.mxu0 0.0
    %3618 = vmatpush1.msra.mxu0 0.0
    %3619 = vmatprep.subr.mxu0 0.0
    %3620 = vmatpush1.msra.mxu0 %v619
    %3621 = vmatprep.subr.mxu0 0.0
    %3622 = vmatpush1.msra.mxu0 %v618
    %3623 = vmatprep.subr.mxu0 0.0
    %3624 = vmatpush1.msra.mxu0 %v617
    %3625 = vmatprep.subr.mxu0 0.0
    %3626 = vmatpush1.msra.mxu0 %v616
    %3627 = vmatprep.subr.mxu0 0.0
    %3628 = vmatpush2.msra.mxu0 0.0
    %3629 = vmatprep.subr.mxu0 0.0
    %3630 = vmatpush2.msra.mxu0 0.0
    %3631 = vmatprep.subr.mxu0 0.0
    %3632 = vmatpush2.msra.mxu0 0.0
    %3633 = vmatprep.subr.mxu0 0.0
    %3634 = vmatpush2.msra.mxu0 0.0
    %3635 = vmatprep.subr.mxu0 0.0
    %3636 = vmatpush2.msra.mxu0 0.0
    %3637 = vmatprep.subr.mxu0 0.0
    %3638 = vmatpush2.msra.mxu0 0.0
    %3639 = vmatprep.subr.mxu0 0.0
    %3640 = vmatpush2.msra.mxu0 0.0
    %3641 = vmatprep.subr.mxu0 0.0
    %3642 = vmatpush2.msra.mxu0 0.0
    %3643 = vmatprep.subr.mxu0 0.0
    %3644 = vmatpush2.msra.mxu0 0.0
    %3645 = vmatprep.subr.mxu0 0.0
    %3646 = vmatpush2.msra.mxu0 0.0
    %3647 = vmatprep.subr.mxu0 0.0
    %3648 = vmatpush2.msra.mxu0 0.0
    %3649 = vmatprep.subr.mxu0 0.0
    %3650 = vmatpush2.msra.mxu0 0.0
    %3651 = vmatprep.subr.mxu0 0.0
    %3652 = vmatpush2.msra.mxu0 0.0
    %3653 = vmatprep.subr.mxu0 0.0
    %3654 = vmatpush2.msra.mxu0 0.0
    %3655 = vmatprep.subr.mxu0 0.0
    %3656 = vmatpush2.msra.mxu0 0.0
    %3657 = vmatprep.subr.mxu0 0.0
    %3658 = vmatpush2.msra.mxu0 0.0
    %3659 = vmatprep.mubr.f32.mxu0 0.0
    %3660 = vmatmul.mubr.f32.gmra.mxu0 %v3593
    %v3661 = vpop.f32.mrf.mxu0
    %v3662 = vadd.f32 %v626, %v3661
    %v3663 = vpop.f32.mrf.mxu0
    %3664 = vdwg.mxu0
    %3666 = vrot.lane.b32.xlu0 %v3408, 32
    %v3667 = vpop.permute.xlu0 %3666
    %v3668 = vsel %vm258, %v3667, 0
    %3670 = vmatprep.subr.mxu0 0.0
    %3671 = vmatpush1.msra.mxu0 0.0
    %3672 = vmatprep.subr.mxu0 0.0
    %3673 = vmatpush1.msra.mxu0 0.0
    %3674 = vmatprep.subr.mxu0 0.0
    %3675 = vmatpush1.msra.mxu0 0.0
    %3676 = vmatprep.subr.mxu0 0.0
    %3677 = vmatpush1.msra.mxu0 0.0
    %3678 = vmatprep.subr.mxu0 0.0
    %3679 = vmatpush1.msra.mxu0 0.0
    %3680 = vmatprep.subr.mxu0 0.0
    %3681 = vmatpush1.msra.mxu0 0.0
    %3682 = vmatprep.subr.mxu0 0.0
    %3683 = vmatpush1.msra.mxu0 0.0
    %3684 = vmatprep.subr.mxu0 0.0
    %3685 = vmatpush1.msra.mxu0 0.0
    %3686 = vmatprep.subr.mxu0 0.0
    %3687 = vmatpush1.msra.mxu0 0.0
    %3688 = vmatprep.subr.mxu0 0.0
    %3689 = vmatpush1.msra.mxu0 0.0
    %3690 = vmatprep.subr.mxu0 0.0
    %3691 = vmatpush1.msra.mxu0 0.0
    %3692 = vmatprep.subr.mxu0 0.0
    %3693 = vmatpush1.msra.mxu0 0.0
    %3694 = vmatprep.subr.mxu0 0.0
    %3695 = vmatpush1.msra.mxu0 %v702
    %3696 = vmatprep.subr.mxu0 0.0
    %3697 = vmatpush1.msra.mxu0 %v701
    %3698 = vmatprep.subr.mxu0 0.0
    %3699 = vmatpush1.msra.mxu0 %v700
    %3700 = vmatprep.subr.mxu0 0.0
    %3701 = vmatpush1.msra.mxu0 %v699
    %3702 = vmatprep.subr.mxu0 0.0
    %3703 = vmatpush2.msra.mxu0 0.0
    %3704 = vmatprep.subr.mxu0 0.0
    %3705 = vmatpush2.msra.mxu0 0.0
    %3706 = vmatprep.subr.mxu0 0.0
    %3707 = vmatpush2.msra.mxu0 0.0
    %3708 = vmatprep.subr.mxu0 0.0
    %3709 = vmatpush2.msra.mxu0 0.0
    %3710 = vmatprep.subr.mxu0 0.0
    %3711 = vmatpush2.msra.mxu0 0.0
    %3712 = vmatprep.subr.mxu0 0.0
    %3713 = vmatpush2.msra.mxu0 0.0
    %3714 = vmatprep.subr.mxu0 0.0
    %3715 = vmatpush2.msra.mxu0 0.0
    %3716 = vmatprep.subr.mxu0 0.0
    %3717 = vmatpush2.msra.mxu0 0.0
    %3718 = vmatprep.subr.mxu0 0.0
    %3719 = vmatpush2.msra.mxu0 0.0
    %3720 = vmatprep.subr.mxu0 0.0
    %3721 = vmatpush2.msra.mxu0 0.0
    %3722 = vmatprep.subr.mxu0 0.0
    %3723 = vmatpush2.msra.mxu0 0.0
    %3724 = vmatprep.subr.mxu0 0.0
    %3725 = vmatpush2.msra.mxu0 0.0
    %3726 = vmatprep.subr.mxu0 0.0
    %3727 = vmatpush2.msra.mxu0 0.0
    %3728 = vmatprep.subr.mxu0 0.0
    %3729 = vmatpush2.msra.mxu0 0.0
    %3730 = vmatprep.subr.mxu0 0.0
    %3731 = vmatpush2.msra.mxu0 0.0
    %3732 = vmatprep.subr.mxu0 0.0
    %3733 = vmatpush2.msra.mxu0 0.0
    %3734 = vmatprep.mubr.f32.mxu0 0.0
    %3735 = vmatmul.mubr.f32.gmra.mxu0 %v3668
    %v3736 = vpop.f32.mrf.mxu0
    %v3737 = vadd.f32 0.0, %v3736
    %v3738 = vpop.f32.mrf.mxu0
    %3739 = vdwg.mxu0
    %v3740 = vadd.f32 %v3662, %v3737
    %v3741 = vxor.u32 %v3740, 2147483648
    %v3742 = vmul.f32 %v3741, 1.442695
    %v3743 = vpow.pop %v3742
    %v3744 = vadd.f32 %v3743, 1.0
    %v3745 = vrcp.pop %v3744
    %v3746 = vmul.f32 1.0, %v3745
    %v3747 = vmul.f32 %v3746, 2.0
    %v3748 = vsub.f32 %v3747, 1.0
    %v3749 = vmul.f32 %v3746, %v3409
    %3751 = vrot.lane.b32.xlu0 %v3748, 64
    %v3752 = vpop.permute.xlu0 %3751
    %v3754 = vmul.f32 %v3746, %v3752
    %3756 = vrot.lane.b32.xlu0 %v3754, 32
    %v3757 = vpop.permute.xlu0 %3756
    %v3759 = vadd.f32 %v3749, %v3757
    %v3760 = vtanh.pop %v3759
    %3762 = vrot.lane.b32.xlu0 %v3760, 64
    %v3763 = vpop.permute.xlu0 %3762
    %v3765 = vmul.f32 %v3746, %v3763
    %v3766 = vsel %vm3230, %v3765, 0.0
    %3768 = vrot.lane.b32.xlu0 %v3410, 32
    %v3769 = vpop.permute.xlu0 %3768
    %v3770 = vsel %vm258, %v3769, 0
    %3772 = vmatprep.subr.mxu0 0.0
    %3773 = vmatpush1.msra.mxu0 0.0
    %3774 = vmatprep.subr.mxu0 0.0
    %3775 = vmatpush1.msra.mxu0 0.0
    %3776 = vmatprep.subr.mxu0 0.0
    %3777 = vmatpush1.msra.mxu0 0.0
    %3778 = vmatprep.subr.mxu0 0.0
    %3779 = vmatpush1.msra.mxu0 0.0
    %3780 = vmatprep.subr.mxu0 0.0
    %3781 = vmatpush1.msra.mxu0 0.0
    %3782 = vmatprep.subr.mxu0 0.0
    %3783 = vmatpush1.msra.mxu0 0.0
    %3784 = vmatprep.subr.mxu0 0.0
    %3785 = vmatpush1.msra.mxu0 0.0
    %3786 = vmatprep.subr.mxu0 0.0
    %3787 = vmatpush1.msra.mxu0 0.0
    %3788 = vmatprep.subr.mxu0 0.0
    %3789 = vmatpush1.msra.mxu0 0.0
    %3790 = vmatprep.subr.mxu0 0.0
    %3791 = vmatpush1.msra.mxu0 0.0
    %3792 = vmatprep.subr.mxu0 0.0
    %3793 = vmatpush1.msra.mxu0 0.0
    %3794 = vmatprep.subr.mxu0 0.0
    %3795 = vmatpush1.msra.mxu0 0.0
    %3796 = vmatprep.subr.mxu0 0.0
    %3797 = vmatpush1.msra.mxu0 %v1090
    %3798 = vmatprep.subr.mxu0 0.0
    %3799 = vmatpush1.msra.mxu0 %v1089
    %3800 = vmatprep.subr.mxu0 0.0
    %3801 = vmatpush1.msra.mxu0 %v1088
    %3802 = vmatprep.subr.mxu0 0.0
    %3803 = vmatpush1.msra.mxu0 %v1087
    %3804 = vmatprep.subr.mxu0 0.0
    %3805 = vmatpush2.msra.mxu0 0.0
    %3806 = vmatprep.subr.mxu0 0.0
    %3807 = vmatpush2.msra.mxu0 0.0
    %3808 = vmatprep.subr.mxu0 0.0
    %3809 = vmatpush2.msra.mxu0 0.0
    %3810 = vmatprep.subr.mxu0 0.0
    %3811 = vmatpush2.msra.mxu0 0.0
    %3812 = vmatprep.subr.mxu0 0.0
    %3813 = vmatpush2.msra.mxu0 0.0
    %3814 = vmatprep.subr.mxu0 0.0
    %3815 = vmatpush2.msra.mxu0 0.0
    %3816 = vmatprep.subr.mxu0 0.0
    %3817 = vmatpush2.msra.mxu0 0.0
    %3818 = vmatprep.subr.mxu0 0.0
    %3819 = vmatpush2.msra.mxu0 0.0
    %3820 = vmatprep.subr.mxu0 0.0
    %3821 = vmatpush2.msra.mxu0 0.0
    %3822 = vmatprep.subr.mxu0 0.0
    %3823 = vmatpush2.msra.mxu0 0.0
    %3824 = vmatprep.subr.mxu0 0.0
    %3825 = vmatpush2.msra.mxu0 0.0
    %3826 = vmatprep.subr.mxu0 0.0
    %3827 = vmatpush2.msra.mxu0 0.0
    %3828 = vmatprep.subr.mxu0 0.0
    %3829 = vmatpush2.msra.mxu0 0.0
    %3830 = vmatprep.subr.mxu0 0.0
    %3831 = vmatpush2.msra.mxu0 0.0
    %3832 = vmatprep.subr.mxu0 0.0
    %3833 = vmatpush2.msra.mxu0 0.0
    %3834 = vmatprep.subr.mxu0 0.0
    %3835 = vmatpush2.msra.mxu0 0.0
    %3836 = vmatprep.mubr.f32.mxu0 0.0
    %3837 = vmatmul.mubr.f32.gmra.mxu0 %v3770
    %v3838 = vpop.f32.mrf.mxu0
    %v3839 = vadd.f32 %v1097, %v3838
    %v3840 = vpop.f32.mrf.mxu0
    %3841 = vdwg.mxu0
    %3843 = vrot.lane.b32.xlu0 %v3587, 32
    %v3844 = vpop.permute.xlu0 %3843
    %v3845 = vsel %vm258, %v3844, 0
    %3847 = vmatprep.subr.mxu0 0.0
    %3848 = vmatpush1.msra.mxu0 0.0
    %3849 = vmatprep.subr.mxu0 0.0
    %3850 = vmatpush1.msra.mxu0 0.0
    %3851 = vmatprep.subr.mxu0 0.0
    %3852 = vmatpush1.msra.mxu0 0.0
    %3853 = vmatprep.subr.mxu0 0.0
    %3854 = vmatpush1.msra.mxu0 0.0
    %3855 = vmatprep.subr.mxu0 0.0
    %3856 = vmatpush1.msra.mxu0 0.0
    %3857 = vmatprep.subr.mxu0 0.0
    %3858 = vmatpush1.msra.mxu0 0.0
    %3859 = vmatprep.subr.mxu0 0.0
    %3860 = vmatpush1.msra.mxu0 0.0
    %3861 = vmatprep.subr.mxu0 0.0
    %3862 = vmatpush1.msra.mxu0 0.0
    %3863 = vmatprep.subr.mxu0 0.0
    %3864 = vmatpush1.msra.mxu0 0.0
    %3865 = vmatprep.subr.mxu0 0.0
    %3866 = vmatpush1.msra.mxu0 0.0
    %3867 = vmatprep.subr.mxu0 0.0
    %3868 = vmatpush1.msra.mxu0 0.0
    %3869 = vmatprep.subr.mxu0 0.0
    %3870 = vmatpush1.msra.mxu0 0.0
    %3871 = vmatprep.subr.mxu0 0.0
    %3872 = vmatpush1.msra.mxu0 %v1173
    %3873 = vmatprep.subr.mxu0 0.0
    %3874 = vmatpush1.msra.mxu0 %v1172
    %3875 = vmatprep.subr.mxu0 0.0
    %3876 = vmatpush1.msra.mxu0 %v1171
    %3877 = vmatprep.subr.mxu0 0.0
    %3878 = vmatpush1.msra.mxu0 %v1170
    %3879 = vmatprep.subr.mxu0 0.0
    %3880 = vmatpush2.msra.mxu0 0.0
    %3881 = vmatprep.subr.mxu0 0.0
    %3882 = vmatpush2.msra.mxu0 0.0
    %3883 = vmatprep.subr.mxu0 0.0
    %3884 = vmatpush2.msra.mxu0 0.0
    %3885 = vmatprep.subr.mxu0 0.0
    %3886 = vmatpush2.msra.mxu0 0.0
    %3887 = vmatprep.subr.mxu0 0.0
    %3888 = vmatpush2.msra.mxu0 0.0
    %3889 = vmatprep.subr.mxu0 0.0
    %3890 = vmatpush2.msra.mxu0 0.0
    %3891 = vmatprep.subr.mxu0 0.0
    %3892 = vmatpush2.msra.mxu0 0.0
    %3893 = vmatprep.subr.mxu0 0.0
    %3894 = vmatpush2.msra.mxu0 0.0
    %3895 = vmatprep.subr.mxu0 0.0
    %3896 = vmatpush2.msra.mxu0 0.0
    %3897 = vmatprep.subr.mxu0 0.0
    %3898 = vmatpush2.msra.mxu0 0.0
    %3899 = vmatprep.subr.mxu0 0.0
    %3900 = vmatpush2.msra.mxu0 0.0
    %3901 = vmatprep.subr.mxu0 0.0
    %3902 = vmatpush2.msra.mxu0 0.0
    %3903 = vmatprep.subr.mxu0 0.0
    %3904 = vmatpush2.msra.mxu0 0.0
    %3905 = vmatprep.subr.mxu0 0.0
    %3906 = vmatpush2.msra.mxu0 0.0
    %3907 = vmatprep.subr.mxu0 0.0
    %3908 = vmatpush2.msra.mxu0 0.0
    %3909 = vmatprep.subr.mxu0 0.0
    %3910 = vmatpush2.msra.mxu0 0.0
    %3911 = vmatprep.mubr.f32.mxu0 0.0
    %3912 = vmatmul.mubr.f32.gmra.mxu0 %v3845
    %v3913 = vpop.f32.mrf.mxu0
    %v3914 = vadd.f32 0.0, %v3913
    %v3915 = vpop.f32.mrf.mxu0
    %3916 = vdwg.mxu0
    %v3917 = vadd.f32 %v3839, %v3914
    %v3918 = vxor.u32 %v3917, 2147483648
    %v3919 = vmul.f32 %v3918, 1.442695
    %v3920 = vpow.pop %v3919
    %v3921 = vadd.f32 %v3920, 1.0
    %v3922 = vrcp.pop %v3921
    %v3923 = vmul.f32 1.0, %v3922
    %v3924 = vmul.f32 %v3923, 2.0
    %v3925 = vsub.f32 %v3924, 1.0
    %v3926 = vmul.f32 %v3923, %v3588
    %3928 = vrot.lane.b32.xlu0 %v3925, 64
    %v3929 = vpop.permute.xlu0 %3928
    %v3931 = vmul.f32 %v3923, %v3929
    %3933 = vrot.lane.b32.xlu0 %v3931, 32
    %v3934 = vpop.permute.xlu0 %3933
    %v3936 = vadd.f32 %v3926, %v3934
    %v3937 = vtanh.pop %v3936
    %3939 = vrot.lane.b32.xlu0 %v3937, 64
    %v3940 = vpop.permute.xlu0 %3939
    %v3942 = vmul.f32 %v3923, %v3940
    %v3943 = vsel %vm2766, %v3942, %v3587
    %v3944 = vsel %vm2766, %v3936, %v3588
    %v3945 = vsel %vm2766, %v3942, 0.0
    %3947 = vrot.lane.b32.xlu0 %v3766, 32
    %v3948 = vpop.permute.xlu0 %3947
    %v3949 = vsel %vm258, %v3948, 0
    %3951 = vmatprep.subr.mxu0 0.0
    %3952 = vmatpush1.msra.mxu0 0.0
    %3953 = vmatprep.subr.mxu0 0.0
    %3954 = vmatpush1.msra.mxu0 0.0
    %3955 = vmatprep.subr.mxu0 0.0
    %3956 = vmatpush1.msra.mxu0 0.0
    %3957 = vmatprep.subr.mxu0 0.0
    %3958 = vmatpush1.msra.mxu0 0.0
    %3959 = vmatprep.subr.mxu0 0.0
    %3960 = vmatpush1.msra.mxu0 0.0
    %3961 = vmatprep.subr.mxu0 0.0
    %3962 = vmatpush1.msra.mxu0 0.0
    %3963 = vmatprep.subr.mxu0 0.0
    %3964 = vmatpush1.msra.mxu0 0.0
    %3965 = vmatprep.subr.mxu0 0.0
    %3966 = vmatpush1.msra.mxu0 0.0
    %3967 = vmatprep.subr.mxu0 0.0
    %3968 = vmatpush1.msra.mxu0 0.0
    %3969 = vmatprep.subr.mxu0 0.0
    %3970 = vmatpush1.msra.mxu0 0.0
    %3971 = vmatprep.subr.mxu0 0.0
    %3972 = vmatpush1.msra.mxu0 0.0
    %3973 = vmatprep.subr.mxu0 0.0
    %3974 = vmatpush1.msra.mxu0 0.0
    %3975 = vmatprep.subr.mxu0 0.0
    %3976 = vmatpush1.msra.mxu0 %v1090
    %3977 = vmatprep.subr.mxu0 0.0
    %3978 = vmatpush1.msra.mxu0 %v1089
    %3979 = vmatprep.subr.mxu0 0.0
    %3980 = vmatpush1.msra.mxu0 %v1088
    %3981 = vmatprep.subr.mxu0 0.0
    %3982 = vmatpush1.msra.mxu0 %v1087
    %3983 = vmatprep.subr.mxu0 0.0
    %3984 = vmatpush2.msra.mxu0 0.0
    %3985 = vmatprep.subr.mxu0 0.0
    %3986 = vmatpush2.msra.mxu0 0.0
    %3987 = vmatprep.subr.mxu0 0.0
    %3988 = vmatpush2.msra.mxu0 0.0
    %3989 = vmatprep.subr.mxu0 0.0
    %3990 = vmatpush2.msra.mxu0 0.0
    %3991 = vmatprep.subr.mxu0 0.0
    %3992 = vmatpush2.msra.mxu0 0.0
    %3993 = vmatprep.subr.mxu0 0.0
    %3994 = vmatpush2.msra.mxu0 0.0
    %3995 = vmatprep.subr.mxu0 0.0
    %3996 = vmatpush2.msra.mxu0 0.0
    %3997 = vmatprep.subr.mxu0 0.0
    %3998 = vmatpush2.msra.mxu0 0.0
    %3999 = vmatprep.subr.mxu0 0.0
    %4000 = vmatpush2.msra.mxu0 0.0
    %4001 = vmatprep.subr.mxu0 0.0
    %4002 = vmatpush2.msra.mxu0 0.0
    %4003 = vmatprep.subr.mxu0 0.0
    %4004 = vmatpush2.msra.mxu0 0.0
    %4005 = vmatprep.subr.mxu0 0.0
    %4006 = vmatpush2.msra.mxu0 0.0
    %4007 = vmatprep.subr.mxu0 0.0
    %4008 = vmatpush2.msra.mxu0 0.0
    %4009 = vmatprep.subr.mxu0 0.0
    %4010 = vmatpush2.msra.mxu0 0.0
    %4011 = vmatprep.subr.mxu0 0.0
    %4012 = vmatpush2.msra.mxu0 0.0
    %4013 = vmatprep.subr.mxu0 0.0
    %4014 = vmatpush2.msra.mxu0 0.0
    %4015 = vmatprep.mubr.f32.mxu0 0.0
    %4016 = vmatmul.mubr.f32.gmra.mxu0 %v3949
    %v4017 = vpop.f32.mrf.mxu0
    %v4018 = vadd.f32 %v1097, %v4017
    %v4019 = vpop.f32.mrf.mxu0
    %4020 = vdwg.mxu0
    %4022 = vrot.lane.b32.xlu0 %v3943, 32
    %v4023 = vpop.permute.xlu0 %4022
    %v4024 = vsel %vm258, %v4023, 0
    %4026 = vmatprep.subr.mxu0 0.0
    %4027 = vmatpush1.msra.mxu0 0.0
    %4028 = vmatprep.subr.mxu0 0.0
    %4029 = vmatpush1.msra.mxu0 0.0
    %4030 = vmatprep.subr.mxu0 0.0
    %4031 = vmatpush1.msra.mxu0 0.0
    %4032 = vmatprep.subr.mxu0 0.0
    %4033 = vmatpush1.msra.mxu0 0.0
    %4034 = vmatprep.subr.mxu0 0.0
    %4035 = vmatpush1.msra.mxu0 0.0
    %4036 = vmatprep.subr.mxu0 0.0
    %4037 = vmatpush1.msra.mxu0 0.0
    %4038 = vmatprep.subr.mxu0 0.0
    %4039 = vmatpush1.msra.mxu0 0.0
    %4040 = vmatprep.subr.mxu0 0.0
    %4041 = vmatpush1.msra.mxu0 0.0
    %4042 = vmatprep.subr.mxu0 0.0
    %4043 = vmatpush1.msra.mxu0 0.0
    %4044 = vmatprep.subr.mxu0 0.0
    %4045 = vmatpush1.msra.mxu0 0.0
    %4046 = vmatprep.subr.mxu0 0.0
    %4047 = vmatpush1.msra.mxu0 0.0
    %4048 = vmatprep.subr.mxu0 0.0
    %4049 = vmatpush1.msra.mxu0 0.0
    %4050 = vmatprep.subr.mxu0 0.0
    %4051 = vmatpush1.msra.mxu0 %v1173
    %4052 = vmatprep.subr.mxu0 0.0
    %4053 = vmatpush1.msra.mxu0 %v1172
    %4054 = vmatprep.subr.mxu0 0.0
    %4055 = vmatpush1.msra.mxu0 %v1171
    %4056 = vmatprep.subr.mxu0 0.0
    %4057 = vmatpush1.msra.mxu0 %v1170
    %4058 = vmatprep.subr.mxu0 0.0
    %4059 = vmatpush2.msra.mxu0 0.0
    %4060 = vmatprep.subr.mxu0 0.0
    %4061 = vmatpush2.msra.mxu0 0.0
    %4062 = vmatprep.subr.mxu0 0.0
    %4063 = vmatpush2.msra.mxu0 0.0
    %4064 = vmatprep.subr.mxu0 0.0
    %4065 = vmatpush2.msra.mxu0 0.0
    %4066 = vmatprep.subr.mxu0 0.0
    %4067 = vmatpush2.msra.mxu0 0.0
    %4068 = vmatprep.subr.mxu0 0.0
    %4069 = vmatpush2.msra.mxu0 0.0
    %4070 = vmatprep.subr.mxu0 0.0
    %4071 = vmatpush2.msra.mxu0 0.0
    %4072 = vmatprep.subr.mxu0 0.0
    %4073 = vmatpush2.msra.mxu0 0.0
    %4074 = vmatprep.subr.mxu0 0.0
    %4075 = vmatpush2.msra.mxu0 0.0
    %4076 = vmatprep.subr.mxu0 0.0
    %4077 = vmatpush2.msra.mxu0 0.0
    %4078 = vmatprep.subr.mxu0 0.0
    %4079 = vmatpush2.msra.mxu0 0.0
    %4080 = vmatprep.subr.mxu0 0.0
    %4081 = vmatpush2.msra.mxu0 0.0
    %4082 = vmatprep.subr.mxu0 0.0
    %4083 = vmatpush2.msra.mxu0 0.0
    %4084 = vmatprep.subr.mxu0 0.0
    %4085 = vmatpush2.msra.mxu0 0.0
    %4086 = vmatprep.subr.mxu0 0.0
    %4087 = vmatpush2.msra.mxu0 0.0
    %4088 = vmatprep.subr.mxu0 0.0
    %4089 = vmatpush2.msra.mxu0 0.0
    %4090 = vmatprep.mubr.f32.mxu0 0.0
    %4091 = vmatmul.mubr.f32.gmra.mxu0 %v4024
    %v4092 = vpop.f32.mrf.mxu0
    %v4093 = vadd.f32 0.0, %v4092
    %v4094 = vpop.f32.mrf.mxu0
    %4095 = vdwg.mxu0
    %v4096 = vadd.f32 %v4018, %v4093
    %v4097 = vxor.u32 %v4096, 2147483648
    %v4098 = vmul.f32 %v4097, 1.442695
    %v4099 = vpow.pop %v4098
    %v4100 = vadd.f32 %v4099, 1.0
    %v4101 = vrcp.pop %v4100
    %v4102 = vmul.f32 1.0, %v4101
    %v4103 = vmul.f32 %v4102, 2.0
    %v4104 = vsub.f32 %v4103, 1.0
    %v4105 = vmul.f32 %v4102, %v3944
    %4107 = vrot.lane.b32.xlu0 %v4104, 64
    %v4108 = vpop.permute.xlu0 %4107
    %v4110 = vmul.f32 %v4102, %v4108
    %4112 = vrot.lane.b32.xlu0 %v4110, 32
    %v4113 = vpop.permute.xlu0 %4112
    %v4115 = vadd.f32 %v4105, %v4113
    %v4116 = vtanh.pop %v4115
    %4118 = vrot.lane.b32.xlu0 %v4116, 64
    %v4119 = vpop.permute.xlu0 %4118
    %v4121 = vmul.f32 %v4102, %v4119
    %v4122 = vsel %vm3230, %v4121, 0.0
    %v4123 = vld [vmem:[%s6] sm:$0xff]
    %v4124 = vld [vmem:[%s6 + $0x8] sm:$0xff]
    %v4125 = vld [vmem:[%s6 + $0x10] sm:$0xff]
    %v4126 = vld [vmem:[%s6 + $0x18] sm:$0xff]
    %v4127 = vld [vmem:[%s7] sm:$0x1]
    %v4129 = vlaneseq
    %v4130 = vshrl.u32 %v4129, 7
    %v4131 = vsub.s32 0, %v4130
    %v4132 = vrot.slane %v4127, %v4131
    %4141 = vrot.lane.b32.xlu0 %v1735, 32
    %v4142 = vpop.permute.xlu0 %4141
    %4143 = vrot.lane.b32.xlu0 %v2199, 32
    %v4144 = vpop.permute.xlu0 %4143
    %4145 = vrot.lane.b32.xlu0 %v2663, 32
    %v4146 = vpop.permute.xlu0 %4145
    %4147 = vrot.lane.b32.xlu0 %v3127, 32
    %v4148 = vpop.permute.xlu0 %4147
    %4149 = vrot.lane.b32.xlu0 %v3589, 32
    %v4150 = vpop.permute.xlu0 %4149
    %4151 = vrot.lane.b32.xlu0 %v3945, 32
    %v4152 = vpop.permute.xlu0 %4151
    %4153 = vrot.lane.b32.xlu0 %v4122, 32
    %v4154 = vpop.permute.xlu0 %4153
    %v4155 = vsel %vm258, %v4142, 0
    %v4157 = vsel %vm258, %v4144, 0
    %v4159 = vsel %vm258, %v4146, 0
    %v4161 = vsel %vm258, %v4148, 0
    %v4163 = vsel %vm258, %v4150, 0
    %v4165 = vsel %vm258, %v4152, 0
    %v4167 = vsel %vm258, %v4154, 0
    %4169 = vmatprep.subr.mxu0 0.0
    %4170 = vmatpush1.msra.mxu0 0.0
    %4171 = vmatprep.subr.mxu0 0.0
    %4172 = vmatpush1.msra.mxu0 0.0
    %4173 = vmatprep.subr.mxu0 0.0
    %4174 = vmatpush1.msra.mxu0 0.0
    %4175 = vmatprep.subr.mxu0 0.0
    %4176 = vmatpush1.msra.mxu0 0.0
    %4177 = vmatprep.subr.mxu0 0.0
    %4178 = vmatpush1.msra.mxu0 0.0
    %4179 = vmatprep.subr.mxu0 0.0
    %4180 = vmatpush1.msra.mxu0 0.0
    %4181 = vmatprep.subr.mxu0 0.0
    %4182 = vmatpush1.msra.mxu0 0.0
    %4183 = vmatprep.subr.mxu0 0.0
    %4184 = vmatpush1.msra.mxu0 0.0
    %4185 = vmatprep.subr.mxu0 0.0
    %4186 = vmatpush1.msra.mxu0 0.0
    %4187 = vmatprep.subr.mxu0 0.0
    %4188 = vmatpush1.msra.mxu0 0.0
    %4189 = vmatprep.subr.mxu0 0.0
    %4190 = vmatpush1.msra.mxu0 0.0
    %4191 = vmatprep.subr.mxu0 0.0
    %4192 = vmatpush1.msra.mxu0 0.0
    %4193 = vmatprep.subr.mxu0 0.0
    %4194 = vmatpush1.msra.mxu0 %v4126
    %4195 = vmatprep.subr.mxu0 0.0
    %4196 = vmatpush1.msra.mxu0 %v4125
    %4197 = vmatprep.subr.mxu0 0.0
    %4198 = vmatpush1.msra.mxu0 %v4124
    %4199 = vmatprep.subr.mxu0 0.0
    %4200 = vmatpush1.msra.mxu0 %v4123
    %4201 = vmatprep.subr.mxu0 0.0
    %4202 = vmatpush2.msra.mxu0 0.0
    %4203 = vmatprep.subr.mxu0 0.0
    %4204 = vmatpush2.msra.mxu0 0.0
    %4205 = vmatprep.subr.mxu0 0.0
    %4206 = vmatpush2.msra.mxu0 0.0
    %4207 = vmatprep.subr.mxu0 0.0
    %4208 = vmatpush2.msra.mxu0 0.0
    %4209 = vmatprep.subr.mxu0 0.0
    %4210 = vmatpush2.msra.mxu0 0.0
    %4211 = vmatprep.subr.mxu0 0.0
    %4212 = vmatpush2.msra.mxu0 0.0
    %4213 = vmatprep.subr.mxu0 0.0
    %4214 = vmatpush2.msra.mxu0 0.0
    %4215 = vmatprep.subr.mxu0 0.0
    %4216 = vmatpush2.msra.mxu0 0.0
    %4217 = vmatprep.subr.mxu0 0.0
    %4218 = vmatpush2.msra.mxu0 0.0
    %4219 = vmatprep.subr.mxu0 0.0
    %4220 = vmatpush2.msra.mxu0 0.0
    %4221 = vmatprep.subr.mxu0 0.0
    %4222 = vmatpush2.msra.mxu0 0.0
    %4223 = vmatprep.subr.mxu0 0.0
    %4224 = vmatpush2.msra.mxu0 0.0
    %4225 = vmatprep.subr.mxu0 0.0
    %4226 = vmatpush2.msra.mxu0 0.0
    %4227 = vmatprep.subr.mxu0 0.0
    %4228 = vmatpush2.msra.mxu0 0.0
    %4229 = vmatprep.subr.mxu0 0.0
    %4230 = vmatpush2.msra.mxu0 0.0
    %4231 = vmatprep.subr.mxu0 0.0
    %4232 = vmatpush2.msra.mxu0 0.0
    %4233 = vmatprep.mubr.f32.mxu0 0.0
    %4234 = vmatmul.mubr.f32.gmra.mxu0 %v1635
    %v4235 = vpop.f32.mrf.mxu0
    %v4236 = vadd.f32 %v4132, %v4235
    %v4237 = vpop.f32.mrf.mxu0
    %4238 = vmatprep.mubr.f32.mxu0 0.0
    %4239 = vmatmul.mubr.f32.gmra.mxu0 %v4155
    %v4240 = vpop.f32.mrf.mxu0
    %v4241 = vadd.f32 %v4132, %v4240
    %v4242 = vpop.f32.mrf.mxu0
    %4243 = vmatprep.mubr.f32.mxu0 0.0
    %4244 = vmatmul.mubr.f32.gmra.mxu0 %v4157
    %v4245 = vpop.f32.mrf.mxu0
    %v4246 = vadd.f32 %v4132, %v4245
    %v4247 = vpop.f32.mrf.mxu0
    %4248 = vmatprep.mubr.f32.mxu0 0.0
    %4249 = vmatmul.mubr.f32.gmra.mxu0 %v4159
    %v4250 = vpop.f32.mrf.mxu0
    %v4251 = vadd.f32 %v4132, %v4250
    %v4252 = vpop.f32.mrf.mxu0
    %4253 = vmatprep.mubr.f32.mxu0 0.0
    %4254 = vmatmul.mubr.f32.gmra.mxu0 %v4161
    %v4255 = vpop.f32.mrf.mxu0
    %v4256 = vadd.f32 %v4132, %v4255
    %v4257 = vpop.f32.mrf.mxu0
    %4258 = vmatprep.mubr.f32.mxu0 0.0
    %4259 = vmatmul.mubr.f32.gmra.mxu0 %v4163
    %v4260 = vpop.f32.mrf.mxu0
    %v4261 = vadd.f32 %v4132, %v4260
    %v4262 = vpop.f32.mrf.mxu0
    %4263 = vmatprep.mubr.f32.mxu0 0.0
    %4264 = vmatmul.mubr.f32.gmra.mxu0 %v4165
    %v4265 = vpop.f32.mrf.mxu0
    %v4266 = vadd.f32 %v4132, %v4265
    %v4267 = vpop.f32.mrf.mxu0
    %4268 = vmatprep.mubr.f32.mxu0 0.0
    %4269 = vmatmul.mubr.f32.gmra.mxu0 %v4167
    %v4270 = vpop.f32.mrf.mxu0
    %v4271 = vadd.f32 %v4132, %v4270
    %v4272 = vpop.f32.mrf.mxu0
    %4273 = vdwg.mxu0
    %4274 = vst [vmem:[%s8] sm:$0xff] %v4236
    %4275 = vst [vmem:[%s8 + $0x8] sm:$0xff] %v4241
    %4276 = vst [vmem:[%s8 + $0x10] sm:$0xff] %v4246
    %4277 = vst [vmem:[%s8 + $0x18] sm:$0xff] %v4251
    %4278 = vst [vmem:[%s8 + $0x20] sm:$0xff] %v4256
    %4279 = vst [vmem:[%s8 + $0x28] sm:$0xff] %v4261
    %4280 = vst [vmem:[%s8 + $0x30] sm:$0xff] %v4266
    %4281 = vst [vmem:[%s8 + $0x38] sm:$0xff] %v4271
    // Predicated region
    $region42: #{lstm_net_g_forward.1} parent=1 // pred_check
      _
    $region43: #{lstm_net_g_forward.1} parent=1 // pred_check_branch
      %4283 = sbr.rel (0) target = $region45
    $region44: #{lstm_net_g_forward.1} parent=1 // pred_region
      _
    $region45: #{lstm_net_g_forward.1} parent=1 // pred_fallthru
      _
    // Predicated region
    $region46: #{lstm_net_g_forward.1} parent=1 // pred_check
      _
    $region47: #{lstm_net_g_forward.1} parent=1 // pred_check_branch
      %4285 = sbr.rel (0) target = $region49
    $region48: #{lstm_net_g_forward.1} parent=1 // pred_region
      _
    $region49: #{lstm_net_g_forward.1} parent=1 // pred_fallthru
      _
    %4286 = vsyncpa [#allocation4], 1
    %4287 = vsyncpa [#allocation6], 1

</llo_original>
